<compile_context>
chip_gen: v6e
topology: v6e:2x2x1
jax: 0.10.0
libtpu: 0.0.40
codegen_flags: <defaults>
</compile_context>

<pallas_src>
import functools

import numpy as np
import jax
import jax.numpy as jnp
from jax import lax
from jax.experimental import pallas as pl
from jax.experimental.pallas import tpu as pltpu


# ---- module hyper-parameters (match SSIM.__init__ defaults) -----------------
WIN_SIZE = 11          # already odd
SIGMA = 1.5
K1 = 0.01
K2 = 0.03
GAUSSIAN_WEIGHTS = True
USE_SAMPLE_COVARIANCE = True
PAD = (WIN_SIZE - 1) // 2


def _gaussian_taps_1d(win_size=WIN_SIZE, sigma=SIGMA,
                      gaussian_weights=GAUSSIAN_WEIGHTS):
    """1-D taps whose outer product equals SSIM._create_window()'s 2-D window."""
    if gaussian_weights:
        truncate = 3.5
        radius = int(truncate * sigma + 0.5)
        ax = np.arange(-radius, radius + 1, dtype=np.float64)
        t = np.exp(-(ax ** 2) / (2.0 * sigma ** 2))
        t = t / t.sum()
        if t.shape[0] < win_size:           # zero-pad (matches 2-D constant pad)
            p = (win_size - t.shape[0]) // 2
            t = np.pad(t, (p, p))
        elif t.shape[0] > win_size:         # center crop (no renormalization)
            off = (t.shape[0] - win_size) // 2
            t = t[off:off + win_size]
    else:
        t = np.ones((win_size,), dtype=np.float64) / win_size
    return t.astype(np.float32)


def _round_up(x, m):
    return ((x + m - 1) // m) * m


def _ssim_kernel(taps, TH, W, Wout, SBLK, win_size, cov_norm, wo_light, emit_map,
                 valid_ref, c_ref, g1_ref, g2_ref, *out_refs):
    """One grid step processes SBLK independent row strips.

    valid_ref : SMEM (n_padded,) int32     valid SSIM rows per strip (0 for
                dummy strips; < TH for the bottom strip of an image)
    c_ref     : SMEM (2,) f32              [C1, C2]
    g1_ref    : VMEM (SBLK, TH+2*PAD, Wk)  bf16 padded img1 strips (with halo)
    g2_ref    : VMEM (SBLK, TH+2*PAD, Wk)  bf16 padded img2 strips (with halo)
    out_refs  : (s_ref, psum_ref) if emit_map else (psum_ref,)
      s_ref    : VMEM (SBLK, TH, Wout) f32  SSIM map strips (lane padding garbage)
      psum_ref : VMEM (1, 1, 128)      f32  masked partial sum for this step
    """
    if emit_map:
        s_ref, psum_ref = out_refs
    else:
        (psum_ref,) = out_refs

    C1 = c_ref[0]
    C2 = c_ref[1]
    w = [float(taps[i]) for i in range(win_size)]

    # ---- vertical (sublane) pass --------------------------------------------
    # Slices are read straight from the bf16 refs (no full f32 copy of the
    # inputs); products are formed per row-shifted slice so only the five
    # vertically filtered f32 intermediates stay live.
    def ld(ref, dy):
        return ref[:, dy:dy + TH, :].astype(jnp.float32)        # (SBLK, TH, Wk)

    vx1 = vx2 = v11 = v22 = v12 = None
    for dy in range(win_size):
        a = ld(g1_ref, dy)
        b = ld(g2_ref, dy)
        wa = w[dy] * a
        wb = w[dy] * b
        if dy == 0:
            vx1, vx2 = wa, wb
            v11, v22, v12 = wa * a, wb * b, wa * b
        else:
            vx1 = vx1 + wa
            vx2 = vx2 + wb
            v11 = v11 + wa * a
            v22 = v22 + wb * b
            v12 = v12 + wa * b

    # ---- horizontal (lane) pass: symmetric taps folded ----------------------
    # TODO(synk): MXU blocked banded-matmul path for this stage (VALU-bound).
    half = win_size // 2
    symmetric = all(abs(w[i] - w[win_size - 1 - i]) < 1e-12 for i in range(half))

    def hs(v, dx):
        return v[:, :, dx:dx + Wout]

    if symmetric:
        ux = w[half] * hs(vx1, half)
        uy = w[half] * hs(vx2, half)
        uxx = w[half] * hs(v11, half)
        uyy = w[half] * hs(v22, half)
        uxy = w[half] * hs(v12, half)
        for dx in range(half):
            dx2 = win_size - 1 - dx
            wd = w[dx]                              # == w[dx2]
            ux = ux + wd * (hs(vx1, dx) + hs(vx1, dx2))
            uy = uy + wd * (hs(vx2, dx) + hs(vx2, dx2))
            uxx = uxx + wd * (hs(v11, dx) + hs(v11, dx2))
            uyy = uyy + wd * (hs(v22, dx) + hs(v22, dx2))
            uxy = uxy + wd * (hs(v12, dx) + hs(v12, dx2))
    else:  # fallback (e.g. cropped, asymmetric window)
        ux = uy = uxx = uyy = uxy = None
        for dx in range(win_size):
            wd = w[dx]
            if dx == 0:
                ux, uy = wd * hs(vx1, 0), wd * hs(vx2, 0)
                uxx, uyy, uxy = wd * hs(v11, 0), wd * hs(v22, 0), wd * hs(v12, 0)
            else:
                ux = ux + wd * hs(vx1, dx)
                uy = uy + wd * hs(vx2, dx)
                uxx = uxx + wd * hs(v11, dx)
                uyy = uyy + wd * hs(v22, dx)
                uxy = uxy + wd * hs(v12, dx)

    vx = cov_norm * (uxx - ux * ux)
    vy = cov_norm * (uyy - uy * uy)
    vxy = cov_norm * (uxy - ux * uy)

    A1 = 2.0 * ux * uy + C1
    A2 = 2.0 * vxy + C2
    B1 = ux * ux + uy * uy + C1
    B2 = vx + vy + C2
    if wo_light:
        S = A2 / B2
    else:
        S = (A1 * A2) / (B1 * B2)

    if emit_map:
        s_ref[...] = S                               # lane-dense full-block store

    # ---- masked partial sum --------------------------------------------------
    # LOAD-BEARING: zero lane-padding columns (>= W) and zero bottom-pad /
    # dummy-strip rows evaluate to S ~= 1 and would bias the mean upward.
    w_full = (W // 128) * 128
    if w_full > 0:
        rs = jnp.sum(S[:, :, :w_full], axis=2)       # (SBLK, TH), unmasked full tiles
    else:
        rs = jnp.zeros((SBLK, TH), jnp.float32)
    if w_full < W:                                   # mask only the last 128-lane tile
        tile = S[:, :, w_full:w_full + 128]
        col = lax.broadcasted_iota(jnp.int32, tile.shape, 2)
        rs = rs + jnp.sum(jnp.where(col < (W - w_full), tile, 0.0), axis=2)

    step = pl.program_id(0)
    valid = jnp.stack(
        [valid_ref[step * SBLK + j] for j in range(SBLK)]).reshape(SBLK, 1)
    row = lax.broadcasted_iota(jnp.int32, (SBLK, TH), 1)
    rs = jnp.where(row < valid, rs, 0.0)             # per-row mask, not per-pixel
    psum_ref[...] = jnp.broadcast_to(jnp.sum(rs), psum_ref.shape)


def _to_grayscale(x):
    """x: (B, C, H, W) float32 -> (B, H, W); mirrors SSIM._to_grayscale."""
    c = x.shape[1]
    if c == 3:
        w = jnp.array([0.299, 0.587, 0.114], dtype=x.dtype).reshape(1, 3, 1, 1)
        return jnp.sum(x * w, axis=1)
    elif c == 1:
        return x[:, 0]
    else:
        return jnp.mean(x, axis=1)


@functools.partial(jax.jit, static_argnames=("data_range", "full", "wo_light",
                                             "loss", "strip_rows",
                                             "strips_per_step"))
def ssim_forward(img1, img2, data_range=None, full=False, wo_light=False,
                 loss=False, strip_rows=None, strips_per_step=None):
    if img1.shape != img2.shape:
        raise ValueError("inputs must have the same shape")

    img1 = img1.astype(jnp.float32)
    img2 = img2.astype(jnp.float32)

    # TODO(synk): fuse grayscale + reflect pad + strip gather into the kernel.
    gray1 = _to_grayscale(img1)              # (B, H, W) f32
    gray2 = _to_grayscale(img2)
    B, H, W = gray1.shape

    # data_range auto-detection inspects gray1 only (faithful to the reference).
    if data_range is None:
        dr = jnp.where(jnp.max(gray1) <= 1.1, jnp.float32(1.0), jnp.float32(255.0))
    else:
        dr = jnp.float32(data_range)
    C1 = (K1 * dr) ** 2
    C2 = (K2 * dr) ** 2
    cparams = jnp.stack([C1, C2]).astype(jnp.float32)        # (2,) -> SMEM

    need_map = bool(full)
    Wout = _round_up(max(W, 1), 128)         # lane-dense compute / output width
    Wk = Wout + 2 * PAD                      # kernel-side padded strip width

    # ---- strip sizing: bound per-step VMEM to a few MiB ----------------------
    row_bytes = (2 * 2 * Wk * 2              # double-buffered bf16 inputs (x2 imgs)
                 + 6 * Wk * 4                # f32 vertical intermediates (+margin)
                 + 12 * Wout * 4             # f32 horizontal/live intermediates
                 + (8 * Wout if need_map else 0))
    budget_rows = max(8, min(512, ((8 * 1024 * 1024) // row_bytes) // 8 * 8))
    if strip_rows is not None:
        TH = max(1, min(int(strip_rows), H))
    else:
        TH = min(budget_rows, H)
    n_strips = -(-H // TH)                   # strips per image
    THp = TH + 2 * PAD
    n_total = B * n_strips
    if strips_per_step is not None:
        SBLK = max(1, min(int(strips_per_step), n_total))
    else:
        SBLK = max(1, min(budget_rows // TH, n_total))   # amortize per-step overhead
    n_padded = _round_up(n_total, SBLK)
    n_steps = n_padded // SBLK

    # ---- generation-aware VMEM limit -----------------------------------------
    est = SBLK * (THp * (2 * 2 * Wk * 2)
                  + TH * (6 * Wk * 4 + 12 * Wout * 4
                          + (8 * Wout if need_map else 0)))
    phys_vmem = 64 * 1024 * 1024             # conservative default (v7x physical)
    try:
        info = pltpu.get_tpu_info()
        phys_vmem = int(getattr(info, "vmem_capacity_bytes", phys_vmem) or phys_vmem)
    except Exception:
        pass
    vmem_limit = None
    if est > 8 * 1024 * 1024:                # v5e default scoped limit is 16 MiB
        vmem_limit = int(min(max(est * 7 // 5, 16 * 1024 * 1024),
                             phys_vmem * 3 // 4))

    # ---- wrapper-side prep: pad + gather non-overlapping strip blocks --------
    # Each strip block already contains its 2*PAD-row halo, so the BlockSpec is
    # a plain block (no overlapping windows / manual DMA needed).
    row_idx = (np.arange(n_strips)[:, None] * TH
               + np.arange(THp)[None, :]).reshape(-1).astype(np.int32)

    def prep(g):
        gp = jnp.pad(g, ((0, 0), (PAD, PAD), (PAD, PAD)), mode="reflect")
        gp = jnp.pad(gp, ((0, 0),
                          (0, n_strips * TH - H),          # bottom zero rows
                          (0, Wk - (W + 2 * PAD))))        # lane zero columns
        strips = jnp.take(gp, jnp.asarray(row_idx), axis=1)
        strips = strips.reshape(B * n_strips, THp, Wk)
        if n_padded > n_total:                              # dummy zero strips
            strips = jnp.concatenate(
                [strips,
                 jnp.zeros((n_padded - n_total, THp, Wk), strips.dtype)], axis=0)
        return strips.astype(jnp.bfloat16)                  # halve input HBM traffic

    g1s = prep(gray1)
    g2s = prep(gray2)

    # valid SSIM rows per strip (static): bottom strip may be partial; dummy = 0.
    valid_np = np.minimum(TH, H - np.arange(n_strips) * TH).astype(np.int32)
    valid_np = np.pad(np.tile(valid_np, B), (0, n_padded - n_total))
    valid = jnp.asarray(valid_np, dtype=jnp.int32)

    cov_norm = (WIN_SIZE * WIN_SIZE / (WIN_SIZE * WIN_SIZE - 1)
                if USE_SAMPLE_COVARIANCE else 1.0)
    taps = _gaussian_taps_1d()
    kernel = functools.partial(_ssim_kernel, taps, TH, W, Wout, SBLK, WIN_SIZE,
                               float(cov_norm), bool(wo_light), need_map)

    out_shapes = []
    out_specs = []
    if need_map:
        out_shapes.append(jax.ShapeDtypeStruct((n_padded, TH, Wout), jnp.float32))
        out_specs.append(pl.BlockSpec((SBLK, TH, Wout), lambda i: (i, 0, 0)))
    out_shapes.append(jax.ShapeDtypeStruct((n_steps, 1, 128), jnp.float32))
    out_specs.append(pl.BlockSpec((1, 1, 128), lambda i: (i, 0, 0)))

    results = pl.pallas_call(
        kernel,
        out_shape=tuple(out_shapes),
        grid=(n_steps,),
        in_specs=[
            pl.BlockSpec(memory_space=pltpu.MemorySpace.SMEM),    # valid rows
            pl.BlockSpec(memory_space=pltpu.MemorySpace.SMEM),    # [C1, C2]
            pl.BlockSpec((SBLK, THp, Wk), lambda i: (i, 0, 0)),   # img1 strips
            pl.BlockSpec((SBLK, THp, Wk), lambda i: (i, 0, 0)),   # img2 strips
        ],
        out_specs=tuple(out_specs),
        compiler_params=pltpu.CompilerParams(
            dimension_semantics=("parallel",),   # strips/images are independent
            vmem_limit_bytes=vmem_limit),
    )(valid, cparams, g1s, g2s)

    if need_map:
        smap_strips, psum = results
    else:
        (psum,) = results

    total = jnp.sum(psum[:, 0, 0])
    mssim = total / jnp.float32(B * H * W)

    if need_map:
        smap = smap_strips[:n_total].reshape(B, n_strips * TH, Wout)[:, :H, :W]
        S_full = smap[:, None, :, :]                      # (B, 1, H, W)

    if loss:
        if full:
            return 1.0 - mssim, 1.0 - S_full
        return 1.0 - mssim
    if full:
        return mssim, S_full
    return mssim


# ---- pure-JAX reference (direct 121-tap correlation) for correctness check --
@functools.partial(jax.jit, static_argnames=("data_range", "wo_light", "cast"))
def _ssim_reference(img1, img2, data_range=None, wo_light=False, cast=jnp.float32):
    g1 = _to_grayscale(img1.astype(jnp.float32)).astype(cast).astype(jnp.float32)
    g2 = _to_grayscale(img2.astype(jnp.float32)).astype(cast).astype(jnp.float32)
    B, H, W = g1.shape
    if data_range is None:
        dr = jnp.where(jnp.max(g1) <= 1.1, jnp.float32(1.0), jnp.float32(255.0))
    else:
        dr = jnp.float32(data_range)
    C1 = (K1 * dr) ** 2
    C2 = (K2 * dr) ** 2
    p1 = jnp.pad(g1, ((0, 0), (PAD, PAD), (PAD, PAD)), mode="reflect")
    p2 = jnp.pad(g2, ((0, 0), (PAD, PAD), (PAD, PAD)), mode="reflect")
    taps = _gaussian_taps_1d()
    w2d = np.outer(taps, taps)
    ux = uy = uxx = uyy = uxy = 0.0
    for dy in range(WIN_SIZE):
        for dx in range(WIN_SIZE):
            wv = float(w2d[dy, dx])
            a = p1[:, dy:dy + H, dx:dx + W]
            b = p2[:, dy:dy + H, dx:dx + W]
            ux = ux + wv * a
            uy = uy + wv * b
            uxx = uxx + wv * a * a
            uyy = uyy + wv * b * b
            uxy = uxy + wv * a * b
    cov_norm = (WIN_SIZE * WIN_SIZE / (WIN_SIZE * WIN_SIZE - 1)
                if USE_SAMPLE_COVARIANCE else 1.0)
    vx = cov_norm * (uxx - ux * ux)
    vy = cov_norm * (uyy - uy * uy)
    vxy = cov_norm * (uxy - ux * uy)
    A1 = 2.0 * ux * uy + C1
    A2 = 2.0 * vxy + C2
    B1 = ux * ux + uy * uy + C1
    B2 = vx + vy + C2
    S = A2 / B2 if wo_light else (A1 * A2) / (B1 * B2)
    return jnp.mean(S), S[:, None, :, :]


if __name__ == "__main__":
    key = jax.random.PRNGKey(0)
    k1, k2, k3, k4 = jax.random.split(key, 4)

    # --- test 1: B=2 RGB 16x16 (small-image regime; 2 strips batched per step)
    shape = (2, 3, 16, 16)
    img1 = jax.random.uniform(k1, shape, dtype=jnp.float32)
    img2 = jnp.clip(img1 + 0.05 * jax.random.normal(k2, shape, dtype=jnp.float32),
                    0.0, 1.0)

    score = jax.block_until_ready(ssim_forward(img1, img2))          # mean-only path
    score_f, smap = ssim_forward(img1, img2, full=True)               # full path
    score_f = jax.block_until_ready(score_f)
    smap = jax.block_until_ready(smap)
    assert smap.shape == (2, 1, 16, 16), smap.shape

    # bf16-routed reference checks the kernel math tightly; the f32 reference
    # bounds the bf16 input-quantization error (concern from the review).
    ref_b_score, ref_b_map = _ssim_reference(img1, img2, cast=jnp.bfloat16)
    ref_f_score, _ = _ssim_reference(img1, img2, cast=jnp.float32)
    np.testing.assert_allclose(float(score), float(ref_b_score), rtol=1e-3, atol=1e-3)
    np.testing.assert_allclose(float(score), float(ref_f_score), rtol=0, atol=3e-3)
    np.testing.assert_allclose(float(score_f), float(score), rtol=1e-5, atol=1e-5)
    np.testing.assert_allclose(np.asarray(smap), np.asarray(ref_b_map),
                               rtol=5e-3, atol=5e-3)

    # wo_light variant
    s_wo = jax.block_until_ready(ssim_forward(img1, img2, wo_light=True))
    r_wo, _ = _ssim_reference(img1, img2, wo_light=True, cast=jnp.bfloat16)
    np.testing.assert_allclose(float(s_wo), float(r_wo), rtol=1e-3, atol=1e-3)

    # --- test 2: B=1 grayscale 40x20 with forced 16-row strips, one strip per
    # grid step -> exercises strip tiling, halos, row/column masking and the
    # per-strip SSIM-map reassembly across a multi-step grid.
    shape2 = (1, 1, 40, 20)
    a_img = jax.random.uniform(k3, shape2, dtype=jnp.float32)
    b_img = jnp.clip(a_img + 0.1 * jax.random.normal(k4, shape2, dtype=jnp.float32),
                     0.0, 1.0)
    s2, m2 = ssim_forward(a_img, b_img, full=True, strip_rows=16, strips_per_step=1)
    s2 = jax.block_until_ready(s2)
    m2 = jax.block_until_ready(m2)
    assert m2.shape == (1, 1, 40, 20), m2.shape
    r2s, r2m = _ssim_reference(a_img, b_img, cast=jnp.bfloat16)
    np.testing.assert_allclose(float(s2), float(r2s), rtol=1e-3, atol=1e-3)
    np.testing.assert_allclose(np.asarray(m2), np.asarray(r2m), rtol=5e-3, atol=5e-3)

    # --- SSIM of an image with itself is 1; loss path is 1 - mssim
    self_score = jax.block_until_ready(ssim_forward(img1, img1))
    assert abs(float(self_score) - 1.0) < 1e-3, float(self_score)
    assert float(score) <= 1.0 + 1e-5
    loss_val = jax.block_until_ready(ssim_forward(img1, img2, loss=True))
    np.testing.assert_allclose(float(loss_val), 1.0 - float(score),
                               rtol=1e-5, atol=1e-5)

    print("KERNEL_OK")
</pallas_src>

<mosaic_0001>
module attributes {stable_mosaic.version = 11 : i64} {
  func.func @_ssim_kernel(%arg0: i32, %arg1: memref<2xi32, #tpu.memory_space<smem>>, %arg2: memref<2xf32, #tpu.memory_space<smem>>, %arg3: memref<2x26x138xbf16, #tpu.memory_space<vmem>>, %arg4: memref<2x26x138xbf16, #tpu.memory_space<vmem>>, %arg5: memref<1x1x128xf32, #tpu.memory_space<vmem>>) attributes {dimension_semantics = [#tpu.dimension_semantics<parallel>], iteration_bounds = array<i64: 1>, scalar_prefetch = 0 : i64, scratch_operands = 0 : i64, tpu.core_type = #tpu.core_type<tc>, window_params = [{transform_indices = @transform_0, window_bounds = array<i64: 2>}, {transform_indices = @transform_1, window_bounds = array<i64: 2>}, {transform_indices = @transform_2, window_bounds = array<i64: 2, 26, 138>}, {transform_indices = @transform_3, window_bounds = array<i64: 2, 26, 138>}, {transform_indices = @transform_4, window_bounds = array<i64: 1, 1, 128>}]} {
    %c0 = arith.constant 0 : index
    %0 = memref.load %arg2[%c0] : memref<2xf32, #tpu.memory_space<smem>>
    %c1 = arith.constant 1 : index
    %1 = memref.load %arg2[%c1] : memref<2xf32, #tpu.memory_space<smem>>
    %c0_0 = arith.constant 0 : index
    %c0_1 = arith.constant 0 : index
    %c0_2 = arith.constant 0 : index
    %2 = vector.load %arg3[%c0_0, %c0_1, %c0_2] : memref<2x26x138xbf16, #tpu.memory_space<vmem>>, vector<2x16x138xbf16>
    %3 = arith.extf %2 : vector<2x16x138xbf16> to vector<2x16x138xf32>
    %c0_3 = arith.constant 0 : index
    %c0_4 = arith.constant 0 : index
    %c0_5 = arith.constant 0 : index
    %4 = vector.load %arg4[%c0_3, %c0_4, %c0_5] : memref<2x26x138xbf16, #tpu.memory_space<vmem>>, vector<2x16x138xbf16>
    %5 = arith.extf %4 : vector<2x16x138xbf16> to vector<2x16x138xf32>
    %cst = arith.constant 0.00102838012 : f32
    %6 = vector.broadcast %cst : f32 to vector<2x16x138xf32>
    %7 = arith.mulf %6, %3 : vector<2x16x138xf32>
    %cst_6 = arith.constant 0.00102838012 : f32
    %8 = vector.broadcast %cst_6 : f32 to vector<2x16x138xf32>
    %9 = arith.mulf %8, %5 : vector<2x16x138xf32>
    %10 = arith.mulf %7, %3 : vector<2x16x138xf32>
    %11 = arith.mulf %9, %5 : vector<2x16x138xf32>
    %12 = arith.mulf %7, %5 : vector<2x16x138xf32>
    %c0_7 = arith.constant 0 : index
    %c1_8 = arith.constant 1 : index
    %c0_9 = arith.constant 0 : index
    %13 = vector.load %arg3[%c0_7, %c1_8, %c0_9] : memref<2x26x138xbf16, #tpu.memory_space<vmem>>, vector<2x16x138xbf16>
    %14 = arith.extf %13 : vector<2x16x138xbf16> to vector<2x16x138xf32>
    %c0_10 = arith.constant 0 : index
    %c1_11 = arith.constant 1 : index
    %c0_12 = arith.constant 0 : index
    %15 = vector.load %arg4[%c0_10, %c1_11, %c0_12] : memref<2x26x138xbf16, #tpu.memory_space<vmem>>, vector<2x16x138xbf16>
    %16 = arith.extf %15 : vector<2x16x138xbf16> to vector<2x16x138xf32>
    %cst_13 = arith.constant 0.00759875821 : f32
    %17 = vector.broadcast %cst_13 : f32 to vector<2x16x138xf32>
    %18 = arith.mulf %17, %14 : vector<2x16x138xf32>
    %cst_14 = arith.constant 0.00759875821 : f32
    %19 = vector.broadcast %cst_14 : f32 to vector<2x16x138xf32>
    %20 = arith.mulf %19, %16 : vector<2x16x138xf32>
    %21 = arith.addf %7, %18 : vector<2x16x138xf32>
    %22 = arith.addf %9, %20 : vector<2x16x138xf32>
    %23 = arith.mulf %18, %14 : vector<2x16x138xf32>
    %24 = arith.addf %10, %23 : vector<2x16x138xf32>
    %25 = arith.mulf %20, %16 : vector<2x16x138xf32>
    %26 = arith.addf %11, %25 : vector<2x16x138xf32>
    %27 = arith.mulf %18, %16 : vector<2x16x138xf32>
    %28 = arith.addf %12, %27 : vector<2x16x138xf32>
    %c0_15 = arith.constant 0 : index
    %c2 = arith.constant 2 : index
    %c0_16 = arith.constant 0 : index
    %29 = vector.load %arg3[%c0_15, %c2, %c0_16] : memref<2x26x138xbf16, #tpu.memory_space<vmem>>, vector<2x16x138xbf16>
    %30 = arith.extf %29 : vector<2x16x138xbf16> to vector<2x16x138xf32>
    %c0_17 = arith.constant 0 : index
    %c2_18 = arith.constant 2 : index
    %c0_19 = arith.constant 0 : index
    %31 = vector.load %arg4[%c0_17, %c2_18, %c0_19] : memref<2x26x138xbf16, #tpu.memory_space<vmem>>, vector<2x16x138xbf16>
    %32 = arith.extf %31 : vector<2x16x138xbf16> to vector<2x16x138xf32>
    %cst_20 = arith.constant 0.0360007733 : f32
    %33 = vector.broadcast %cst_20 : f32 to vector<2x16x138xf32>
    %34 = arith.mulf %33, %30 : vector<2x16x138xf32>
    %cst_21 = arith.constant 0.0360007733 : f32
    %35 = vector.broadcast %cst_21 : f32 to vector<2x16x138xf32>
    %36 = arith.mulf %35, %32 : vector<2x16x138xf32>
    %37 = arith.addf %21, %34 : vector<2x16x138xf32>
    %38 = arith.addf %22, %36 : vector<2x16x138xf32>
    %39 = arith.mulf %34, %30 : vector<2x16x138xf32>
    %40 = arith.addf %24, %39 : vector<2x16x138xf32>
    %41 = arith.mulf %36, %32 : vector<2x16x138xf32>
    %42 = arith.addf %26, %41 : vector<2x16x138xf32>
    %43 = arith.mulf %34, %32 : vector<2x16x138xf32>
    %44 = arith.addf %28, %43 : vector<2x16x138xf32>
    %c0_22 = arith.constant 0 : index
    %c3 = arith.constant 3 : index
    %c0_23 = arith.constant 0 : index
    %45 = vector.load %arg3[%c0_22, %c3, %c0_23] : memref<2x26x138xbf16, #tpu.memory_space<vmem>>, vector<2x16x138xbf16>
    %46 = arith.extf %45 : vector<2x16x138xbf16> to vector<2x16x138xf32>
    %c0_24 = arith.constant 0 : index
    %c3_25 = arith.constant 3 : index
    %c0_26 = arith.constant 0 : index
    %47 = vector.load %arg4[%c0_24, %c3_25, %c0_26] : memref<2x26x138xbf16, #tpu.memory_space<vmem>>, vector<2x16x138xbf16>
    %48 = arith.extf %47 : vector<2x16x138xbf16> to vector<2x16x138xf32>
    %cst_27 = arith.constant 0.109360687 : f32
    %49 = vector.broadcast %cst_27 : f32 to vector<2x16x138xf32>
    %50 = arith.mulf %49, %46 : vector<2x16x138xf32>
    %cst_28 = arith.constant 0.109360687 : f32
    %51 = vector.broadcast %cst_28 : f32 to vector<2x16x138xf32>
    %52 = arith.mulf %51, %48 : vector<2x16x138xf32>
    %53 = arith.addf %37, %50 : vector<2x16x138xf32>
    %54 = arith.addf %38, %52 : vector<2x16x138xf32>
    %55 = arith.mulf %50, %46 : vector<2x16x138xf32>
    %56 = arith.addf %40, %55 : vector<2x16x138xf32>
    %57 = arith.mulf %52, %48 : vector<2x16x138xf32>
    %58 = arith.addf %42, %57 : vector<2x16x138xf32>
    %59 = arith.mulf %50, %48 : vector<2x16x138xf32>
    %60 = arith.addf %44, %59 : vector<2x16x138xf32>
    %c0_29 = arith.constant 0 : index
    %c4 = arith.constant 4 : index
    %c0_30 = arith.constant 0 : index
    %61 = vector.load %arg3[%c0_29, %c4, %c0_30] : memref<2x26x138xbf16, #tpu.memory_space<vmem>>, vector<2x16x138xbf16>
    %62 = arith.extf %61 : vector<2x16x138xbf16> to vector<2x16x138xf32>
    %c0_31 = arith.constant 0 : index
    %c4_32 = arith.constant 4 : index
    %c0_33 = arith.constant 0 : index
    %63 = vector.load %arg4[%c0_31, %c4_32, %c0_33] : memref<2x26x138xbf16, #tpu.memory_space<vmem>>, vector<2x16x138xbf16>
    %64 = arith.extf %63 : vector<2x16x138xbf16> to vector<2x16x138xf32>
    %cst_34 = arith.constant 0.213005543 : f32
    %65 = vector.broadcast %cst_34 : f32 to vector<2x16x138xf32>
    %66 = arith.mulf %65, %62 : vector<2x16x138xf32>
    %cst_35 = arith.constant 0.213005543 : f32
    %67 = vector.broadcast %cst_35 : f32 to vector<2x16x138xf32>
    %68 = arith.mulf %67, %64 : vector<2x16x138xf32>
    %69 = arith.addf %53, %66 : vector<2x16x138xf32>
    %70 = arith.addf %54, %68 : vector<2x16x138xf32>
    %71 = arith.mulf %66, %62 : vector<2x16x138xf32>
    %72 = arith.addf %56, %71 : vector<2x16x138xf32>
    %73 = arith.mulf %68, %64 : vector<2x16x138xf32>
    %74 = arith.addf %58, %73 : vector<2x16x138xf32>
    %75 = arith.mulf %66, %64 : vector<2x16x138xf32>
    %76 = arith.addf %60, %75 : vector<2x16x138xf32>
    %c0_36 = arith.constant 0 : index
    %c5 = arith.constant 5 : index
    %c0_37 = arith.constant 0 : index
    %77 = vector.load %arg3[%c0_36, %c5, %c0_37] : memref<2x26x138xbf16, #tpu.memory_space<vmem>>, vector<2x16x138xbf16>
    %78 = arith.extf %77 : vector<2x16x138xbf16> to vector<2x16x138xf32>
    %c0_38 = arith.constant 0 : index
    %c5_39 = arith.constant 5 : index
    %c0_40 = arith.constant 0 : index
    %79 = vector.load %arg4[%c0_38, %c5_39, %c0_40] : memref<2x26x138xbf16, #tpu.memory_space<vmem>>, vector<2x16x138xbf16>
    %80 = arith.extf %79 : vector<2x16x138xbf16> to vector<2x16x138xf32>
    %cst_41 = arith.constant 0.266011715 : f32
    %81 = vector.broadcast %cst_41 : f32 to vector<2x16x138xf32>
    %82 = arith.mulf %81, %78 : vector<2x16x138xf32>
    %cst_42 = arith.constant 0.266011715 : f32
    %83 = vector.broadcast %cst_42 : f32 to vector<2x16x138xf32>
    %84 = arith.mulf %83, %80 : vector<2x16x138xf32>
    %85 = arith.addf %69, %82 : vector<2x16x138xf32>
    %86 = arith.addf %70, %84 : vector<2x16x138xf32>
    %87 = arith.mulf %82, %78 : vector<2x16x138xf32>
    %88 = arith.addf %72, %87 : vector<2x16x138xf32>
    %89 = arith.mulf %84, %80 : vector<2x16x138xf32>
    %90 = arith.addf %74, %89 : vector<2x16x138xf32>
    %91 = arith.mulf %82, %80 : vector<2x16x138xf32>
    %92 = arith.addf %76, %91 : vector<2x16x138xf32>
    %c0_43 = arith.constant 0 : index
    %c6 = arith.constant 6 : index
    %c0_44 = arith.constant 0 : index
    %93 = vector.load %arg3[%c0_43, %c6, %c0_44] : memref<2x26x138xbf16, #tpu.memory_space<vmem>>, vector<2x16x138xbf16>
    %94 = arith.extf %93 : vector<2x16x138xbf16> to vector<2x16x138xf32>
    %c0_45 = arith.constant 0 : index
    %c6_46 = arith.constant 6 : index
    %c0_47 = arith.constant 0 : index
    %95 = vector.load %arg4[%c0_45, %c6_46, %c0_47] : memref<2x26x138xbf16, #tpu.memory_space<vmem>>, vector<2x16x138xbf16>
    %96 = arith.extf %95 : vector<2x16x138xbf16> to vector<2x16x138xf32>
    %cst_48 = arith.constant 0.213005543 : f32
    %97 = vector.broadcast %cst_48 : f32 to vector<2x16x138xf32>
    %98 = arith.mulf %97, %94 : vector<2x16x138xf32>
    %cst_49 = arith.constant 0.213005543 : f32
    %99 = vector.broadcast %cst_49 : f32 to vector<2x16x138xf32>
    %100 = arith.mulf %99, %96 : vector<2x16x138xf32>
    %101 = arith.addf %85, %98 : vector<2x16x138xf32>
    %102 = arith.addf %86, %100 : vector<2x16x138xf32>
    %103 = arith.mulf %98, %94 : vector<2x16x138xf32>
    %104 = arith.addf %88, %103 : vector<2x16x138xf32>
    %105 = arith.mulf %100, %96 : vector<2x16x138xf32>
    %106 = arith.addf %90, %105 : vector<2x16x138xf32>
    %107 = arith.mulf %98, %96 : vector<2x16x138xf32>
    %108 = arith.addf %92, %107 : vector<2x16x138xf32>
    %c0_50 = arith.constant 0 : index
    %c7 = arith.constant 7 : index
    %c0_51 = arith.constant 0 : index
    %109 = vector.load %arg3[%c0_50, %c7, %c0_51] : memref<2x26x138xbf16, #tpu.memory_space<vmem>>, vector<2x16x138xbf16>
    %110 = arith.extf %109 : vector<2x16x138xbf16> to vector<2x16x138xf32>
    %c0_52 = arith.constant 0 : index
    %c7_53 = arith.constant 7 : index
    %c0_54 = arith.constant 0 : index
    %111 = vector.load %arg4[%c0_52, %c7_53, %c0_54] : memref<2x26x138xbf16, #tpu.memory_space<vmem>>, vector<2x16x138xbf16>
    %112 = arith.extf %111 : vector<2x16x138xbf16> to vector<2x16x138xf32>
    %cst_55 = arith.constant 0.109360687 : f32
    %113 = vector.broadcast %cst_55 : f32 to vector<2x16x138xf32>
    %114 = arith.mulf %113, %110 : vector<2x16x138xf32>
    %cst_56 = arith.constant 0.109360687 : f32
    %115 = vector.broadcast %cst_56 : f32 to vector<2x16x138xf32>
    %116 = arith.mulf %115, %112 : vector<2x16x138xf32>
    %117 = arith.addf %101, %114 : vector<2x16x138xf32>
    %118 = arith.addf %102, %116 : vector<2x16x138xf32>
    %119 = arith.mulf %114, %110 : vector<2x16x138xf32>
    %120 = arith.addf %104, %119 : vector<2x16x138xf32>
    %121 = arith.mulf %116, %112 : vector<2x16x138xf32>
    %122 = arith.addf %106, %121 : vector<2x16x138xf32>
    %123 = arith.mulf %114, %112 : vector<2x16x138xf32>
    %124 = arith.addf %108, %123 : vector<2x16x138xf32>
    %c0_57 = arith.constant 0 : index
    %c8 = arith.constant 8 : index
    %c0_58 = arith.constant 0 : index
    %125 = vector.load %arg3[%c0_57, %c8, %c0_58] : memref<2x26x138xbf16, #tpu.memory_space<vmem>>, vector<2x16x138xbf16>
    %126 = arith.extf %125 : vector<2x16x138xbf16> to vector<2x16x138xf32>
    %c0_59 = arith.constant 0 : index
    %c8_60 = arith.constant 8 : index
    %c0_61 = arith.constant 0 : index
    %127 = vector.load %arg4[%c0_59, %c8_60, %c0_61] : memref<2x26x138xbf16, #tpu.memory_space<vmem>>, vector<2x16x138xbf16>
    %128 = arith.extf %127 : vector<2x16x138xbf16> to vector<2x16x138xf32>
    %cst_62 = arith.constant 0.0360007733 : f32
    %129 = vector.broadcast %cst_62 : f32 to vector<2x16x138xf32>
    %130 = arith.mulf %129, %126 : vector<2x16x138xf32>
    %cst_63 = arith.constant 0.0360007733 : f32
    %131 = vector.broadcast %cst_63 : f32 to vector<2x16x138xf32>
    %132 = arith.mulf %131, %128 : vector<2x16x138xf32>
    %133 = arith.addf %117, %130 : vector<2x16x138xf32>
    %134 = arith.addf %118, %132 : vector<2x16x138xf32>
    %135 = arith.mulf %130, %126 : vector<2x16x138xf32>
    %136 = arith.addf %120, %135 : vector<2x16x138xf32>
    %137 = arith.mulf %132, %128 : vector<2x16x138xf32>
    %138 = arith.addf %122, %137 : vector<2x16x138xf32>
    %139 = arith.mulf %130, %128 : vector<2x16x138xf32>
    %140 = arith.addf %124, %139 : vector<2x16x138xf32>
    %c0_64 = arith.constant 0 : index
    %c9 = arith.constant 9 : index
    %c0_65 = arith.constant 0 : index
    %141 = vector.load %arg3[%c0_64, %c9, %c0_65] : memref<2x26x138xbf16, #tpu.memory_space<vmem>>, vector<2x16x138xbf16>
    %142 = arith.extf %141 : vector<2x16x138xbf16> to vector<2x16x138xf32>
    %c0_66 = arith.constant 0 : index
    %c9_67 = arith.constant 9 : index
    %c0_68 = arith.constant 0 : index
    %143 = vector.load %arg4[%c0_66, %c9_67, %c0_68] : memref<2x26x138xbf16, #tpu.memory_space<vmem>>, vector<2x16x138xbf16>
    %144 = arith.extf %143 : vector<2x16x138xbf16> to vector<2x16x138xf32>
    %cst_69 = arith.constant 0.00759875821 : f32
    %145 = vector.broadcast %cst_69 : f32 to vector<2x16x138xf32>
    %146 = arith.mulf %145, %142 : vector<2x16x138xf32>
    %cst_70 = arith.constant 0.00759875821 : f32
    %147 = vector.broadcast %cst_70 : f32 to vector<2x16x138xf32>
    %148 = arith.mulf %147, %144 : vector<2x16x138xf32>
    %149 = arith.addf %133, %146 : vector<2x16x138xf32>
    %150 = arith.addf %134, %148 : vector<2x16x138xf32>
    %151 = arith.mulf %146, %142 : vector<2x16x138xf32>
    %152 = arith.addf %136, %151 : vector<2x16x138xf32>
    %153 = arith.mulf %148, %144 : vector<2x16x138xf32>
    %154 = arith.addf %138, %153 : vector<2x16x138xf32>
    %155 = arith.mulf %146, %144 : vector<2x16x138xf32>
    %156 = arith.addf %140, %155 : vector<2x16x138xf32>
    %c0_71 = arith.constant 0 : index
    %c10 = arith.constant 10 : index
    %c0_72 = arith.constant 0 : index
    %157 = vector.load %arg3[%c0_71, %c10, %c0_72] : memref<2x26x138xbf16, #tpu.memory_space<vmem>>, vector<2x16x138xbf16>
    %158 = arith.extf %157 : vector<2x16x138xbf16> to vector<2x16x138xf32>
    %c0_73 = arith.constant 0 : index
    %c10_74 = arith.constant 10 : index
    %c0_75 = arith.constant 0 : index
    %159 = vector.load %arg4[%c0_73, %c10_74, %c0_75] : memref<2x26x138xbf16, #tpu.memory_space<vmem>>, vector<2x16x138xbf16>
    %160 = arith.extf %159 : vector<2x16x138xbf16> to vector<2x16x138xf32>
    %cst_76 = arith.constant 0.00102838012 : f32
    %161 = vector.broadcast %cst_76 : f32 to vector<2x16x138xf32>
    %162 = arith.mulf %161, %158 : vector<2x16x138xf32>
    %cst_77 = arith.constant 0.00102838012 : f32
    %163 = vector.broadcast %cst_77 : f32 to vector<2x16x138xf32>
    %164 = arith.mulf %163, %160 : vector<2x16x138xf32>
    %165 = arith.addf %149, %162 : vector<2x16x138xf32>
    %166 = arith.addf %150, %164 : vector<2x16x138xf32>
    %167 = arith.mulf %162, %158 : vector<2x16x138xf32>
    %168 = arith.addf %152, %167 : vector<2x16x138xf32>
    %169 = arith.mulf %164, %160 : vector<2x16x138xf32>
    %170 = arith.addf %154, %169 : vector<2x16x138xf32>
    %171 = arith.mulf %162, %160 : vector<2x16x138xf32>
    %172 = arith.addf %156, %171 : vector<2x16x138xf32>
    %173 = vector.extract_strided_slice %165 {offsets = [0, 0, 5], sizes = [2, 16, 128], strides = [1, 1, 1]} : vector<2x16x138xf32> to vector<2x16x128xf32>
    %cst_78 = arith.constant 0.266011715 : f32
    %174 = vector.broadcast %cst_78 : f32 to vector<2x16x128xf32>
    %175 = arith.mulf %174, %173 : vector<2x16x128xf32>
    %176 = vector.extract_strided_slice %166 {offsets = [0, 0, 5], sizes = [2, 16, 128], strides = [1, 1, 1]} : vector<2x16x138xf32> to vector<2x16x128xf32>
    %cst_79 = arith.constant 0.266011715 : f32
    %177 = vector.broadcast %cst_79 : f32 to vector<2x16x128xf32>
    %178 = arith.mulf %177, %176 : vector<2x16x128xf32>
    %179 = vector.extract_strided_slice %168 {offsets = [0, 0, 5], sizes = [2, 16, 128], strides = [1, 1, 1]} : vector<2x16x138xf32> to vector<2x16x128xf32>
    %cst_80 = arith.constant 0.266011715 : f32
    %180 = vector.broadcast %cst_80 : f32 to vector<2x16x128xf32>
    %181 = arith.mulf %180, %179 : vector<2x16x128xf32>
    %182 = vector.extract_strided_slice %170 {offsets = [0, 0, 5], sizes = [2, 16, 128], strides = [1, 1, 1]} : vector<2x16x138xf32> to vector<2x16x128xf32>
    %cst_81 = arith.constant 0.266011715 : f32
    %183 = vector.broadcast %cst_81 : f32 to vector<2x16x128xf32>
    %184 = arith.mulf %183, %182 : vector<2x16x128xf32>
    %185 = vector.extract_strided_slice %172 {offsets = [0, 0, 5], sizes = [2, 16, 128], strides = [1, 1, 1]} : vector<2x16x138xf32> to vector<2x16x128xf32>
    %cst_82 = arith.constant 0.266011715 : f32
    %186 = vector.broadcast %cst_82 : f32 to vector<2x16x128xf32>
    %187 = arith.mulf %186, %185 : vector<2x16x128xf32>
    %188 = vector.extract_strided_slice %165 {offsets = [0, 0, 0], sizes = [2, 16, 128], strides = [1, 1, 1]} : vector<2x16x138xf32> to vector<2x16x128xf32>
    %189 = vector.extract_strided_slice %165 {offsets = [0, 0, 10], sizes = [2, 16, 128], strides = [1, 1, 1]} : vector<2x16x138xf32> to vector<2x16x128xf32>
    %190 = arith.addf %188, %189 : vector<2x16x128xf32>
    %cst_83 = arith.constant 0.00102838012 : f32
    %191 = vector.broadcast %cst_83 : f32 to vector<2x16x128xf32>
    %192 = arith.mulf %191, %190 : vector<2x16x128xf32>
    %193 = arith.addf %175, %192 : vector<2x16x128xf32>
    %194 = vector.extract_strided_slice %166 {offsets = [0, 0, 0], sizes = [2, 16, 128], strides = [1, 1, 1]} : vector<2x16x138xf32> to vector<2x16x128xf32>
    %195 = vector.extract_strided_slice %166 {offsets = [0, 0, 10], sizes = [2, 16, 128], strides = [1, 1, 1]} : vector<2x16x138xf32> to vector<2x16x128xf32>
    %196 = arith.addf %194, %195 : vector<2x16x128xf32>
    %cst_84 = arith.constant 0.00102838012 : f32
    %197 = vector.broadcast %cst_84 : f32 to vector<2x16x128xf32>
    %198 = arith.mulf %197, %196 : vector<2x16x128xf32>
    %199 = arith.addf %178, %198 : vector<2x16x128xf32>
    %200 = vector.extract_strided_slice %168 {offsets = [0, 0, 0], sizes = [2, 16, 128], strides = [1, 1, 1]} : vector<2x16x138xf32> to vector<2x16x128xf32>
    %201 = vector.extract_strided_slice %168 {offsets = [0, 0, 10], sizes = [2, 16, 128], strides = [1, 1, 1]} : vector<2x16x138xf32> to vector<2x16x128xf32>
    %202 = arith.addf %200, %201 : vector<2x16x128xf32>
    %cst_85 = arith.constant 0.00102838012 : f32
    %203 = vector.broadcast %cst_85 : f32 to vector<2x16x128xf32>
    %204 = arith.mulf %203, %202 : vector<2x16x128xf32>
    %205 = arith.addf %181, %204 : vector<2x16x128xf32>
    %206 = vector.extract_strided_slice %170 {offsets = [0, 0, 0], sizes = [2, 16, 128], strides = [1, 1, 1]} : vector<2x16x138xf32> to vector<2x16x128xf32>
    %207 = vector.extract_strided_slice %170 {offsets = [0, 0, 10], sizes = [2, 16, 128], strides = [1, 1, 1]} : vector<2x16x138xf32> to vector<2x16x128xf32>
    %208 = arith.addf %206, %207 : vector<2x16x128xf32>
    %cst_86 = arith.constant 0.00102838012 : f32
    %209 = vector.broadcast %cst_86 : f32 to vector<2x16x128xf32>
    %210 = arith.mulf %209, %208 : vector<2x16x128xf32>
    %211 = arith.addf %184, %210 : vector<2x16x128xf32>
    %212 = vector.extract_strided_slice %172 {offsets = [0, 0, 0], sizes = [2, 16, 128], strides = [1, 1, 1]} : vector<2x16x138xf32> to vector<2x16x128xf32>
    %213 = vector.extract_strided_slice %172 {offsets = [0, 0, 10], sizes = [2, 16, 128], strides = [1, 1, 1]} : vector<2x16x138xf32> to vector<2x16x128xf32>
    %214 = arith.addf %212, %213 : vector<2x16x128xf32>
    %cst_87 = arith.constant 0.00102838012 : f32
    %215 = vector.broadcast %cst_87 : f32 to vector<2x16x128xf32>
    %216 = arith.mulf %215, %214 : vector<2x16x128xf32>
    %217 = arith.addf %187, %216 : vector<2x16x128xf32>
    %218 = vector.extract_strided_slice %165 {offsets = [0, 0, 1], sizes = [2, 16, 128], strides = [1, 1, 1]} : vector<2x16x138xf32> to vector<2x16x128xf32>
    %219 = vector.extract_strided_slice %165 {offsets = [0, 0, 9], sizes = [2, 16, 128], strides = [1, 1, 1]} : vector<2x16x138xf32> to vector<2x16x128xf32>
    %220 = arith.addf %218, %219 : vector<2x16x128xf32>
    %cst_88 = arith.constant 0.00759875821 : f32
    %221 = vector.broadcast %cst_88 : f32 to vector<2x16x128xf32>
    %222 = arith.mulf %221, %220 : vector<2x16x128xf32>
    %223 = arith.addf %193, %222 : vector<2x16x128xf32>
    %224 = vector.extract_strided_slice %166 {offsets = [0, 0, 1], sizes = [2, 16, 128], strides = [1, 1, 1]} : vector<2x16x138xf32> to vector<2x16x128xf32>
    %225 = vector.extract_strided_slice %166 {offsets = [0, 0, 9], sizes = [2, 16, 128], strides = [1, 1, 1]} : vector<2x16x138xf32> to vector<2x16x128xf32>
    %226 = arith.addf %224, %225 : vector<2x16x128xf32>
    %cst_89 = arith.constant 0.00759875821 : f32
    %227 = vector.broadcast %cst_89 : f32 to vector<2x16x128xf32>
    %228 = arith.mulf %227, %226 : vector<2x16x128xf32>
    %229 = arith.addf %199, %228 : vector<2x16x128xf32>
    %230 = vector.extract_strided_slice %168 {offsets = [0, 0, 1], sizes = [2, 16, 128], strides = [1, 1, 1]} : vector<2x16x138xf32> to vector<2x16x128xf32>
    %231 = vector.extract_strided_slice %168 {offsets = [0, 0, 9], sizes = [2, 16, 128], strides = [1, 1, 1]} : vector<2x16x138xf32> to vector<2x16x128xf32>
    %232 = arith.addf %230, %231 : vector<2x16x128xf32>
    %cst_90 = arith.constant 0.00759875821 : f32
    %233 = vector.broadcast %cst_90 : f32 to vector<2x16x128xf32>
    %234 = arith.mulf %233, %232 : vector<2x16x128xf32>
    %235 = arith.addf %205, %234 : vector<2x16x128xf32>
    %236 = vector.extract_strided_slice %170 {offsets = [0, 0, 1], sizes = [2, 16, 128], strides = [1, 1, 1]} : vector<2x16x138xf32> to vector<2x16x128xf32>
    %237 = vector.extract_strided_slice %170 {offsets = [0, 0, 9], sizes = [2, 16, 128], strides = [1, 1, 1]} : vector<2x16x138xf32> to vector<2x16x128xf32>
    %238 = arith.addf %236, %237 : vector<2x16x128xf32>
    %cst_91 = arith.constant 0.00759875821 : f32
    %239 = vector.broadcast %cst_91 : f32 to vector<2x16x128xf32>
    %240 = arith.mulf %239, %238 : vector<2x16x128xf32>
    %241 = arith.addf %211, %240 : vector<2x16x128xf32>
    %242 = vector.extract_strided_slice %172 {offsets = [0, 0, 1], sizes = [2, 16, 128], strides = [1, 1, 1]} : vector<2x16x138xf32> to vector<2x16x128xf32>
    %243 = vector.extract_strided_slice %172 {offsets = [0, 0, 9], sizes = [2, 16, 128], strides = [1, 1, 1]} : vector<2x16x138xf32> to vector<2x16x128xf32>
    %244 = arith.addf %242, %243 : vector<2x16x128xf32>
    %cst_92 = arith.constant 0.00759875821 : f32
    %245 = vector.broadcast %cst_92 : f32 to vector<2x16x128xf32>
    %246 = arith.mulf %245, %244 : vector<2x16x128xf32>
    %247 = arith.addf %217, %246 : vector<2x16x128xf32>
    %248 = vector.extract_strided_slice %165 {offsets = [0, 0, 2], sizes = [2, 16, 128], strides = [1, 1, 1]} : vector<2x16x138xf32> to vector<2x16x128xf32>
    %249 = vector.extract_strided_slice %165 {offsets = [0, 0, 8], sizes = [2, 16, 128], strides = [1, 1, 1]} : vector<2x16x138xf32> to vector<2x16x128xf32>
    %250 = arith.addf %248, %249 : vector<2x16x128xf32>
    %cst_93 = arith.constant 0.0360007733 : f32
    %251 = vector.broadcast %cst_93 : f32 to vector<2x16x128xf32>
    %252 = arith.mulf %251, %250 : vector<2x16x128xf32>
    %253 = arith.addf %223, %252 : vector<2x16x128xf32>
    %254 = vector.extract_strided_slice %166 {offsets = [0, 0, 2], sizes = [2, 16, 128], strides = [1, 1, 1]} : vector<2x16x138xf32> to vector<2x16x128xf32>
    %255 = vector.extract_strided_slice %166 {offsets = [0, 0, 8], sizes = [2, 16, 128], strides = [1, 1, 1]} : vector<2x16x138xf32> to vector<2x16x128xf32>
    %256 = arith.addf %254, %255 : vector<2x16x128xf32>
    %cst_94 = arith.constant 0.0360007733 : f32
    %257 = vector.broadcast %cst_94 : f32 to vector<2x16x128xf32>
    %258 = arith.mulf %257, %256 : vector<2x16x128xf32>
    %259 = arith.addf %229, %258 : vector<2x16x128xf32>
    %260 = vector.extract_strided_slice %168 {offsets = [0, 0, 2], sizes = [2, 16, 128], strides = [1, 1, 1]} : vector<2x16x138xf32> to vector<2x16x128xf32>
    %261 = vector.extract_strided_slice %168 {offsets = [0, 0, 8], sizes = [2, 16, 128], strides = [1, 1, 1]} : vector<2x16x138xf32> to vector<2x16x128xf32>
    %262 = arith.addf %260, %261 : vector<2x16x128xf32>
    %cst_95 = arith.constant 0.0360007733 : f32
    %263 = vector.broadcast %cst_95 : f32 to vector<2x16x128xf32>
    %264 = arith.mulf %263, %262 : vector<2x16x128xf32>
    %265 = arith.addf %235, %264 : vector<2x16x128xf32>
    %266 = vector.extract_strided_slice %170 {offsets = [0, 0, 2], sizes = [2, 16, 128], strides = [1, 1, 1]} : vector<2x16x138xf32> to vector<2x16x128xf32>
    %267 = vector.extract_strided_slice %170 {offsets = [0, 0, 8], sizes = [2, 16, 128], strides = [1, 1, 1]} : vector<2x16x138xf32> to vector<2x16x128xf32>
    %268 = arith.addf %266, %267 : vector<2x16x128xf32>
    %cst_96 = arith.constant 0.0360007733 : f32
    %269 = vector.broadcast %cst_96 : f32 to vector<2x16x128xf32>
    %270 = arith.mulf %269, %268 : vector<2x16x128xf32>
    %271 = arith.addf %241, %270 : vector<2x16x128xf32>
    %272 = vector.extract_strided_slice %172 {offsets = [0, 0, 2], sizes = [2, 16, 128], strides = [1, 1, 1]} : vector<2x16x138xf32> to vector<2x16x128xf32>
    %273 = vector.extract_strided_slice %172 {offsets = [0, 0, 8], sizes = [2, 16, 128], strides = [1, 1, 1]} : vector<2x16x138xf32> to vector<2x16x128xf32>
    %274 = arith.addf %272, %273 : vector<2x16x128xf32>
    %cst_97 = arith.constant 0.0360007733 : f32
    %275 = vector.broadcast %cst_97 : f32 to vector<2x16x128xf32>
    %276 = arith.mulf %275, %274 : vector<2x16x128xf32>
    %277 = arith.addf %247, %276 : vector<2x16x128xf32>
    %278 = vector.extract_strided_slice %165 {offsets = [0, 0, 3], sizes = [2, 16, 128], strides = [1, 1, 1]} : vector<2x16x138xf32> to vector<2x16x128xf32>
    %279 = vector.extract_strided_slice %165 {offsets = [0, 0, 7], sizes = [2, 16, 128], strides = [1, 1, 1]} : vector<2x16x138xf32> to vector<2x16x128xf32>
    %280 = arith.addf %278, %279 : vector<2x16x128xf32>
    %cst_98 = arith.constant 0.109360687 : f32
    %281 = vector.broadcast %cst_98 : f32 to vector<2x16x128xf32>
    %282 = arith.mulf %281, %280 : vector<2x16x128xf32>
    %283 = arith.addf %253, %282 : vector<2x16x128xf32>
    %284 = vector.extract_strided_slice %166 {offsets = [0, 0, 3], sizes = [2, 16, 128], strides = [1, 1, 1]} : vector<2x16x138xf32> to vector<2x16x128xf32>
    %285 = vector.extract_strided_slice %166 {offsets = [0, 0, 7], sizes = [2, 16, 128], strides = [1, 1, 1]} : vector<2x16x138xf32> to vector<2x16x128xf32>
    %286 = arith.addf %284, %285 : vector<2x16x128xf32>
    %cst_99 = arith.constant 0.109360687 : f32
    %287 = vector.broadcast %cst_99 : f32 to vector<2x16x128xf32>
    %288 = arith.mulf %287, %286 : vector<2x16x128xf32>
    %289 = arith.addf %259, %288 : vector<2x16x128xf32>
    %290 = vector.extract_strided_slice %168 {offsets = [0, 0, 3], sizes = [2, 16, 128], strides = [1, 1, 1]} : vector<2x16x138xf32> to vector<2x16x128xf32>
    %291 = vector.extract_strided_slice %168 {offsets = [0, 0, 7], sizes = [2, 16, 128], strides = [1, 1, 1]} : vector<2x16x138xf32> to vector<2x16x128xf32>
    %292 = arith.addf %290, %291 : vector<2x16x128xf32>
    %cst_100 = arith.constant 0.109360687 : f32
    %293 = vector.broadcast %cst_100 : f32 to vector<2x16x128xf32>
    %294 = arith.mulf %293, %292 : vector<2x16x128xf32>
    %295 = arith.addf %265, %294 : vector<2x16x128xf32>
    %296 = vector.extract_strided_slice %170 {offsets = [0, 0, 3], sizes = [2, 16, 128], strides = [1, 1, 1]} : vector<2x16x138xf32> to vector<2x16x128xf32>
    %297 = vector.extract_strided_slice %170 {offsets = [0, 0, 7], sizes = [2, 16, 128], strides = [1, 1, 1]} : vector<2x16x138xf32> to vector<2x16x128xf32>
    %298 = arith.addf %296, %297 : vector<2x16x128xf32>
    %cst_101 = arith.constant 0.109360687 : f32
    %299 = vector.broadcast %cst_101 : f32 to vector<2x16x128xf32>
    %300 = arith.mulf %299, %298 : vector<2x16x128xf32>
    %301 = arith.addf %271, %300 : vector<2x16x128xf32>
    %302 = vector.extract_strided_slice %172 {offsets = [0, 0, 3], sizes = [2, 16, 128], strides = [1, 1, 1]} : vector<2x16x138xf32> to vector<2x16x128xf32>
    %303 = vector.extract_strided_slice %172 {offsets = [0, 0, 7], sizes = [2, 16, 128], strides = [1, 1, 1]} : vector<2x16x138xf32> to vector<2x16x128xf32>
    %304 = arith.addf %302, %303 : vector<2x16x128xf32>
    %cst_102 = arith.constant 0.109360687 : f32
    %305 = vector.broadcast %cst_102 : f32 to vector<2x16x128xf32>
    %306 = arith.mulf %305, %304 : vector<2x16x128xf32>
    %307 = arith.addf %277, %306 : vector<2x16x128xf32>
    %308 = vector.extract_strided_slice %165 {offsets = [0, 0, 4], sizes = [2, 16, 128], strides = [1, 1, 1]} : vector<2x16x138xf32> to vector<2x16x128xf32>
    %309 = vector.extract_strided_slice %165 {offsets = [0, 0, 6], sizes = [2, 16, 128], strides = [1, 1, 1]} : vector<2x16x138xf32> to vector<2x16x128xf32>
    %310 = arith.addf %308, %309 : vector<2x16x128xf32>
    %cst_103 = arith.constant 0.213005543 : f32
    %311 = vector.broadcast %cst_103 : f32 to vector<2x16x128xf32>
    %312 = arith.mulf %311, %310 : vector<2x16x128xf32>
    %313 = arith.addf %283, %312 : vector<2x16x128xf32>
    %314 = vector.extract_strided_slice %166 {offsets = [0, 0, 4], sizes = [2, 16, 128], strides = [1, 1, 1]} : vector<2x16x138xf32> to vector<2x16x128xf32>
    %315 = vector.extract_strided_slice %166 {offsets = [0, 0, 6], sizes = [2, 16, 128], strides = [1, 1, 1]} : vector<2x16x138xf32> to vector<2x16x128xf32>
    %316 = arith.addf %314, %315 : vector<2x16x128xf32>
    %cst_104 = arith.constant 0.213005543 : f32
    %317 = vector.broadcast %cst_104 : f32 to vector<2x16x128xf32>
    %318 = arith.mulf %317, %316 : vector<2x16x128xf32>
    %319 = arith.addf %289, %318 : vector<2x16x128xf32>
    %320 = vector.extract_strided_slice %168 {offsets = [0, 0, 4], sizes = [2, 16, 128], strides = [1, 1, 1]} : vector<2x16x138xf32> to vector<2x16x128xf32>
    %321 = vector.extract_strided_slice %168 {offsets = [0, 0, 6], sizes = [2, 16, 128], strides = [1, 1, 1]} : vector<2x16x138xf32> to vector<2x16x128xf32>
    %322 = arith.addf %320, %321 : vector<2x16x128xf32>
    %cst_105 = arith.constant 0.213005543 : f32
    %323 = vector.broadcast %cst_105 : f32 to vector<2x16x128xf32>
    %324 = arith.mulf %323, %322 : vector<2x16x128xf32>
    %325 = arith.addf %295, %324 : vector<2x16x128xf32>
    %326 = vector.extract_strided_slice %170 {offsets = [0, 0, 4], sizes = [2, 16, 128], strides = [1, 1, 1]} : vector<2x16x138xf32> to vector<2x16x128xf32>
    %327 = vector.extract_strided_slice %170 {offsets = [0, 0, 6], sizes = [2, 16, 128], strides = [1, 1, 1]} : vector<2x16x138xf32> to vector<2x16x128xf32>
    %328 = arith.addf %326, %327 : vector<2x16x128xf32>
    %cst_106 = arith.constant 0.213005543 : f32
    %329 = vector.broadcast %cst_106 : f32 to vector<2x16x128xf32>
    %330 = arith.mulf %329, %328 : vector<2x16x128xf32>
    %331 = arith.addf %301, %330 : vector<2x16x128xf32>
    %332 = vector.extract_strided_slice %172 {offsets = [0, 0, 4], sizes = [2, 16, 128], strides = [1, 1, 1]} : vector<2x16x138xf32> to vector<2x16x128xf32>
    %333 = vector.extract_strided_slice %172 {offsets = [0, 0, 6], sizes = [2, 16, 128], strides = [1, 1, 1]} : vector<2x16x138xf32> to vector<2x16x128xf32>
    %334 = arith.addf %332, %333 : vector<2x16x128xf32>
    %cst_107 = arith.constant 0.213005543 : f32
    %335 = vector.broadcast %cst_107 : f32 to vector<2x16x128xf32>
    %336 = arith.mulf %335, %334 : vector<2x16x128xf32>
    %337 = arith.addf %307, %336 : vector<2x16x128xf32>
    %338 = arith.mulf %313, %313 : vector<2x16x128xf32>
    %339 = arith.subf %325, %338 : vector<2x16x128xf32>
    %cst_108 = arith.constant 1.00833333 : f32
    %340 = vector.broadcast %cst_108 : f32 to vector<2x16x128xf32>
    %341 = arith.mulf %340, %339 : vector<2x16x128xf32>
    %342 = arith.mulf %319, %319 : vector<2x16x128xf32>
    %343 = arith.subf %331, %342 : vector<2x16x128xf32>
    %cst_109 = arith.constant 1.00833333 : f32
    %344 = vector.broadcast %cst_109 : f32 to vector<2x16x128xf32>
    %345 = arith.mulf %344, %343 : vector<2x16x128xf32>
    %346 = arith.mulf %313, %319 : vector<2x16x128xf32>
    %347 = arith.subf %337, %346 : vector<2x16x128xf32>
    %cst_110 = arith.constant 1.00833333 : f32
    %348 = vector.broadcast %cst_110 : f32 to vector<2x16x128xf32>
    %349 = arith.mulf %348, %347 : vector<2x16x128xf32>
    %cst_111 = arith.constant 2.000000e+00 : f32
    %350 = vector.broadcast %cst_111 : f32 to vector<2x16x128xf32>
    %351 = arith.mulf %350, %313 : vector<2x16x128xf32>
    %352 = arith.mulf %351, %319 : vector<2x16x128xf32>
    %353 = vector.broadcast %0 : f32 to vector<2x16x128xf32>
    %354 = arith.addf %352, %353 : vector<2x16x128xf32>
    %cst_112 = arith.constant 2.000000e+00 : f32
    %355 = vector.broadcast %cst_112 : f32 to vector<2x16x128xf32>
    %356 = arith.mulf %355, %349 : vector<2x16x128xf32>
    %357 = vector.broadcast %1 : f32 to vector<2x16x128xf32>
    %358 = arith.addf %356, %357 : vector<2x16x128xf32>
    %359 = arith.mulf %313, %313 : vector<2x16x128xf32>
    %360 = arith.mulf %319, %319 : vector<2x16x128xf32>
    %361 = arith.addf %359, %360 : vector<2x16x128xf32>
    %362 = vector.broadcast %0 : f32 to vector<2x16x128xf32>
    %363 = arith.addf %361, %362 : vector<2x16x128xf32>
    %364 = arith.addf %341, %345 : vector<2x16x128xf32>
    %365 = vector.broadcast %1 : f32 to vector<2x16x128xf32>
    %366 = arith.addf %364, %365 : vector<2x16x128xf32>
    %367 = arith.mulf %354, %358 : vector<2x16x128xf32>
    %368 = arith.mulf %363, %366 : vector<2x16x128xf32>
    %369 = arith.divf %367, %368 : vector<2x16x128xf32>
    %cst_113 = arith.constant 0.000000e+00 : f32
    %370 = vector.broadcast %cst_113 : f32 to vector<2x16xf32>
    %371 = tpu.iota {dimensions = array<i32: 2>} : vector<2x16x128xi32>
    %c16_i32 = arith.constant 16 : i32
    %372 = vector.broadcast %c16_i32 : i32 to vector<2x16x128xi32>
    %373 = arith.cmpi slt, %371, %372 : vector<2x16x128xi32>
    %cst_114 = arith.constant 0.000000e+00 : f32
    %374 = vector.broadcast %cst_114 : f32 to vector<2x16x128xf32>
    %375 = arith.select %373, %369, %374 : vector<2x16x128xi1>, vector<2x16x128xf32>
    %cst_115 = arith.constant dense<0.000000e+00> : vector<2x16xf32>
    %376 = vector.multi_reduction <add>, %375, %cst_115 [2] : vector<2x16x128xf32> to vector<2x16xf32>
    %377 = arith.addf %370, %376 : vector<2x16xf32>
    %c2_i32 = arith.constant 2 : i32
    %378 = arith.muli %arg0, %c2_i32 : i32
    %c0_i32 = arith.constant 0 : i32
    %379 = arith.addi %378, %c0_i32 : i32
    %380 = arith.index_cast %379 : i32 to index
    %381 = memref.load %arg1[%380] : memref<2xi32, #tpu.memory_space<smem>>
    %c2_i32_116 = arith.constant 2 : i32
    %382 = arith.muli %arg0, %c2_i32_116 : i32
    %c1_i32 = arith.constant 1 : i32
    %383 = arith.addi %382, %c1_i32 : i32
    %384 = arith.index_cast %383 : i32 to index
    %385 = memref.load %arg1[%384] : memref<2xi32, #tpu.memory_space<smem>>
    %386 = vector.broadcast %381 : i32 to vector<1xi32>
    %387 = vector.broadcast %385 : i32 to vector<1xi32>
    %388 = tpu.concatenate %386, %387 in 0 : vector<1xi32>, vector<1xi32> -> vector<2xi32>
    %389 = vector.shape_cast %388 : vector<2xi32> to vector<2x1xi32>
    %390 = tpu.iota {dimensions = array<i32: 1>} : vector<2x16xi32>
    %391 = vector.broadcast %389 : vector<2x1xi32> to vector<2x16xi32>
    %392 = arith.cmpi slt, %390, %391 : vector<2x16xi32>
    %cst_117 = arith.constant 0.000000e+00 : f32
    %393 = vector.broadcast %cst_117 : f32 to vector<2x16xf32>
    %394 = arith.select %392, %377, %393 : vector<2x16xi1>, vector<2x16xf32>
    %395 = vector.shape_cast %394 : vector<2x16xf32> to vector<1x2x16xf32>
    %cst_118 = arith.constant dense<0.000000e+00> : vector<1xf32>
    %396 = vector.multi_reduction <add>, %395, %cst_118 [1, 2] : vector<1x2x16xf32> to vector<1xf32>
    %397 = vector.shape_cast %396 : vector<1xf32> to vector<1x1x1xf32>
    %398 = vector.extract %397[0, 0, 0] : f32 from vector<1x1x1xf32>
    %399 = vector.broadcast %398 : f32 to vector<1x1x128xf32>
    %c0_119 = arith.constant 0 : index
    %c0_120 = arith.constant 0 : index
    %c0_121 = arith.constant 0 : index
    %400 = vector.load %arg5[%c0_119, %c0_120, %c0_121] : memref<1x1x128xf32, #tpu.memory_space<vmem>>, vector<1x1x128xf32>
    tpu.vector_store %arg5[%c0_119, %c0_120, %c0_121], %399 {strides = array<i32>} : memref<1x1x128xf32, #tpu.memory_space<vmem>>, vector<1x1x128xf32>,
    return
  }
  func.func @transform_0(%arg0: i32) -> i32 {
    %c0_i32 = arith.constant 0 : i32
    %c0_i32_0 = arith.constant 0 : i32
    return %c0_i32 : i32
  }
  func.func @transform_1(%arg0: i32) -> i32 {
    %c0_i32 = arith.constant 0 : i32
    %c0_i32_0 = arith.constant 0 : i32
    return %c0_i32 : i32
  }
  func.func @transform_2(%arg0: i32) -> (i32, i32, i32) {
    %c0_i32 = arith.constant 0 : i32
    %c0_i32_0 = arith.constant 0 : i32
    %c0_i32_1 = arith.constant 0 : i32
    return %arg0, %c0_i32, %c0_i32_0 : i32, i32, i32
  }
  func.func @transform_3(%arg0: i32) -> (i32, i32, i32) {
    %c0_i32 = arith.constant 0 : i32
    %c0_i32_0 = arith.constant 0 : i32
    %c0_i32_1 = arith.constant 0 : i32
    return %arg0, %c0_i32, %c0_i32_0 : i32, i32, i32
  }
  func.func @transform_4(%arg0: i32) -> (i32, i32, i32) {
    %c0_i32 = arith.constant 0 : i32
    %c0_i32_0 = arith.constant 0 : i32
    %c0_i32_1 = arith.constant 0 : i32
    return %arg0, %c0_i32, %c0_i32_0 : i32, i32, i32
  }
}

</mosaic_0001>

<llo_original>
// kernel: ssim_forward.1
$region0: #{ssim_forward.1}
  #allocation0 [shape = 'u32[]', space=smem, size = 0x4, offset = 0x4, fixed_abs, tag = 'smem constant byte address 0x4 - core index']
  #allocation1 [shape = 'u32[144,128]{1,0:T(1,128)}', space=vmem, size = 0x12000, scoped, tag = 'internal scratch']
  %s0 = inlined_call_operand.vmem [shape: s32[2], index: 0, kind: input, shape index: {}]
  %s1 = inlined_call_operand.vmem [shape: f32[2], index: 1, kind: input, shape index: {}]
  %s2 = inlined_call_operand.vmem [shape: bf16[2,26,138], index: 2, kind: input, shape index: {}]
  %s3 = inlined_call_operand.vmem [shape: bf16[2,26,138], index: 3, kind: input, shape index: {}]
  %s4 = inlined_call_operand.vmem [shape: f32[1,1,128], index: 4, kind: output, shape index: {}]
  %s5 = sld [smem:[#allocation0]]
  $region34: #{ssim_forward.1} parent=0
    _
  %s7 = ssub.s32 1, %s5
  %s8 = scalar_select 0, %s7, %s5
  $region1: #{ssim_forward.1} parent=0
    #allocation2 [shape = 'u8[512]{0}', space=smem, size = 0x200, scoped, tag = 'input window, operand 0, single buffered']
    #allocation3 [shape = 's32[1]{0}', space=sflag, size = 0x4, scoped, tag = 'scoped memory for ssim_forward.1']
    #allocation4 [shape = 'u8[512]{0}', space=smem, size = 0x200, scoped, tag = 'input window, operand 1, single buffered']
    #allocation5 [shape = 's32[1]{0}', space=sflag, size = 0x4, scoped, tag = 'scoped memory for ssim_forward.1']
    %9 = vsyncpa [#allocation3], 0
    %10 = vsyncpa [#allocation5], 0
    // Predicated region
    $region2: #{ssim_forward.1} parent=1 // pred_check
      _
    $region3: #{ssim_forward.1} parent=1 // pred_check_branch
      %12 = sbr.rel (0) target = $region5
    $region4: #{ssim_forward.1} parent=1 // pred_region
      %s14 = ssub.s32 16, 16
      %15 = vsyncadd [#allocation3], %s14
      %s17 = sshll.u32 %s0, 4
      %s18 = int_to_ptr.vmem [resolvable:$true] %s17
      %20 = dma.vmem_to_smem %s18, 16, [#allocation2], [#allocation3]
    $region5: #{ssim_forward.1} parent=1 // pred_fallthru
      _
    // Predicated region
    $region6: #{ssim_forward.1} parent=1 // pred_check
      _
    $region7: #{ssim_forward.1} parent=1 // pred_check_branch
      %22 = sbr.rel (0) target = $region9
    $region8: #{ssim_forward.1} parent=1 // pred_region
      %s24 = ssub.s32 16, 16
      %25 = vsyncadd [#allocation5], %s24
      %s27 = sshll.u32 %s1, 4
      %s28 = int_to_ptr.vmem [resolvable:$true] %s27
      %30 = dma.vmem_to_smem %s28, 16, [#allocation4], [#allocation5]
    $region9: #{ssim_forward.1} parent=1 // pred_fallthru
      _
    // Predicated region
    $region10: #{ssim_forward.1} parent=1 // pred_check
      _
    $region11: #{ssim_forward.1} parent=1 // pred_check_branch
      %32 = sbr.rel (0) target = $region13
    $region12: #{ssim_forward.1} parent=1 // pred_region
      _
    $region13: #{ssim_forward.1} parent=1 // pred_fallthru
      _
    // Predicated region
    $region14: #{ssim_forward.1} parent=1 // pred_check
      _
    $region15: #{ssim_forward.1} parent=1 // pred_check_branch
      %34 = sbr.rel (0) target = $region17
    $region16: #{ssim_forward.1} parent=1 // pred_region
      _
    $region17: #{ssim_forward.1} parent=1 // pred_fallthru
      _
    // Predicated region
    $region18: #{ssim_forward.1} parent=1 // pred_check
      _
    $region19: #{ssim_forward.1} parent=1 // pred_check_branch
      %36 = sbr.rel (0) target = $region21
    $region20: #{ssim_forward.1} parent=1 // pred_region
      %37 = dma.done [#allocation3], 16
    $region21: #{ssim_forward.1} parent=1 // pred_fallthru
      _
    // Predicated region
    $region22: #{ssim_forward.1} parent=1 // pred_check
      _
    $region23: #{ssim_forward.1} parent=1 // pred_check_branch
      %39 = sbr.rel (0) target = $region25
    $region24: #{ssim_forward.1} parent=1 // pred_region
      %40 = dma.done [#allocation5], 16
    $region25: #{ssim_forward.1} parent=1 // pred_fallthru
      _
    %41 = sfence
    %s42 = sld [smem:[#allocation4]]
    %s43 = sld [smem:[#allocation4 + $0x1]]
    %v44 = vld [vmem:[%s2] sm:$0xff]
    %v45 = vld [vmem:[%s2 + $0x8] sm:$0xff]
    %v46 = vld [vmem:[%s2 + $0x20] sm:$0xff]
    %v47 = vld [vmem:[%s2 + $0x28] sm:$0xff]
    %v48 = vunpack.c.l.bf16 %v44
    %v49 = vunpack.c.h.bf16 %v44
    %v50 = vunpack.c.l.bf16 %v45
    %v51 = vunpack.c.h.bf16 %v45
    %v52 = vunpack.c.l.bf16 %v46
    %v53 = vunpack.c.h.bf16 %v46
    %v54 = vunpack.c.l.bf16 %v47
    %v55 = vunpack.c.h.bf16 %v47
    %v56 = vld [vmem:[%s3] sm:$0xff]
    %v57 = vld [vmem:[%s3 + $0x8] sm:$0xff]
    %v58 = vld [vmem:[%s3 + $0x20] sm:$0xff]
    %v59 = vld [vmem:[%s3 + $0x28] sm:$0xff]
    %v60 = vunpack.c.l.bf16 %v56
    %v61 = vunpack.c.h.bf16 %v56
    %v62 = vunpack.c.l.bf16 %v57
    %v63 = vunpack.c.h.bf16 %v57
    %v64 = vunpack.c.l.bf16 %v58
    %v65 = vunpack.c.h.bf16 %v58
    %v66 = vunpack.c.l.bf16 %v59
    %v67 = vunpack.c.h.bf16 %v59
    %v68 = vmul.f32 %v48, 0.0010283801
    %v69 = vmul.f32 %v49, 0.0010283801
    %v70 = vmul.f32 %v50, 0.0010283801
    %v71 = vmul.f32 %v51, 0.0010283801
    %v72 = vmul.f32 %v52, 0.0010283801
    %v73 = vmul.f32 %v53, 0.0010283801
    %v74 = vmul.f32 %v54, 0.0010283801
    %v75 = vmul.f32 %v55, 0.0010283801
    %v76 = vmul.f32 %v60, 0.0010283801
    %v77 = vmul.f32 %v61, 0.0010283801
    %v78 = vmul.f32 %v62, 0.0010283801
    %v79 = vmul.f32 %v63, 0.0010283801
    %v80 = vmul.f32 %v64, 0.0010283801
    %v81 = vmul.f32 %v65, 0.0010283801
    %v82 = vmul.f32 %v66, 0.0010283801
    %v83 = vmul.f32 %v67, 0.0010283801
    %v84 = vmul.f32 %v68, %v48
    %v85 = vmul.f32 %v69, %v49
    %v86 = vmul.f32 %v70, %v50
    %v87 = vmul.f32 %v71, %v51
    %v88 = vmul.f32 %v72, %v52
    %v89 = vmul.f32 %v73, %v53
    %v90 = vmul.f32 %v74, %v54
    %v91 = vmul.f32 %v75, %v55
    %v92 = vmul.f32 %v76, %v60
    %v93 = vmul.f32 %v77, %v61
    %v94 = vmul.f32 %v78, %v62
    %v95 = vmul.f32 %v79, %v63
    %v96 = vmul.f32 %v80, %v64
    %v97 = vmul.f32 %v81, %v65
    %v98 = vmul.f32 %v82, %v66
    %v99 = vmul.f32 %v83, %v67
    %v100 = vmul.f32 %v68, %v60
    %v101 = vmul.f32 %v69, %v61
    %v102 = vmul.f32 %v70, %v62
    %v103 = vmul.f32 %v71, %v63
    %v104 = vmul.f32 %v72, %v64
    %v105 = vmul.f32 %v73, %v65
    %v106 = vmul.f32 %v74, %v66
    %v107 = vmul.f32 %v75, %v67
    %v108 = vld [vmem:[%s2 + $0x10] sm:$0x11]
    %v109 = vld [vmem:[%s2 + $0x30] sm:$0x11]
    %v110 = vunpack.c.l.bf16 %v108
    %v111 = vunpack.c.h.bf16 %v108
    %v112 = vunpack.c.l.bf16 %v109
    %v113 = vunpack.c.h.bf16 %v109
    %v114 = vld [vmem:[%s3 + $0x10] sm:$0x11]
    %v115 = vld [vmem:[%s3 + $0x30] sm:$0x11]
    %v116 = vunpack.c.l.bf16 %v114
    %v117 = vunpack.c.h.bf16 %v114
    %v118 = vunpack.c.l.bf16 %v115
    %v119 = vunpack.c.h.bf16 %v115
    %v120 = vmul.f32 %v48, 0.007598758
    %v121 = vmul.f32 %v49, 0.007598758
    %v122 = vmul.f32 %v50, 0.007598758
    %v123 = vmul.f32 %v51, 0.007598758
    %v124 = vmul.f32 %v110, 0.007598758
    %v125 = vmul.f32 %v111, 0.007598758
    %v126 = vmul.f32 %v52, 0.007598758
    %v127 = vmul.f32 %v53, 0.007598758
    %v128 = vmul.f32 %v54, 0.007598758
    %v129 = vmul.f32 %v55, 0.007598758
    %v130 = vmul.f32 %v112, 0.007598758
    %v131 = vmul.f32 %v113, 0.007598758
    %v132 = vmul.f32 %v60, 0.007598758
    %v133 = vmul.f32 %v61, 0.007598758
    %v134 = vmul.f32 %v62, 0.007598758
    %v135 = vmul.f32 %v63, 0.007598758
    %v136 = vmul.f32 %v116, 0.007598758
    %v137 = vmul.f32 %v117, 0.007598758
    %v138 = vmul.f32 %v64, 0.007598758
    %v139 = vmul.f32 %v65, 0.007598758
    %v140 = vmul.f32 %v66, 0.007598758
    %v141 = vmul.f32 %v67, 0.007598758
    %v142 = vmul.f32 %v118, 0.007598758
    %v143 = vmul.f32 %v119, 0.007598758
    %vm156 = vcmask 1046528
    %v157 = vrot.slane %v120, 1
    %v158 = vrot.slane %v122, 1
    %v159 = vsel %vm156, %v157, %v158
    %v160 = vrot.slane %v121, 1
    %v161 = vrot.slane %v123, 1
    %v162 = vsel %vm156, %v160, %v161
    %v163 = vrot.slane %v124, 1
    %v164 = vsel %vm156, %v158, %v163
    %v165 = vrot.slane %v125, 1
    %v166 = vsel %vm156, %v161, %v165
    %v167 = vrot.slane %v126, 1
    %v168 = vrot.slane %v128, 1
    %v169 = vsel %vm156, %v167, %v168
    %v170 = vrot.slane %v127, 1
    %v171 = vrot.slane %v129, 1
    %v172 = vsel %vm156, %v170, %v171
    %v173 = vrot.slane %v130, 1
    %v174 = vsel %vm156, %v168, %v173
    %v175 = vrot.slane %v131, 1
    %v176 = vsel %vm156, %v171, %v175
    %v185 = vadd.f32 %v68, %v159
    %v186 = vadd.f32 %v69, %v162
    %v187 = vadd.f32 %v70, %v164
    %v188 = vadd.f32 %v71, %v166
    %v189 = vadd.f32 %v72, %v169
    %v190 = vadd.f32 %v73, %v172
    %v191 = vadd.f32 %v74, %v174
    %v192 = vadd.f32 %v75, %v176
    %v205 = vrot.slane %v132, 1
    %v206 = vrot.slane %v134, 1
    %v207 = vsel %vm156, %v205, %v206
    %v208 = vrot.slane %v133, 1
    %v209 = vrot.slane %v135, 1
    %v210 = vsel %vm156, %v208, %v209
    %v211 = vrot.slane %v136, 1
    %v212 = vsel %vm156, %v206, %v211
    %v213 = vrot.slane %v137, 1
    %v214 = vsel %vm156, %v209, %v213
    %v215 = vrot.slane %v138, 1
    %v216 = vrot.slane %v140, 1
    %v217 = vsel %vm156, %v215, %v216
    %v218 = vrot.slane %v139, 1
    %v219 = vrot.slane %v141, 1
    %v220 = vsel %vm156, %v218, %v219
    %v221 = vrot.slane %v142, 1
    %v222 = vsel %vm156, %v216, %v221
    %v223 = vrot.slane %v143, 1
    %v224 = vsel %vm156, %v219, %v223
    %v233 = vadd.f32 %v76, %v207
    %v234 = vadd.f32 %v77, %v210
    %v235 = vadd.f32 %v78, %v212
    %v236 = vadd.f32 %v79, %v214
    %v237 = vadd.f32 %v80, %v217
    %v238 = vadd.f32 %v81, %v220
    %v239 = vadd.f32 %v82, %v222
    %v240 = vadd.f32 %v83, %v224
    %v241 = vmul.f32 %v120, %v48
    %v242 = vmul.f32 %v121, %v49
    %v243 = vmul.f32 %v122, %v50
    %v244 = vmul.f32 %v123, %v51
    %v245 = vmul.f32 %v124, %v110
    %v246 = vmul.f32 %v125, %v111
    %v247 = vmul.f32 %v126, %v52
    %v248 = vmul.f32 %v127, %v53
    %v249 = vmul.f32 %v128, %v54
    %v250 = vmul.f32 %v129, %v55
    %v251 = vmul.f32 %v130, %v112
    %v252 = vmul.f32 %v131, %v113
    %v265 = vrot.slane %v241, 1
    %v266 = vrot.slane %v243, 1
    %v267 = vsel %vm156, %v265, %v266
    %v268 = vrot.slane %v242, 1
    %v269 = vrot.slane %v244, 1
    %v270 = vsel %vm156, %v268, %v269
    %v271 = vrot.slane %v245, 1
    %v272 = vsel %vm156, %v266, %v271
    %v273 = vrot.slane %v246, 1
    %v274 = vsel %vm156, %v269, %v273
    %v275 = vrot.slane %v247, 1
    %v276 = vrot.slane %v249, 1
    %v277 = vsel %vm156, %v275, %v276
    %v278 = vrot.slane %v248, 1
    %v279 = vrot.slane %v250, 1
    %v280 = vsel %vm156, %v278, %v279
    %v281 = vrot.slane %v251, 1
    %v282 = vsel %vm156, %v276, %v281
    %v283 = vrot.slane %v252, 1
    %v284 = vsel %vm156, %v279, %v283
    %v293 = vadd.f32 %v84, %v267
    %v294 = vadd.f32 %v85, %v270
    %v295 = vadd.f32 %v86, %v272
    %v296 = vadd.f32 %v87, %v274
    %v297 = vadd.f32 %v88, %v277
    %v298 = vadd.f32 %v89, %v280
    %v299 = vadd.f32 %v90, %v282
    %v300 = vadd.f32 %v91, %v284
    %v301 = vmul.f32 %v132, %v60
    %v302 = vmul.f32 %v133, %v61
    %v303 = vmul.f32 %v134, %v62
    %v304 = vmul.f32 %v135, %v63
    %v305 = vmul.f32 %v136, %v116
    %v306 = vmul.f32 %v137, %v117
    %v307 = vmul.f32 %v138, %v64
    %v308 = vmul.f32 %v139, %v65
    %v309 = vmul.f32 %v140, %v66
    %v310 = vmul.f32 %v141, %v67
    %v311 = vmul.f32 %v142, %v118
    %v312 = vmul.f32 %v143, %v119
    %v325 = vrot.slane %v301, 1
    %v326 = vrot.slane %v303, 1
    %v327 = vsel %vm156, %v325, %v326
    %v328 = vrot.slane %v302, 1
    %v329 = vrot.slane %v304, 1
    %v330 = vsel %vm156, %v328, %v329
    %v331 = vrot.slane %v305, 1
    %v332 = vsel %vm156, %v326, %v331
    %v333 = vrot.slane %v306, 1
    %v334 = vsel %vm156, %v329, %v333
    %v335 = vrot.slane %v307, 1
    %v336 = vrot.slane %v309, 1
    %v337 = vsel %vm156, %v335, %v336
    %v338 = vrot.slane %v308, 1
    %v339 = vrot.slane %v310, 1
    %v340 = vsel %vm156, %v338, %v339
    %v341 = vrot.slane %v311, 1
    %v342 = vsel %vm156, %v336, %v341
    %v343 = vrot.slane %v312, 1
    %v344 = vsel %vm156, %v339, %v343
    %v353 = vadd.f32 %v92, %v327
    %v354 = vadd.f32 %v93, %v330
    %v355 = vadd.f32 %v94, %v332
    %v356 = vadd.f32 %v95, %v334
    %v357 = vadd.f32 %v96, %v337
    %v358 = vadd.f32 %v97, %v340
    %v359 = vadd.f32 %v98, %v342
    %v360 = vadd.f32 %v99, %v344
    %v361 = vmul.f32 %v120, %v60
    %v362 = vmul.f32 %v121, %v61
    %v363 = vmul.f32 %v122, %v62
    %v364 = vmul.f32 %v123, %v63
    %v365 = vmul.f32 %v124, %v116
    %v366 = vmul.f32 %v125, %v117
    %v367 = vmul.f32 %v126, %v64
    %v368 = vmul.f32 %v127, %v65
    %v369 = vmul.f32 %v128, %v66
    %v370 = vmul.f32 %v129, %v67
    %v371 = vmul.f32 %v130, %v118
    %v372 = vmul.f32 %v131, %v119
    %v385 = vrot.slane %v361, 1
    %v386 = vrot.slane %v363, 1
    %v387 = vsel %vm156, %v385, %v386
    %v388 = vrot.slane %v362, 1
    %v389 = vrot.slane %v364, 1
    %v390 = vsel %vm156, %v388, %v389
    %v391 = vrot.slane %v365, 1
    %v392 = vsel %vm156, %v386, %v391
    %v393 = vrot.slane %v366, 1
    %v394 = vsel %vm156, %v389, %v393
    %v395 = vrot.slane %v367, 1
    %v396 = vrot.slane %v369, 1
    %v397 = vsel %vm156, %v395, %v396
    %v398 = vrot.slane %v368, 1
    %v399 = vrot.slane %v370, 1
    %v400 = vsel %vm156, %v398, %v399
    %v401 = vrot.slane %v371, 1
    %v402 = vsel %vm156, %v396, %v401
    %v403 = vrot.slane %v372, 1
    %v404 = vsel %vm156, %v399, %v403
    %v413 = vadd.f32 %v100, %v387
    %v414 = vadd.f32 %v101, %v390
    %v415 = vadd.f32 %v102, %v392
    %v416 = vadd.f32 %v103, %v394
    %v417 = vadd.f32 %v104, %v397
    %v418 = vadd.f32 %v105, %v400
    %v419 = vadd.f32 %v106, %v402
    %v420 = vadd.f32 %v107, %v404
    %v421 = vld [vmem:[%s2] sm:$0xee]
    %v422 = vld [vmem:[%s2 + $0x20] sm:$0xee]
    %v423 = vunpack.c.l.bf16 %v421
    %v424 = vunpack.c.h.bf16 %v421
    %v425 = vunpack.c.l.bf16 %v422
    %v426 = vunpack.c.h.bf16 %v422
    %v427 = vld [vmem:[%s3] sm:$0xee]
    %v428 = vld [vmem:[%s3 + $0x20] sm:$0xee]
    %v429 = vunpack.c.l.bf16 %v427
    %v430 = vunpack.c.h.bf16 %v427
    %v431 = vunpack.c.l.bf16 %v428
    %v432 = vunpack.c.h.bf16 %v428
    %v433 = vmul.f32 %v423, 0.036000773
    %v434 = vmul.f32 %v424, 0.036000773
    %v435 = vmul.f32 %v50, 0.036000773
    %v436 = vmul.f32 %v51, 0.036000773
    %v437 = vmul.f32 %v110, 0.036000773
    %v438 = vmul.f32 %v111, 0.036000773
    %v439 = vmul.f32 %v425, 0.036000773
    %v440 = vmul.f32 %v426, 0.036000773
    %v441 = vmul.f32 %v54, 0.036000773
    %v442 = vmul.f32 %v55, 0.036000773
    %v443 = vmul.f32 %v112, 0.036000773
    %v444 = vmul.f32 %v113, 0.036000773
    %v445 = vmul.f32 %v429, 0.036000773
    %v446 = vmul.f32 %v430, 0.036000773
    %v447 = vmul.f32 %v62, 0.036000773
    %v448 = vmul.f32 %v63, 0.036000773
    %v449 = vmul.f32 %v116, 0.036000773
    %v450 = vmul.f32 %v117, 0.036000773
    %v451 = vmul.f32 %v431, 0.036000773
    %v452 = vmul.f32 %v432, 0.036000773
    %v453 = vmul.f32 %v66, 0.036000773
    %v454 = vmul.f32 %v67, 0.036000773
    %v455 = vmul.f32 %v118, 0.036000773
    %v456 = vmul.f32 %v119, 0.036000773
    %vm469 = vcmask 1045504
    %v470 = vrot.slane %v433, 2
    %v471 = vrot.slane %v435, 2
    %v472 = vsel %vm469, %v470, %v471
    %v473 = vrot.slane %v434, 2
    %v474 = vrot.slane %v436, 2
    %v475 = vsel %vm469, %v473, %v474
    %v476 = vrot.slane %v437, 2
    %v477 = vsel %vm469, %v471, %v476
    %v478 = vrot.slane %v438, 2
    %v479 = vsel %vm469, %v474, %v478
    %v480 = vrot.slane %v439, 2
    %v481 = vrot.slane %v441, 2
    %v482 = vsel %vm469, %v480, %v481
    %v483 = vrot.slane %v440, 2
    %v484 = vrot.slane %v442, 2
    %v485 = vsel %vm469, %v483, %v484
    %v486 = vrot.slane %v443, 2
    %v487 = vsel %vm469, %v481, %v486
    %v488 = vrot.slane %v444, 2
    %v489 = vsel %vm469, %v484, %v488
    %v498 = vadd.f32 %v185, %v472
    %v499 = vadd.f32 %v186, %v475
    %v500 = vadd.f32 %v187, %v477
    %v501 = vadd.f32 %v188, %v479
    %v502 = vadd.f32 %v189, %v482
    %v503 = vadd.f32 %v190, %v485
    %v504 = vadd.f32 %v191, %v487
    %v505 = vadd.f32 %v192, %v489
    %v518 = vrot.slane %v445, 2
    %v519 = vrot.slane %v447, 2
    %v520 = vsel %vm469, %v518, %v519
    %v521 = vrot.slane %v446, 2
    %v522 = vrot.slane %v448, 2
    %v523 = vsel %vm469, %v521, %v522
    %v524 = vrot.slane %v449, 2
    %v525 = vsel %vm469, %v519, %v524
    %v526 = vrot.slane %v450, 2
    %v527 = vsel %vm469, %v522, %v526
    %v528 = vrot.slane %v451, 2
    %v529 = vrot.slane %v453, 2
    %v530 = vsel %vm469, %v528, %v529
    %v531 = vrot.slane %v452, 2
    %v532 = vrot.slane %v454, 2
    %v533 = vsel %vm469, %v531, %v532
    %v534 = vrot.slane %v455, 2
    %v535 = vsel %vm469, %v529, %v534
    %v536 = vrot.slane %v456, 2
    %v537 = vsel %vm469, %v532, %v536
    %v546 = vadd.f32 %v233, %v520
    %v547 = vadd.f32 %v234, %v523
    %v548 = vadd.f32 %v235, %v525
    %v549 = vadd.f32 %v236, %v527
    %v550 = vadd.f32 %v237, %v530
    %v551 = vadd.f32 %v238, %v533
    %v552 = vadd.f32 %v239, %v535
    %v553 = vadd.f32 %v240, %v537
    %v554 = vmul.f32 %v433, %v423
    %v555 = vmul.f32 %v434, %v424
    %v556 = vmul.f32 %v435, %v50
    %v557 = vmul.f32 %v436, %v51
    %v558 = vmul.f32 %v437, %v110
    %v559 = vmul.f32 %v438, %v111
    %v560 = vmul.f32 %v439, %v425
    %v561 = vmul.f32 %v440, %v426
    %v562 = vmul.f32 %v441, %v54
    %v563 = vmul.f32 %v442, %v55
    %v564 = vmul.f32 %v443, %v112
    %v565 = vmul.f32 %v444, %v113
    %v578 = vrot.slane %v554, 2
    %v579 = vrot.slane %v556, 2
    %v580 = vsel %vm469, %v578, %v579
    %v581 = vrot.slane %v555, 2
    %v582 = vrot.slane %v557, 2
    %v583 = vsel %vm469, %v581, %v582
    %v584 = vrot.slane %v558, 2
    %v585 = vsel %vm469, %v579, %v584
    %v586 = vrot.slane %v559, 2
    %v587 = vsel %vm469, %v582, %v586
    %v588 = vrot.slane %v560, 2
    %v589 = vrot.slane %v562, 2
    %v590 = vsel %vm469, %v588, %v589
    %v591 = vrot.slane %v561, 2
    %v592 = vrot.slane %v563, 2
    %v593 = vsel %vm469, %v591, %v592
    %v594 = vrot.slane %v564, 2
    %v595 = vsel %vm469, %v589, %v594
    %v596 = vrot.slane %v565, 2
    %v597 = vsel %vm469, %v592, %v596
    %v606 = vadd.f32 %v293, %v580
    %v607 = vadd.f32 %v294, %v583
    %v608 = vadd.f32 %v295, %v585
    %v609 = vadd.f32 %v296, %v587
    %v610 = vadd.f32 %v297, %v590
    %v611 = vadd.f32 %v298, %v593
    %v612 = vadd.f32 %v299, %v595
    %v613 = vadd.f32 %v300, %v597
    %v614 = vmul.f32 %v445, %v429
    %v615 = vmul.f32 %v446, %v430
    %v616 = vmul.f32 %v447, %v62
    %v617 = vmul.f32 %v448, %v63
    %v618 = vmul.f32 %v449, %v116
    %v619 = vmul.f32 %v450, %v117
    %v620 = vmul.f32 %v451, %v431
    %v621 = vmul.f32 %v452, %v432
    %v622 = vmul.f32 %v453, %v66
    %v623 = vmul.f32 %v454, %v67
    %v624 = vmul.f32 %v455, %v118
    %v625 = vmul.f32 %v456, %v119
    %v638 = vrot.slane %v614, 2
    %v639 = vrot.slane %v616, 2
    %v640 = vsel %vm469, %v638, %v639
    %v641 = vrot.slane %v615, 2
    %v642 = vrot.slane %v617, 2
    %v643 = vsel %vm469, %v641, %v642
    %v644 = vrot.slane %v618, 2
    %v645 = vsel %vm469, %v639, %v644
    %v646 = vrot.slane %v619, 2
    %v647 = vsel %vm469, %v642, %v646
    %v648 = vrot.slane %v620, 2
    %v649 = vrot.slane %v622, 2
    %v650 = vsel %vm469, %v648, %v649
    %v651 = vrot.slane %v621, 2
    %v652 = vrot.slane %v623, 2
    %v653 = vsel %vm469, %v651, %v652
    %v654 = vrot.slane %v624, 2
    %v655 = vsel %vm469, %v649, %v654
    %v656 = vrot.slane %v625, 2
    %v657 = vsel %vm469, %v652, %v656
    %v666 = vadd.f32 %v353, %v640
    %v667 = vadd.f32 %v354, %v643
    %v668 = vadd.f32 %v355, %v645
    %v669 = vadd.f32 %v356, %v647
    %v670 = vadd.f32 %v357, %v650
    %v671 = vadd.f32 %v358, %v653
    %v672 = vadd.f32 %v359, %v655
    %v673 = vadd.f32 %v360, %v657
    %v674 = vmul.f32 %v433, %v429
    %v675 = vmul.f32 %v434, %v430
    %v676 = vmul.f32 %v435, %v62
    %v677 = vmul.f32 %v436, %v63
    %v678 = vmul.f32 %v437, %v116
    %v679 = vmul.f32 %v438, %v117
    %v680 = vmul.f32 %v439, %v431
    %v681 = vmul.f32 %v440, %v432
    %v682 = vmul.f32 %v441, %v66
    %v683 = vmul.f32 %v442, %v67
    %v684 = vmul.f32 %v443, %v118
    %v685 = vmul.f32 %v444, %v119
    %v698 = vrot.slane %v674, 2
    %v699 = vrot.slane %v676, 2
    %v700 = vsel %vm469, %v698, %v699
    %v701 = vrot.slane %v675, 2
    %v702 = vrot.slane %v677, 2
    %v703 = vsel %vm469, %v701, %v702
    %v704 = vrot.slane %v678, 2
    %v705 = vsel %vm469, %v699, %v704
    %v706 = vrot.slane %v679, 2
    %v707 = vsel %vm469, %v702, %v706
    %v708 = vrot.slane %v680, 2
    %v709 = vrot.slane %v682, 2
    %v710 = vsel %vm469, %v708, %v709
    %v711 = vrot.slane %v681, 2
    %v712 = vrot.slane %v683, 2
    %v713 = vsel %vm469, %v711, %v712
    %v714 = vrot.slane %v684, 2
    %v715 = vsel %vm469, %v709, %v714
    %v716 = vrot.slane %v685, 2
    %v717 = vsel %vm469, %v712, %v716
    %v726 = vadd.f32 %v413, %v700
    %v727 = vadd.f32 %v414, %v703
    %v728 = vadd.f32 %v415, %v705
    %v729 = vadd.f32 %v416, %v707
    %v730 = vadd.f32 %v417, %v710
    %v731 = vadd.f32 %v418, %v713
    %v732 = vadd.f32 %v419, %v715
    %v733 = vadd.f32 %v420, %v717
    %v734 = vld [vmem:[%s2 + $0x10] sm:$0x33]
    %v735 = vld [vmem:[%s2 + $0x30] sm:$0x33]
    %v736 = vunpack.c.l.bf16 %v734
    %v737 = vunpack.c.h.bf16 %v734
    %v738 = vunpack.c.l.bf16 %v735
    %v739 = vunpack.c.h.bf16 %v735
    %v740 = vld [vmem:[%s3 + $0x10] sm:$0x33]
    %v741 = vld [vmem:[%s3 + $0x30] sm:$0x33]
    %v742 = vunpack.c.l.bf16 %v740
    %v743 = vunpack.c.h.bf16 %v740
    %v744 = vunpack.c.l.bf16 %v741
    %v745 = vunpack.c.h.bf16 %v741
    %v746 = vmul.f32 %v423, 0.10936069
    %v747 = vmul.f32 %v424, 0.10936069
    %v748 = vmul.f32 %v50, 0.10936069
    %v749 = vmul.f32 %v51, 0.10936069
    %v750 = vmul.f32 %v736, 0.10936069
    %v751 = vmul.f32 %v737, 0.10936069
    %v752 = vmul.f32 %v425, 0.10936069
    %v753 = vmul.f32 %v426, 0.10936069
    %v754 = vmul.f32 %v54, 0.10936069
    %v755 = vmul.f32 %v55, 0.10936069
    %v756 = vmul.f32 %v738, 0.10936069
    %v757 = vmul.f32 %v739, 0.10936069
    %v758 = vmul.f32 %v429, 0.10936069
    %v759 = vmul.f32 %v430, 0.10936069
    %v760 = vmul.f32 %v62, 0.10936069
    %v761 = vmul.f32 %v63, 0.10936069
    %v762 = vmul.f32 %v742, 0.10936069
    %v763 = vmul.f32 %v743, 0.10936069
    %v764 = vmul.f32 %v431, 0.10936069
    %v765 = vmul.f32 %v432, 0.10936069
    %v766 = vmul.f32 %v66, 0.10936069
    %v767 = vmul.f32 %v67, 0.10936069
    %v768 = vmul.f32 %v744, 0.10936069
    %v769 = vmul.f32 %v745, 0.10936069
    %vm782 = vcmask 1044480
    %v783 = vrot.slane %v746, 3
    %v784 = vrot.slane %v748, 3
    %v785 = vsel %vm782, %v783, %v784
    %v786 = vrot.slane %v747, 3
    %v787 = vrot.slane %v749, 3
    %v788 = vsel %vm782, %v786, %v787
    %v789 = vrot.slane %v750, 3
    %v790 = vsel %vm782, %v784, %v789
    %v791 = vrot.slane %v751, 3
    %v792 = vsel %vm782, %v787, %v791
    %v793 = vrot.slane %v752, 3
    %v794 = vrot.slane %v754, 3
    %v795 = vsel %vm782, %v793, %v794
    %v796 = vrot.slane %v753, 3
    %v797 = vrot.slane %v755, 3
    %v798 = vsel %vm782, %v796, %v797
    %v799 = vrot.slane %v756, 3
    %v800 = vsel %vm782, %v794, %v799
    %v801 = vrot.slane %v757, 3
    %v802 = vsel %vm782, %v797, %v801
    %v811 = vadd.f32 %v498, %v785
    %v812 = vadd.f32 %v499, %v788
    %v813 = vadd.f32 %v500, %v790
    %v814 = vadd.f32 %v501, %v792
    %v815 = vadd.f32 %v502, %v795
    %v816 = vadd.f32 %v503, %v798
    %v817 = vadd.f32 %v504, %v800
    %v818 = vadd.f32 %v505, %v802
    %v831 = vrot.slane %v758, 3
    %v832 = vrot.slane %v760, 3
    %v833 = vsel %vm782, %v831, %v832
    %v834 = vrot.slane %v759, 3
    %v835 = vrot.slane %v761, 3
    %v836 = vsel %vm782, %v834, %v835
    %v837 = vrot.slane %v762, 3
    %v838 = vsel %vm782, %v832, %v837
    %v839 = vrot.slane %v763, 3
    %v840 = vsel %vm782, %v835, %v839
    %v841 = vrot.slane %v764, 3
    %v842 = vrot.slane %v766, 3
    %v843 = vsel %vm782, %v841, %v842
    %v844 = vrot.slane %v765, 3
    %v845 = vrot.slane %v767, 3
    %v846 = vsel %vm782, %v844, %v845
    %v847 = vrot.slane %v768, 3
    %v848 = vsel %vm782, %v842, %v847
    %v849 = vrot.slane %v769, 3
    %v850 = vsel %vm782, %v845, %v849
    %v859 = vadd.f32 %v546, %v833
    %v860 = vadd.f32 %v547, %v836
    %v861 = vadd.f32 %v548, %v838
    %v862 = vadd.f32 %v549, %v840
    %v863 = vadd.f32 %v550, %v843
    %v864 = vadd.f32 %v551, %v846
    %v865 = vadd.f32 %v552, %v848
    %v866 = vadd.f32 %v553, %v850
    %v867 = vmul.f32 %v746, %v423
    %v868 = vmul.f32 %v747, %v424
    %v869 = vmul.f32 %v748, %v50
    %v870 = vmul.f32 %v749, %v51
    %v871 = vmul.f32 %v750, %v736
    %v872 = vmul.f32 %v751, %v737
    %v873 = vmul.f32 %v752, %v425
    %v874 = vmul.f32 %v753, %v426
    %v875 = vmul.f32 %v754, %v54
    %v876 = vmul.f32 %v755, %v55
    %v877 = vmul.f32 %v756, %v738
    %v878 = vmul.f32 %v757, %v739
    %v891 = vrot.slane %v867, 3
    %v892 = vrot.slane %v869, 3
    %v893 = vsel %vm782, %v891, %v892
    %v894 = vrot.slane %v868, 3
    %v895 = vrot.slane %v870, 3
    %v896 = vsel %vm782, %v894, %v895
    %v897 = vrot.slane %v871, 3
    %v898 = vsel %vm782, %v892, %v897
    %v899 = vrot.slane %v872, 3
    %v900 = vsel %vm782, %v895, %v899
    %v901 = vrot.slane %v873, 3
    %v902 = vrot.slane %v875, 3
    %v903 = vsel %vm782, %v901, %v902
    %v904 = vrot.slane %v874, 3
    %v905 = vrot.slane %v876, 3
    %v906 = vsel %vm782, %v904, %v905
    %v907 = vrot.slane %v877, 3
    %v908 = vsel %vm782, %v902, %v907
    %v909 = vrot.slane %v878, 3
    %v910 = vsel %vm782, %v905, %v909
    %v919 = vadd.f32 %v606, %v893
    %v920 = vadd.f32 %v607, %v896
    %v921 = vadd.f32 %v608, %v898
    %v922 = vadd.f32 %v609, %v900
    %v923 = vadd.f32 %v610, %v903
    %v924 = vadd.f32 %v611, %v906
    %v925 = vadd.f32 %v612, %v908
    %v926 = vadd.f32 %v613, %v910
    %v927 = vmul.f32 %v758, %v429
    %v928 = vmul.f32 %v759, %v430
    %v929 = vmul.f32 %v760, %v62
    %v930 = vmul.f32 %v761, %v63
    %v931 = vmul.f32 %v762, %v742
    %v932 = vmul.f32 %v763, %v743
    %v933 = vmul.f32 %v764, %v431
    %v934 = vmul.f32 %v765, %v432
    %v935 = vmul.f32 %v766, %v66
    %v936 = vmul.f32 %v767, %v67
    %v937 = vmul.f32 %v768, %v744
    %v938 = vmul.f32 %v769, %v745
    %v951 = vrot.slane %v927, 3
    %v952 = vrot.slane %v929, 3
    %v953 = vsel %vm782, %v951, %v952
    %v954 = vrot.slane %v928, 3
    %v955 = vrot.slane %v930, 3
    %v956 = vsel %vm782, %v954, %v955
    %v957 = vrot.slane %v931, 3
    %v958 = vsel %vm782, %v952, %v957
    %v959 = vrot.slane %v932, 3
    %v960 = vsel %vm782, %v955, %v959
    %v961 = vrot.slane %v933, 3
    %v962 = vrot.slane %v935, 3
    %v963 = vsel %vm782, %v961, %v962
    %v964 = vrot.slane %v934, 3
    %v965 = vrot.slane %v936, 3
    %v966 = vsel %vm782, %v964, %v965
    %v967 = vrot.slane %v937, 3
    %v968 = vsel %vm782, %v962, %v967
    %v969 = vrot.slane %v938, 3
    %v970 = vsel %vm782, %v965, %v969
    %v979 = vadd.f32 %v666, %v953
    %v980 = vadd.f32 %v667, %v956
    %v981 = vadd.f32 %v668, %v958
    %v982 = vadd.f32 %v669, %v960
    %v983 = vadd.f32 %v670, %v963
    %v984 = vadd.f32 %v671, %v966
    %v985 = vadd.f32 %v672, %v968
    %v986 = vadd.f32 %v673, %v970
    %v987 = vmul.f32 %v746, %v429
    %v988 = vmul.f32 %v747, %v430
    %v989 = vmul.f32 %v748, %v62
    %v990 = vmul.f32 %v749, %v63
    %v991 = vmul.f32 %v750, %v742
    %v992 = vmul.f32 %v751, %v743
    %v993 = vmul.f32 %v752, %v431
    %v994 = vmul.f32 %v753, %v432
    %v995 = vmul.f32 %v754, %v66
    %v996 = vmul.f32 %v755, %v67
    %v997 = vmul.f32 %v756, %v744
    %v998 = vmul.f32 %v757, %v745
    %v1011 = vrot.slane %v987, 3
    %v1012 = vrot.slane %v989, 3
    %v1013 = vsel %vm782, %v1011, %v1012
    %v1014 = vrot.slane %v988, 3
    %v1015 = vrot.slane %v990, 3
    %v1016 = vsel %vm782, %v1014, %v1015
    %v1017 = vrot.slane %v991, 3
    %v1018 = vsel %vm782, %v1012, %v1017
    %v1019 = vrot.slane %v992, 3
    %v1020 = vsel %vm782, %v1015, %v1019
    %v1021 = vrot.slane %v993, 3
    %v1022 = vrot.slane %v995, 3
    %v1023 = vsel %vm782, %v1021, %v1022
    %v1024 = vrot.slane %v994, 3
    %v1025 = vrot.slane %v996, 3
    %v1026 = vsel %vm782, %v1024, %v1025
    %v1027 = vrot.slane %v997, 3
    %v1028 = vsel %vm782, %v1022, %v1027
    %v1029 = vrot.slane %v998, 3
    %v1030 = vsel %vm782, %v1025, %v1029
    %v1039 = vadd.f32 %v726, %v1013
    %v1040 = vadd.f32 %v727, %v1016
    %v1041 = vadd.f32 %v728, %v1018
    %v1042 = vadd.f32 %v729, %v1020
    %v1043 = vadd.f32 %v730, %v1023
    %v1044 = vadd.f32 %v731, %v1026
    %v1045 = vadd.f32 %v732, %v1028
    %v1046 = vadd.f32 %v733, %v1030
    %v1047 = vld [vmem:[%s2] sm:$0xcc]
    %v1048 = vld [vmem:[%s2 + $0x20] sm:$0xcc]
    %v1049 = vunpack.c.l.bf16 %v1047
    %v1050 = vunpack.c.h.bf16 %v1047
    %v1051 = vunpack.c.l.bf16 %v1048
    %v1052 = vunpack.c.h.bf16 %v1048
    %v1053 = vld [vmem:[%s3] sm:$0xcc]
    %v1054 = vld [vmem:[%s3 + $0x20] sm:$0xcc]
    %v1055 = vunpack.c.l.bf16 %v1053
    %v1056 = vunpack.c.h.bf16 %v1053
    %v1057 = vunpack.c.l.bf16 %v1054
    %v1058 = vunpack.c.h.bf16 %v1054
    %v1059 = vmul.f32 %v1049, 0.21300554
    %v1060 = vmul.f32 %v1050, 0.21300554
    %v1061 = vmul.f32 %v50, 0.21300554
    %v1062 = vmul.f32 %v51, 0.21300554
    %v1063 = vmul.f32 %v736, 0.21300554
    %v1064 = vmul.f32 %v737, 0.21300554
    %v1065 = vmul.f32 %v1051, 0.21300554
    %v1066 = vmul.f32 %v1052, 0.21300554
    %v1067 = vmul.f32 %v54, 0.21300554
    %v1068 = vmul.f32 %v55, 0.21300554
    %v1069 = vmul.f32 %v738, 0.21300554
    %v1070 = vmul.f32 %v739, 0.21300554
    %v1071 = vmul.f32 %v1055, 0.21300554
    %v1072 = vmul.f32 %v1056, 0.21300554
    %v1073 = vmul.f32 %v62, 0.21300554
    %v1074 = vmul.f32 %v63, 0.21300554
    %v1075 = vmul.f32 %v742, 0.21300554
    %v1076 = vmul.f32 %v743, 0.21300554
    %v1077 = vmul.f32 %v1057, 0.21300554
    %v1078 = vmul.f32 %v1058, 0.21300554
    %v1079 = vmul.f32 %v66, 0.21300554
    %v1080 = vmul.f32 %v67, 0.21300554
    %v1081 = vmul.f32 %v744, 0.21300554
    %v1082 = vmul.f32 %v745, 0.21300554
    %vm1095 = vcmask 1043456
    %v1096 = vrot.slane %v1059, 4
    %v1097 = vrot.slane %v1061, 4
    %v1098 = vsel %vm1095, %v1096, %v1097
    %v1099 = vrot.slane %v1060, 4
    %v1100 = vrot.slane %v1062, 4
    %v1101 = vsel %vm1095, %v1099, %v1100
    %v1102 = vrot.slane %v1063, 4
    %v1103 = vsel %vm1095, %v1097, %v1102
    %v1104 = vrot.slane %v1064, 4
    %v1105 = vsel %vm1095, %v1100, %v1104
    %v1106 = vrot.slane %v1065, 4
    %v1107 = vrot.slane %v1067, 4
    %v1108 = vsel %vm1095, %v1106, %v1107
    %v1109 = vrot.slane %v1066, 4
    %v1110 = vrot.slane %v1068, 4
    %v1111 = vsel %vm1095, %v1109, %v1110
    %v1112 = vrot.slane %v1069, 4
    %v1113 = vsel %vm1095, %v1107, %v1112
    %v1114 = vrot.slane %v1070, 4
    %v1115 = vsel %vm1095, %v1110, %v1114
    %v1124 = vadd.f32 %v811, %v1098
    %v1125 = vadd.f32 %v812, %v1101
    %v1126 = vadd.f32 %v813, %v1103
    %v1127 = vadd.f32 %v814, %v1105
    %v1128 = vadd.f32 %v815, %v1108
    %v1129 = vadd.f32 %v816, %v1111
    %v1130 = vadd.f32 %v817, %v1113
    %v1131 = vadd.f32 %v818, %v1115
    %v1144 = vrot.slane %v1071, 4
    %v1145 = vrot.slane %v1073, 4
    %v1146 = vsel %vm1095, %v1144, %v1145
    %v1147 = vrot.slane %v1072, 4
    %v1148 = vrot.slane %v1074, 4
    %v1149 = vsel %vm1095, %v1147, %v1148
    %v1150 = vrot.slane %v1075, 4
    %v1151 = vsel %vm1095, %v1145, %v1150
    %v1152 = vrot.slane %v1076, 4
    %v1153 = vsel %vm1095, %v1148, %v1152
    %v1154 = vrot.slane %v1077, 4
    %v1155 = vrot.slane %v1079, 4
    %v1156 = vsel %vm1095, %v1154, %v1155
    %v1157 = vrot.slane %v1078, 4
    %v1158 = vrot.slane %v1080, 4
    %v1159 = vsel %vm1095, %v1157, %v1158
    %v1160 = vrot.slane %v1081, 4
    %v1161 = vsel %vm1095, %v1155, %v1160
    %v1162 = vrot.slane %v1082, 4
    %v1163 = vsel %vm1095, %v1158, %v1162
    %v1172 = vadd.f32 %v859, %v1146
    %v1173 = vadd.f32 %v860, %v1149
    %v1174 = vadd.f32 %v861, %v1151
    %v1175 = vadd.f32 %v862, %v1153
    %v1176 = vadd.f32 %v863, %v1156
    %v1177 = vadd.f32 %v864, %v1159
    %v1178 = vadd.f32 %v865, %v1161
    %v1179 = vadd.f32 %v866, %v1163
    %v1180 = vmul.f32 %v1059, %v1049
    %v1181 = vmul.f32 %v1060, %v1050
    %v1182 = vmul.f32 %v1061, %v50
    %v1183 = vmul.f32 %v1062, %v51
    %v1184 = vmul.f32 %v1063, %v736
    %v1185 = vmul.f32 %v1064, %v737
    %v1186 = vmul.f32 %v1065, %v1051
    %v1187 = vmul.f32 %v1066, %v1052
    %v1188 = vmul.f32 %v1067, %v54
    %v1189 = vmul.f32 %v1068, %v55
    %v1190 = vmul.f32 %v1069, %v738
    %v1191 = vmul.f32 %v1070, %v739
    %v1204 = vrot.slane %v1180, 4
    %v1205 = vrot.slane %v1182, 4
    %v1206 = vsel %vm1095, %v1204, %v1205
    %v1207 = vrot.slane %v1181, 4
    %v1208 = vrot.slane %v1183, 4
    %v1209 = vsel %vm1095, %v1207, %v1208
    %v1210 = vrot.slane %v1184, 4
    %v1211 = vsel %vm1095, %v1205, %v1210
    %v1212 = vrot.slane %v1185, 4
    %v1213 = vsel %vm1095, %v1208, %v1212
    %v1214 = vrot.slane %v1186, 4
    %v1215 = vrot.slane %v1188, 4
    %v1216 = vsel %vm1095, %v1214, %v1215
    %v1217 = vrot.slane %v1187, 4
    %v1218 = vrot.slane %v1189, 4
    %v1219 = vsel %vm1095, %v1217, %v1218
    %v1220 = vrot.slane %v1190, 4
    %v1221 = vsel %vm1095, %v1215, %v1220
    %v1222 = vrot.slane %v1191, 4
    %v1223 = vsel %vm1095, %v1218, %v1222
    %v1232 = vadd.f32 %v919, %v1206
    %v1233 = vadd.f32 %v920, %v1209
    %v1234 = vadd.f32 %v921, %v1211
    %v1235 = vadd.f32 %v922, %v1213
    %v1236 = vadd.f32 %v923, %v1216
    %v1237 = vadd.f32 %v924, %v1219
    %v1238 = vadd.f32 %v925, %v1221
    %v1239 = vadd.f32 %v926, %v1223
    %v1240 = vmul.f32 %v1071, %v1055
    %v1241 = vmul.f32 %v1072, %v1056
    %v1242 = vmul.f32 %v1073, %v62
    %v1243 = vmul.f32 %v1074, %v63
    %v1244 = vmul.f32 %v1075, %v742
    %v1245 = vmul.f32 %v1076, %v743
    %v1246 = vmul.f32 %v1077, %v1057
    %v1247 = vmul.f32 %v1078, %v1058
    %v1248 = vmul.f32 %v1079, %v66
    %v1249 = vmul.f32 %v1080, %v67
    %v1250 = vmul.f32 %v1081, %v744
    %v1251 = vmul.f32 %v1082, %v745
    %v1264 = vrot.slane %v1240, 4
    %v1265 = vrot.slane %v1242, 4
    %v1266 = vsel %vm1095, %v1264, %v1265
    %v1267 = vrot.slane %v1241, 4
    %v1268 = vrot.slane %v1243, 4
    %v1269 = vsel %vm1095, %v1267, %v1268
    %v1270 = vrot.slane %v1244, 4
    %v1271 = vsel %vm1095, %v1265, %v1270
    %v1272 = vrot.slane %v1245, 4
    %v1273 = vsel %vm1095, %v1268, %v1272
    %v1274 = vrot.slane %v1246, 4
    %v1275 = vrot.slane %v1248, 4
    %v1276 = vsel %vm1095, %v1274, %v1275
    %v1277 = vrot.slane %v1247, 4
    %v1278 = vrot.slane %v1249, 4
    %v1279 = vsel %vm1095, %v1277, %v1278
    %v1280 = vrot.slane %v1250, 4
    %v1281 = vsel %vm1095, %v1275, %v1280
    %v1282 = vrot.slane %v1251, 4
    %v1283 = vsel %vm1095, %v1278, %v1282
    %v1292 = vadd.f32 %v979, %v1266
    %v1293 = vadd.f32 %v980, %v1269
    %v1294 = vadd.f32 %v981, %v1271
    %v1295 = vadd.f32 %v982, %v1273
    %v1296 = vadd.f32 %v983, %v1276
    %v1297 = vadd.f32 %v984, %v1279
    %v1298 = vadd.f32 %v985, %v1281
    %v1299 = vadd.f32 %v986, %v1283
    %v1300 = vmul.f32 %v1059, %v1055
    %v1301 = vmul.f32 %v1060, %v1056
    %v1302 = vmul.f32 %v1061, %v62
    %v1303 = vmul.f32 %v1062, %v63
    %v1304 = vmul.f32 %v1063, %v742
    %v1305 = vmul.f32 %v1064, %v743
    %v1306 = vmul.f32 %v1065, %v1057
    %v1307 = vmul.f32 %v1066, %v1058
    %v1308 = vmul.f32 %v1067, %v66
    %v1309 = vmul.f32 %v1068, %v67
    %v1310 = vmul.f32 %v1069, %v744
    %v1311 = vmul.f32 %v1070, %v745
    %v1324 = vrot.slane %v1300, 4
    %v1325 = vrot.slane %v1302, 4
    %v1326 = vsel %vm1095, %v1324, %v1325
    %v1327 = vrot.slane %v1301, 4
    %v1328 = vrot.slane %v1303, 4
    %v1329 = vsel %vm1095, %v1327, %v1328
    %v1330 = vrot.slane %v1304, 4
    %v1331 = vsel %vm1095, %v1325, %v1330
    %v1332 = vrot.slane %v1305, 4
    %v1333 = vsel %vm1095, %v1328, %v1332
    %v1334 = vrot.slane %v1306, 4
    %v1335 = vrot.slane %v1308, 4
    %v1336 = vsel %vm1095, %v1334, %v1335
    %v1337 = vrot.slane %v1307, 4
    %v1338 = vrot.slane %v1309, 4
    %v1339 = vsel %vm1095, %v1337, %v1338
    %v1340 = vrot.slane %v1310, 4
    %v1341 = vsel %vm1095, %v1335, %v1340
    %v1342 = vrot.slane %v1311, 4
    %v1343 = vsel %vm1095, %v1338, %v1342
    %v1352 = vadd.f32 %v1039, %v1326
    %v1353 = vadd.f32 %v1040, %v1329
    %v1354 = vadd.f32 %v1041, %v1331
    %v1355 = vadd.f32 %v1042, %v1333
    %v1356 = vadd.f32 %v1043, %v1336
    %v1357 = vadd.f32 %v1044, %v1339
    %v1358 = vadd.f32 %v1045, %v1341
    %v1359 = vadd.f32 %v1046, %v1343
    %v1360 = vld [vmem:[%s2 + $0x10] sm:$0x77]
    %v1361 = vld [vmem:[%s2 + $0x30] sm:$0x77]
    %v1362 = vunpack.c.l.bf16 %v1360
    %v1363 = vunpack.c.h.bf16 %v1360
    %v1364 = vunpack.c.l.bf16 %v1361
    %v1365 = vunpack.c.h.bf16 %v1361
    %v1366 = vld [vmem:[%s3 + $0x10] sm:$0x77]
    %v1367 = vld [vmem:[%s3 + $0x30] sm:$0x77]
    %v1368 = vunpack.c.l.bf16 %v1366
    %v1369 = vunpack.c.h.bf16 %v1366
    %v1370 = vunpack.c.l.bf16 %v1367
    %v1371 = vunpack.c.h.bf16 %v1367
    %v1372 = vmul.f32 %v1049, 0.26601171
    %v1373 = vmul.f32 %v1050, 0.26601171
    %v1374 = vmul.f32 %v50, 0.26601171
    %v1375 = vmul.f32 %v51, 0.26601171
    %v1376 = vmul.f32 %v1362, 0.26601171
    %v1377 = vmul.f32 %v1363, 0.26601171
    %v1378 = vmul.f32 %v1051, 0.26601171
    %v1379 = vmul.f32 %v1052, 0.26601171
    %v1380 = vmul.f32 %v54, 0.26601171
    %v1381 = vmul.f32 %v55, 0.26601171
    %v1382 = vmul.f32 %v1364, 0.26601171
    %v1383 = vmul.f32 %v1365, 0.26601171
    %v1384 = vmul.f32 %v1055, 0.26601171
    %v1385 = vmul.f32 %v1056, 0.26601171
    %v1386 = vmul.f32 %v62, 0.26601171
    %v1387 = vmul.f32 %v63, 0.26601171
    %v1388 = vmul.f32 %v1368, 0.26601171
    %v1389 = vmul.f32 %v1369, 0.26601171
    %v1390 = vmul.f32 %v1057, 0.26601171
    %v1391 = vmul.f32 %v1058, 0.26601171
    %v1392 = vmul.f32 %v66, 0.26601171
    %v1393 = vmul.f32 %v67, 0.26601171
    %v1394 = vmul.f32 %v1370, 0.26601171
    %v1395 = vmul.f32 %v1371, 0.26601171
    %vm1408 = vcmask 1042432
    %v1409 = vrot.slane %v1372, 5
    %v1410 = vrot.slane %v1374, 5
    %v1411 = vsel %vm1408, %v1409, %v1410
    %v1412 = vrot.slane %v1373, 5
    %v1413 = vrot.slane %v1375, 5
    %v1414 = vsel %vm1408, %v1412, %v1413
    %v1415 = vrot.slane %v1376, 5
    %v1416 = vsel %vm1408, %v1410, %v1415
    %v1417 = vrot.slane %v1377, 5
    %v1418 = vsel %vm1408, %v1413, %v1417
    %v1419 = vrot.slane %v1378, 5
    %v1420 = vrot.slane %v1380, 5
    %v1421 = vsel %vm1408, %v1419, %v1420
    %v1422 = vrot.slane %v1379, 5
    %v1423 = vrot.slane %v1381, 5
    %v1424 = vsel %vm1408, %v1422, %v1423
    %v1425 = vrot.slane %v1382, 5
    %v1426 = vsel %vm1408, %v1420, %v1425
    %v1427 = vrot.slane %v1383, 5
    %v1428 = vsel %vm1408, %v1423, %v1427
    %v1437 = vadd.f32 %v1124, %v1411
    %v1438 = vadd.f32 %v1125, %v1414
    %v1439 = vadd.f32 %v1126, %v1416
    %v1440 = vadd.f32 %v1127, %v1418
    %v1441 = vadd.f32 %v1128, %v1421
    %v1442 = vadd.f32 %v1129, %v1424
    %v1443 = vadd.f32 %v1130, %v1426
    %v1444 = vadd.f32 %v1131, %v1428
    %v1457 = vrot.slane %v1384, 5
    %v1458 = vrot.slane %v1386, 5
    %v1459 = vsel %vm1408, %v1457, %v1458
    %v1460 = vrot.slane %v1385, 5
    %v1461 = vrot.slane %v1387, 5
    %v1462 = vsel %vm1408, %v1460, %v1461
    %v1463 = vrot.slane %v1388, 5
    %v1464 = vsel %vm1408, %v1458, %v1463
    %v1465 = vrot.slane %v1389, 5
    %v1466 = vsel %vm1408, %v1461, %v1465
    %v1467 = vrot.slane %v1390, 5
    %v1468 = vrot.slane %v1392, 5
    %v1469 = vsel %vm1408, %v1467, %v1468
    %v1470 = vrot.slane %v1391, 5
    %v1471 = vrot.slane %v1393, 5
    %v1472 = vsel %vm1408, %v1470, %v1471
    %v1473 = vrot.slane %v1394, 5
    %v1474 = vsel %vm1408, %v1468, %v1473
    %v1475 = vrot.slane %v1395, 5
    %v1476 = vsel %vm1408, %v1471, %v1475
    %v1485 = vadd.f32 %v1172, %v1459
    %v1486 = vadd.f32 %v1173, %v1462
    %v1487 = vadd.f32 %v1174, %v1464
    %v1488 = vadd.f32 %v1175, %v1466
    %v1489 = vadd.f32 %v1176, %v1469
    %v1490 = vadd.f32 %v1177, %v1472
    %v1491 = vadd.f32 %v1178, %v1474
    %v1492 = vadd.f32 %v1179, %v1476
    %v1493 = vmul.f32 %v1372, %v1049
    %v1494 = vmul.f32 %v1373, %v1050
    %v1495 = vmul.f32 %v1374, %v50
    %v1496 = vmul.f32 %v1375, %v51
    %v1497 = vmul.f32 %v1376, %v1362
    %v1498 = vmul.f32 %v1377, %v1363
    %v1499 = vmul.f32 %v1378, %v1051
    %v1500 = vmul.f32 %v1379, %v1052
    %v1501 = vmul.f32 %v1380, %v54
    %v1502 = vmul.f32 %v1381, %v55
    %v1503 = vmul.f32 %v1382, %v1364
    %v1504 = vmul.f32 %v1383, %v1365
    %v1517 = vrot.slane %v1493, 5
    %v1518 = vrot.slane %v1495, 5
    %v1519 = vsel %vm1408, %v1517, %v1518
    %v1520 = vrot.slane %v1494, 5
    %v1521 = vrot.slane %v1496, 5
    %v1522 = vsel %vm1408, %v1520, %v1521
    %v1523 = vrot.slane %v1497, 5
    %v1524 = vsel %vm1408, %v1518, %v1523
    %v1525 = vrot.slane %v1498, 5
    %v1526 = vsel %vm1408, %v1521, %v1525
    %v1527 = vrot.slane %v1499, 5
    %v1528 = vrot.slane %v1501, 5
    %v1529 = vsel %vm1408, %v1527, %v1528
    %v1530 = vrot.slane %v1500, 5
    %v1531 = vrot.slane %v1502, 5
    %v1532 = vsel %vm1408, %v1530, %v1531
    %v1533 = vrot.slane %v1503, 5
    %v1534 = vsel %vm1408, %v1528, %v1533
    %v1535 = vrot.slane %v1504, 5
    %v1536 = vsel %vm1408, %v1531, %v1535
    %v1545 = vadd.f32 %v1232, %v1519
    %v1546 = vadd.f32 %v1233, %v1522
    %v1547 = vadd.f32 %v1234, %v1524
    %v1548 = vadd.f32 %v1235, %v1526
    %v1549 = vadd.f32 %v1236, %v1529
    %v1550 = vadd.f32 %v1237, %v1532
    %v1551 = vadd.f32 %v1238, %v1534
    %v1552 = vadd.f32 %v1239, %v1536
    %v1553 = vmul.f32 %v1384, %v1055
    %v1554 = vmul.f32 %v1385, %v1056
    %v1555 = vmul.f32 %v1386, %v62
    %v1556 = vmul.f32 %v1387, %v63
    %v1557 = vmul.f32 %v1388, %v1368
    %v1558 = vmul.f32 %v1389, %v1369
    %v1559 = vmul.f32 %v1390, %v1057
    %v1560 = vmul.f32 %v1391, %v1058
    %v1561 = vmul.f32 %v1392, %v66
    %v1562 = vmul.f32 %v1393, %v67
    %v1563 = vmul.f32 %v1394, %v1370
    %v1564 = vmul.f32 %v1395, %v1371
    %v1577 = vrot.slane %v1553, 5
    %v1578 = vrot.slane %v1555, 5
    %v1579 = vsel %vm1408, %v1577, %v1578
    %v1580 = vrot.slane %v1554, 5
    %v1581 = vrot.slane %v1556, 5
    %v1582 = vsel %vm1408, %v1580, %v1581
    %v1583 = vrot.slane %v1557, 5
    %v1584 = vsel %vm1408, %v1578, %v1583
    %v1585 = vrot.slane %v1558, 5
    %v1586 = vsel %vm1408, %v1581, %v1585
    %v1587 = vrot.slane %v1559, 5
    %v1588 = vrot.slane %v1561, 5
    %v1589 = vsel %vm1408, %v1587, %v1588
    %v1590 = vrot.slane %v1560, 5
    %v1591 = vrot.slane %v1562, 5
    %v1592 = vsel %vm1408, %v1590, %v1591
    %v1593 = vrot.slane %v1563, 5
    %v1594 = vsel %vm1408, %v1588, %v1593
    %v1595 = vrot.slane %v1564, 5
    %v1596 = vsel %vm1408, %v1591, %v1595
    %v1605 = vadd.f32 %v1292, %v1579
    %v1606 = vadd.f32 %v1293, %v1582
    %v1607 = vadd.f32 %v1294, %v1584
    %v1608 = vadd.f32 %v1295, %v1586
    %v1609 = vadd.f32 %v1296, %v1589
    %v1610 = vadd.f32 %v1297, %v1592
    %v1611 = vadd.f32 %v1298, %v1594
    %v1612 = vadd.f32 %v1299, %v1596
    %v1613 = vmul.f32 %v1372, %v1055
    %v1614 = vmul.f32 %v1373, %v1056
    %v1615 = vmul.f32 %v1374, %v62
    %v1616 = vmul.f32 %v1375, %v63
    %v1617 = vmul.f32 %v1376, %v1368
    %v1618 = vmul.f32 %v1377, %v1369
    %v1619 = vmul.f32 %v1378, %v1057
    %v1620 = vmul.f32 %v1379, %v1058
    %v1621 = vmul.f32 %v1380, %v66
    %v1622 = vmul.f32 %v1381, %v67
    %v1623 = vmul.f32 %v1382, %v1370
    %v1624 = vmul.f32 %v1383, %v1371
    %v1637 = vrot.slane %v1613, 5
    %v1638 = vrot.slane %v1615, 5
    %v1639 = vsel %vm1408, %v1637, %v1638
    %v1640 = vrot.slane %v1614, 5
    %v1641 = vrot.slane %v1616, 5
    %v1642 = vsel %vm1408, %v1640, %v1641
    %v1643 = vrot.slane %v1617, 5
    %v1644 = vsel %vm1408, %v1638, %v1643
    %v1645 = vrot.slane %v1618, 5
    %v1646 = vsel %vm1408, %v1641, %v1645
    %v1647 = vrot.slane %v1619, 5
    %v1648 = vrot.slane %v1621, 5
    %v1649 = vsel %vm1408, %v1647, %v1648
    %v1650 = vrot.slane %v1620, 5
    %v1651 = vrot.slane %v1622, 5
    %v1652 = vsel %vm1408, %v1650, %v1651
    %v1653 = vrot.slane %v1623, 5
    %v1654 = vsel %vm1408, %v1648, %v1653
    %v1655 = vrot.slane %v1624, 5
    %v1656 = vsel %vm1408, %v1651, %v1655
    %v1665 = vadd.f32 %v1352, %v1639
    %v1666 = vadd.f32 %v1353, %v1642
    %v1667 = vadd.f32 %v1354, %v1644
    %v1668 = vadd.f32 %v1355, %v1646
    %v1669 = vadd.f32 %v1356, %v1649
    %v1670 = vadd.f32 %v1357, %v1652
    %v1671 = vadd.f32 %v1358, %v1654
    %v1672 = vadd.f32 %v1359, %v1656
    %v1673 = vld [vmem:[%s2] sm:$0x88]
    %v1674 = vld [vmem:[%s2 + $0x20] sm:$0x88]
    %v1675 = vunpack.c.l.bf16 %v1673
    %v1676 = vunpack.c.h.bf16 %v1673
    %v1677 = vunpack.c.l.bf16 %v1674
    %v1678 = vunpack.c.h.bf16 %v1674
    %v1679 = vld [vmem:[%s3] sm:$0x88]
    %v1680 = vld [vmem:[%s3 + $0x20] sm:$0x88]
    %v1681 = vunpack.c.l.bf16 %v1679
    %v1682 = vunpack.c.h.bf16 %v1679
    %v1683 = vunpack.c.l.bf16 %v1680
    %v1684 = vunpack.c.h.bf16 %v1680
    %v1685 = vmul.f32 %v1675, 0.21300554
    %v1686 = vmul.f32 %v1676, 0.21300554
    %v1687 = vmul.f32 %v1362, 0.21300554
    %v1688 = vmul.f32 %v1363, 0.21300554
    %v1689 = vmul.f32 %v1677, 0.21300554
    %v1690 = vmul.f32 %v1678, 0.21300554
    %v1691 = vmul.f32 %v1364, 0.21300554
    %v1692 = vmul.f32 %v1365, 0.21300554
    %v1693 = vmul.f32 %v1681, 0.21300554
    %v1694 = vmul.f32 %v1682, 0.21300554
    %v1695 = vmul.f32 %v1368, 0.21300554
    %v1696 = vmul.f32 %v1369, 0.21300554
    %v1697 = vmul.f32 %v1683, 0.21300554
    %v1698 = vmul.f32 %v1684, 0.21300554
    %v1699 = vmul.f32 %v1370, 0.21300554
    %v1700 = vmul.f32 %v1371, 0.21300554
    %vm1709 = vcmask 1041408
    %v1710 = vrot.slane %v1685, 6
    %v1711 = vrot.slane %v1061, 6
    %v1712 = vsel %vm1709, %v1710, %v1711
    %v1713 = vrot.slane %v1686, 6
    %v1714 = vrot.slane %v1062, 6
    %v1715 = vsel %vm1709, %v1713, %v1714
    %v1716 = vrot.slane %v1687, 6
    %v1717 = vsel %vm1709, %v1711, %v1716
    %v1718 = vrot.slane %v1688, 6
    %v1719 = vsel %vm1709, %v1714, %v1718
    %v1720 = vrot.slane %v1689, 6
    %v1721 = vrot.slane %v1067, 6
    %v1722 = vsel %vm1709, %v1720, %v1721
    %v1723 = vrot.slane %v1690, 6
    %v1724 = vrot.slane %v1068, 6
    %v1725 = vsel %vm1709, %v1723, %v1724
    %v1726 = vrot.slane %v1691, 6
    %v1727 = vsel %vm1709, %v1721, %v1726
    %v1728 = vrot.slane %v1692, 6
    %v1729 = vsel %vm1709, %v1724, %v1728
    %v1738 = vadd.f32 %v1437, %v1712
    %v1739 = vadd.f32 %v1438, %v1715
    %v1740 = vadd.f32 %v1439, %v1717
    %v1741 = vadd.f32 %v1440, %v1719
    %v1742 = vadd.f32 %v1441, %v1722
    %v1743 = vadd.f32 %v1442, %v1725
    %v1744 = vadd.f32 %v1443, %v1727
    %v1745 = vadd.f32 %v1444, %v1729
    %v1754 = vrot.slane %v1693, 6
    %v1755 = vrot.slane %v1073, 6
    %v1756 = vsel %vm1709, %v1754, %v1755
    %v1757 = vrot.slane %v1694, 6
    %v1758 = vrot.slane %v1074, 6
    %v1759 = vsel %vm1709, %v1757, %v1758
    %v1760 = vrot.slane %v1695, 6
    %v1761 = vsel %vm1709, %v1755, %v1760
    %v1762 = vrot.slane %v1696, 6
    %v1763 = vsel %vm1709, %v1758, %v1762
    %v1764 = vrot.slane %v1697, 6
    %v1765 = vrot.slane %v1079, 6
    %v1766 = vsel %vm1709, %v1764, %v1765
    %v1767 = vrot.slane %v1698, 6
    %v1768 = vrot.slane %v1080, 6
    %v1769 = vsel %vm1709, %v1767, %v1768
    %v1770 = vrot.slane %v1699, 6
    %v1771 = vsel %vm1709, %v1765, %v1770
    %v1772 = vrot.slane %v1700, 6
    %v1773 = vsel %vm1709, %v1768, %v1772
    %v1782 = vadd.f32 %v1485, %v1756
    %v1783 = vadd.f32 %v1486, %v1759
    %v1784 = vadd.f32 %v1487, %v1761
    %v1785 = vadd.f32 %v1488, %v1763
    %v1786 = vadd.f32 %v1489, %v1766
    %v1787 = vadd.f32 %v1490, %v1769
    %v1788 = vadd.f32 %v1491, %v1771
    %v1789 = vadd.f32 %v1492, %v1773
    %v1790 = vmul.f32 %v1685, %v1675
    %v1791 = vmul.f32 %v1686, %v1676
    %v1792 = vmul.f32 %v1687, %v1362
    %v1793 = vmul.f32 %v1688, %v1363
    %v1794 = vmul.f32 %v1689, %v1677
    %v1795 = vmul.f32 %v1690, %v1678
    %v1796 = vmul.f32 %v1691, %v1364
    %v1797 = vmul.f32 %v1692, %v1365
    %v1806 = vrot.slane %v1790, 6
    %v1807 = vrot.slane %v1182, 6
    %v1808 = vsel %vm1709, %v1806, %v1807
    %v1809 = vrot.slane %v1791, 6
    %v1810 = vrot.slane %v1183, 6
    %v1811 = vsel %vm1709, %v1809, %v1810
    %v1812 = vrot.slane %v1792, 6
    %v1813 = vsel %vm1709, %v1807, %v1812
    %v1814 = vrot.slane %v1793, 6
    %v1815 = vsel %vm1709, %v1810, %v1814
    %v1816 = vrot.slane %v1794, 6
    %v1817 = vrot.slane %v1188, 6
    %v1818 = vsel %vm1709, %v1816, %v1817
    %v1819 = vrot.slane %v1795, 6
    %v1820 = vrot.slane %v1189, 6
    %v1821 = vsel %vm1709, %v1819, %v1820
    %v1822 = vrot.slane %v1796, 6
    %v1823 = vsel %vm1709, %v1817, %v1822
    %v1824 = vrot.slane %v1797, 6
    %v1825 = vsel %vm1709, %v1820, %v1824
    %v1834 = vadd.f32 %v1545, %v1808
    %v1835 = vadd.f32 %v1546, %v1811
    %v1836 = vadd.f32 %v1547, %v1813
    %v1837 = vadd.f32 %v1548, %v1815
    %v1838 = vadd.f32 %v1549, %v1818
    %v1839 = vadd.f32 %v1550, %v1821
    %v1840 = vadd.f32 %v1551, %v1823
    %v1841 = vadd.f32 %v1552, %v1825
    %v1842 = vmul.f32 %v1693, %v1681
    %v1843 = vmul.f32 %v1694, %v1682
    %v1844 = vmul.f32 %v1695, %v1368
    %v1845 = vmul.f32 %v1696, %v1369
    %v1846 = vmul.f32 %v1697, %v1683
    %v1847 = vmul.f32 %v1698, %v1684
    %v1848 = vmul.f32 %v1699, %v1370
    %v1849 = vmul.f32 %v1700, %v1371
    %v1858 = vrot.slane %v1842, 6
    %v1859 = vrot.slane %v1242, 6
    %v1860 = vsel %vm1709, %v1858, %v1859
    %v1861 = vrot.slane %v1843, 6
    %v1862 = vrot.slane %v1243, 6
    %v1863 = vsel %vm1709, %v1861, %v1862
    %v1864 = vrot.slane %v1844, 6
    %v1865 = vsel %vm1709, %v1859, %v1864
    %v1866 = vrot.slane %v1845, 6
    %v1867 = vsel %vm1709, %v1862, %v1866
    %v1868 = vrot.slane %v1846, 6
    %v1869 = vrot.slane %v1248, 6
    %v1870 = vsel %vm1709, %v1868, %v1869
    %v1871 = vrot.slane %v1847, 6
    %v1872 = vrot.slane %v1249, 6
    %v1873 = vsel %vm1709, %v1871, %v1872
    %v1874 = vrot.slane %v1848, 6
    %v1875 = vsel %vm1709, %v1869, %v1874
    %v1876 = vrot.slane %v1849, 6
    %v1877 = vsel %vm1709, %v1872, %v1876
    %v1886 = vadd.f32 %v1605, %v1860
    %v1887 = vadd.f32 %v1606, %v1863
    %v1888 = vadd.f32 %v1607, %v1865
    %v1889 = vadd.f32 %v1608, %v1867
    %v1890 = vadd.f32 %v1609, %v1870
    %v1891 = vadd.f32 %v1610, %v1873
    %v1892 = vadd.f32 %v1611, %v1875
    %v1893 = vadd.f32 %v1612, %v1877
    %v1894 = vmul.f32 %v1685, %v1681
    %v1895 = vmul.f32 %v1686, %v1682
    %v1896 = vmul.f32 %v1687, %v1368
    %v1897 = vmul.f32 %v1688, %v1369
    %v1898 = vmul.f32 %v1689, %v1683
    %v1899 = vmul.f32 %v1690, %v1684
    %v1900 = vmul.f32 %v1691, %v1370
    %v1901 = vmul.f32 %v1692, %v1371
    %v1910 = vrot.slane %v1894, 6
    %v1911 = vrot.slane %v1302, 6
    %v1912 = vsel %vm1709, %v1910, %v1911
    %v1913 = vrot.slane %v1895, 6
    %v1914 = vrot.slane %v1303, 6
    %v1915 = vsel %vm1709, %v1913, %v1914
    %v1916 = vrot.slane %v1896, 6
    %v1917 = vsel %vm1709, %v1911, %v1916
    %v1918 = vrot.slane %v1897, 6
    %v1919 = vsel %vm1709, %v1914, %v1918
    %v1920 = vrot.slane %v1898, 6
    %v1921 = vrot.slane %v1308, 6
    %v1922 = vsel %vm1709, %v1920, %v1921
    %v1923 = vrot.slane %v1899, 6
    %v1924 = vrot.slane %v1309, 6
    %v1925 = vsel %vm1709, %v1923, %v1924
    %v1926 = vrot.slane %v1900, 6
    %v1927 = vsel %vm1709, %v1921, %v1926
    %v1928 = vrot.slane %v1901, 6
    %v1929 = vsel %vm1709, %v1924, %v1928
    %v1938 = vadd.f32 %v1665, %v1912
    %v1939 = vadd.f32 %v1666, %v1915
    %v1940 = vadd.f32 %v1667, %v1917
    %v1941 = vadd.f32 %v1668, %v1919
    %v1942 = vadd.f32 %v1669, %v1922
    %v1943 = vadd.f32 %v1670, %v1925
    %v1944 = vadd.f32 %v1671, %v1927
    %v1945 = vadd.f32 %v1672, %v1929
    %v1946 = vld [vmem:[%s2 + $0x10] sm:$0xff]
    %v1947 = vld [vmem:[%s2 + $0x30] sm:$0xff]
    %v1948 = vunpack.c.l.bf16 %v1946
    %v1949 = vunpack.c.h.bf16 %v1946
    %v1950 = vunpack.c.l.bf16 %v1947
    %v1951 = vunpack.c.h.bf16 %v1947
    %v1952 = vld [vmem:[%s3 + $0x10] sm:$0xff]
    %v1953 = vld [vmem:[%s3 + $0x30] sm:$0xff]
    %v1954 = vunpack.c.l.bf16 %v1952
    %v1955 = vunpack.c.h.bf16 %v1952
    %v1956 = vunpack.c.l.bf16 %v1953
    %v1957 = vunpack.c.h.bf16 %v1953
    %v1958 = vmul.f32 %v1675, 0.10936069
    %v1959 = vmul.f32 %v1676, 0.10936069
    %v1960 = vmul.f32 %v1948, 0.10936069
    %v1961 = vmul.f32 %v1949, 0.10936069
    %v1962 = vmul.f32 %v1677, 0.10936069
    %v1963 = vmul.f32 %v1678, 0.10936069
    %v1964 = vmul.f32 %v1950, 0.10936069
    %v1965 = vmul.f32 %v1951, 0.10936069
    %v1966 = vmul.f32 %v1681, 0.10936069
    %v1967 = vmul.f32 %v1682, 0.10936069
    %v1968 = vmul.f32 %v1954, 0.10936069
    %v1969 = vmul.f32 %v1955, 0.10936069
    %v1970 = vmul.f32 %v1683, 0.10936069
    %v1971 = vmul.f32 %v1684, 0.10936069
    %v1972 = vmul.f32 %v1956, 0.10936069
    %v1973 = vmul.f32 %v1957, 0.10936069
    %vm1982 = vcmask 1040384
    %v1983 = vrot.slane %v1958, 7
    %v1984 = vrot.slane %v748, 7
    %v1985 = vsel %vm1982, %v1983, %v1984
    %v1986 = vrot.slane %v1959, 7
    %v1987 = vrot.slane %v749, 7
    %v1988 = vsel %vm1982, %v1986, %v1987
    %v1989 = vrot.slane %v1960, 7
    %v1990 = vsel %vm1982, %v1984, %v1989
    %v1991 = vrot.slane %v1961, 7
    %v1992 = vsel %vm1982, %v1987, %v1991
    %v1993 = vrot.slane %v1962, 7
    %v1994 = vrot.slane %v754, 7
    %v1995 = vsel %vm1982, %v1993, %v1994
    %v1996 = vrot.slane %v1963, 7
    %v1997 = vrot.slane %v755, 7
    %v1998 = vsel %vm1982, %v1996, %v1997
    %v1999 = vrot.slane %v1964, 7
    %v2000 = vsel %vm1982, %v1994, %v1999
    %v2001 = vrot.slane %v1965, 7
    %v2002 = vsel %vm1982, %v1997, %v2001
    %v2011 = vadd.f32 %v1738, %v1985
    %v2012 = vadd.f32 %v1739, %v1988
    %v2013 = vadd.f32 %v1740, %v1990
    %v2014 = vadd.f32 %v1741, %v1992
    %v2015 = vadd.f32 %v1742, %v1995
    %v2016 = vadd.f32 %v1743, %v1998
    %v2017 = vadd.f32 %v1744, %v2000
    %v2018 = vadd.f32 %v1745, %v2002
    %v2027 = vrot.slane %v1966, 7
    %v2028 = vrot.slane %v760, 7
    %v2029 = vsel %vm1982, %v2027, %v2028
    %v2030 = vrot.slane %v1967, 7
    %v2031 = vrot.slane %v761, 7
    %v2032 = vsel %vm1982, %v2030, %v2031
    %v2033 = vrot.slane %v1968, 7
    %v2034 = vsel %vm1982, %v2028, %v2033
    %v2035 = vrot.slane %v1969, 7
    %v2036 = vsel %vm1982, %v2031, %v2035
    %v2037 = vrot.slane %v1970, 7
    %v2038 = vrot.slane %v766, 7
    %v2039 = vsel %vm1982, %v2037, %v2038
    %v2040 = vrot.slane %v1971, 7
    %v2041 = vrot.slane %v767, 7
    %v2042 = vsel %vm1982, %v2040, %v2041
    %v2043 = vrot.slane %v1972, 7
    %v2044 = vsel %vm1982, %v2038, %v2043
    %v2045 = vrot.slane %v1973, 7
    %v2046 = vsel %vm1982, %v2041, %v2045
    %v2055 = vadd.f32 %v1782, %v2029
    %v2056 = vadd.f32 %v1783, %v2032
    %v2057 = vadd.f32 %v1784, %v2034
    %v2058 = vadd.f32 %v1785, %v2036
    %v2059 = vadd.f32 %v1786, %v2039
    %v2060 = vadd.f32 %v1787, %v2042
    %v2061 = vadd.f32 %v1788, %v2044
    %v2062 = vadd.f32 %v1789, %v2046
    %v2063 = vmul.f32 %v1958, %v1675
    %v2064 = vmul.f32 %v1959, %v1676
    %v2065 = vmul.f32 %v1960, %v1948
    %v2066 = vmul.f32 %v1961, %v1949
    %v2067 = vmul.f32 %v1962, %v1677
    %v2068 = vmul.f32 %v1963, %v1678
    %v2069 = vmul.f32 %v1964, %v1950
    %v2070 = vmul.f32 %v1965, %v1951
    %v2079 = vrot.slane %v2063, 7
    %v2080 = vrot.slane %v869, 7
    %v2081 = vsel %vm1982, %v2079, %v2080
    %v2082 = vrot.slane %v2064, 7
    %v2083 = vrot.slane %v870, 7
    %v2084 = vsel %vm1982, %v2082, %v2083
    %v2085 = vrot.slane %v2065, 7
    %v2086 = vsel %vm1982, %v2080, %v2085
    %v2087 = vrot.slane %v2066, 7
    %v2088 = vsel %vm1982, %v2083, %v2087
    %v2089 = vrot.slane %v2067, 7
    %v2090 = vrot.slane %v875, 7
    %v2091 = vsel %vm1982, %v2089, %v2090
    %v2092 = vrot.slane %v2068, 7
    %v2093 = vrot.slane %v876, 7
    %v2094 = vsel %vm1982, %v2092, %v2093
    %v2095 = vrot.slane %v2069, 7
    %v2096 = vsel %vm1982, %v2090, %v2095
    %v2097 = vrot.slane %v2070, 7
    %v2098 = vsel %vm1982, %v2093, %v2097
    %v2107 = vadd.f32 %v1834, %v2081
    %v2108 = vadd.f32 %v1835, %v2084
    %v2109 = vadd.f32 %v1836, %v2086
    %v2110 = vadd.f32 %v1837, %v2088
    %v2111 = vadd.f32 %v1838, %v2091
    %v2112 = vadd.f32 %v1839, %v2094
    %v2113 = vadd.f32 %v1840, %v2096
    %v2114 = vadd.f32 %v1841, %v2098
    %v2115 = vmul.f32 %v1966, %v1681
    %v2116 = vmul.f32 %v1967, %v1682
    %v2117 = vmul.f32 %v1968, %v1954
    %v2118 = vmul.f32 %v1969, %v1955
    %v2119 = vmul.f32 %v1970, %v1683
    %v2120 = vmul.f32 %v1971, %v1684
    %v2121 = vmul.f32 %v1972, %v1956
    %v2122 = vmul.f32 %v1973, %v1957
    %v2131 = vrot.slane %v2115, 7
    %v2132 = vrot.slane %v929, 7
    %v2133 = vsel %vm1982, %v2131, %v2132
    %v2134 = vrot.slane %v2116, 7
    %v2135 = vrot.slane %v930, 7
    %v2136 = vsel %vm1982, %v2134, %v2135
    %v2137 = vrot.slane %v2117, 7
    %v2138 = vsel %vm1982, %v2132, %v2137
    %v2139 = vrot.slane %v2118, 7
    %v2140 = vsel %vm1982, %v2135, %v2139
    %v2141 = vrot.slane %v2119, 7
    %v2142 = vrot.slane %v935, 7
    %v2143 = vsel %vm1982, %v2141, %v2142
    %v2144 = vrot.slane %v2120, 7
    %v2145 = vrot.slane %v936, 7
    %v2146 = vsel %vm1982, %v2144, %v2145
    %v2147 = vrot.slane %v2121, 7
    %v2148 = vsel %vm1982, %v2142, %v2147
    %v2149 = vrot.slane %v2122, 7
    %v2150 = vsel %vm1982, %v2145, %v2149
    %v2159 = vadd.f32 %v1886, %v2133
    %v2160 = vadd.f32 %v1887, %v2136
    %v2161 = vadd.f32 %v1888, %v2138
    %v2162 = vadd.f32 %v1889, %v2140
    %v2163 = vadd.f32 %v1890, %v2143
    %v2164 = vadd.f32 %v1891, %v2146
    %v2165 = vadd.f32 %v1892, %v2148
    %v2166 = vadd.f32 %v1893, %v2150
    %v2167 = vmul.f32 %v1958, %v1681
    %v2168 = vmul.f32 %v1959, %v1682
    %v2169 = vmul.f32 %v1960, %v1954
    %v2170 = vmul.f32 %v1961, %v1955
    %v2171 = vmul.f32 %v1962, %v1683
    %v2172 = vmul.f32 %v1963, %v1684
    %v2173 = vmul.f32 %v1964, %v1956
    %v2174 = vmul.f32 %v1965, %v1957
    %v2183 = vrot.slane %v2167, 7
    %v2184 = vrot.slane %v989, 7
    %v2185 = vsel %vm1982, %v2183, %v2184
    %v2186 = vrot.slane %v2168, 7
    %v2187 = vrot.slane %v990, 7
    %v2188 = vsel %vm1982, %v2186, %v2187
    %v2189 = vrot.slane %v2169, 7
    %v2190 = vsel %vm1982, %v2184, %v2189
    %v2191 = vrot.slane %v2170, 7
    %v2192 = vsel %vm1982, %v2187, %v2191
    %v2193 = vrot.slane %v2171, 7
    %v2194 = vrot.slane %v995, 7
    %v2195 = vsel %vm1982, %v2193, %v2194
    %v2196 = vrot.slane %v2172, 7
    %v2197 = vrot.slane %v996, 7
    %v2198 = vsel %vm1982, %v2196, %v2197
    %v2199 = vrot.slane %v2173, 7
    %v2200 = vsel %vm1982, %v2194, %v2199
    %v2201 = vrot.slane %v2174, 7
    %v2202 = vsel %vm1982, %v2197, %v2201
    %v2211 = vadd.f32 %v1938, %v2185
    %v2212 = vadd.f32 %v1939, %v2188
    %v2213 = vadd.f32 %v1940, %v2190
    %v2214 = vadd.f32 %v1941, %v2192
    %v2215 = vadd.f32 %v1942, %v2195
    %v2216 = vadd.f32 %v1943, %v2198
    %v2217 = vadd.f32 %v1944, %v2200
    %v2218 = vadd.f32 %v1945, %v2202
    %v2219 = vmul.f32 %v1948, 0.036000773
    %v2220 = vmul.f32 %v1949, 0.036000773
    %v2221 = vmul.f32 %v1950, 0.036000773
    %v2222 = vmul.f32 %v1951, 0.036000773
    %v2223 = vmul.f32 %v1954, 0.036000773
    %v2224 = vmul.f32 %v1955, 0.036000773
    %v2225 = vmul.f32 %v1956, 0.036000773
    %v2226 = vmul.f32 %v1957, 0.036000773
    %v2227 = vadd.f32 %v2011, %v435
    %v2228 = vadd.f32 %v2012, %v436
    %v2229 = vadd.f32 %v2013, %v2219
    %v2230 = vadd.f32 %v2014, %v2220
    %v2231 = vadd.f32 %v2015, %v441
    %v2232 = vadd.f32 %v2016, %v442
    %v2233 = vadd.f32 %v2017, %v2221
    %v2234 = vadd.f32 %v2018, %v2222
    %v2235 = vadd.f32 %v2055, %v447
    %v2236 = vadd.f32 %v2056, %v448
    %v2237 = vadd.f32 %v2057, %v2223
    %v2238 = vadd.f32 %v2058, %v2224
    %v2239 = vadd.f32 %v2059, %v453
    %v2240 = vadd.f32 %v2060, %v454
    %v2241 = vadd.f32 %v2061, %v2225
    %v2242 = vadd.f32 %v2062, %v2226
    %v2243 = vmul.f32 %v2219, %v1948
    %v2244 = vmul.f32 %v2220, %v1949
    %v2245 = vmul.f32 %v2221, %v1950
    %v2246 = vmul.f32 %v2222, %v1951
    %v2247 = vadd.f32 %v2107, %v556
    %v2248 = vadd.f32 %v2108, %v557
    %v2249 = vadd.f32 %v2109, %v2243
    %v2250 = vadd.f32 %v2110, %v2244
    %v2251 = vadd.f32 %v2111, %v562
    %v2252 = vadd.f32 %v2112, %v563
    %v2253 = vadd.f32 %v2113, %v2245
    %v2254 = vadd.f32 %v2114, %v2246
    %v2255 = vmul.f32 %v2223, %v1954
    %v2256 = vmul.f32 %v2224, %v1955
    %v2257 = vmul.f32 %v2225, %v1956
    %v2258 = vmul.f32 %v2226, %v1957
    %v2259 = vadd.f32 %v2159, %v616
    %v2260 = vadd.f32 %v2160, %v617
    %v2261 = vadd.f32 %v2161, %v2255
    %v2262 = vadd.f32 %v2162, %v2256
    %v2263 = vadd.f32 %v2163, %v622
    %v2264 = vadd.f32 %v2164, %v623
    %v2265 = vadd.f32 %v2165, %v2257
    %v2266 = vadd.f32 %v2166, %v2258
    %v2267 = vmul.f32 %v2219, %v1954
    %v2268 = vmul.f32 %v2220, %v1955
    %v2269 = vmul.f32 %v2221, %v1956
    %v2270 = vmul.f32 %v2222, %v1957
    %v2271 = vadd.f32 %v2211, %v676
    %v2272 = vadd.f32 %v2212, %v677
    %v2273 = vadd.f32 %v2213, %v2267
    %v2274 = vadd.f32 %v2214, %v2268
    %v2275 = vadd.f32 %v2215, %v682
    %v2276 = vadd.f32 %v2216, %v683
    %v2277 = vadd.f32 %v2217, %v2269
    %v2278 = vadd.f32 %v2218, %v2270
    %v2279 = vld [vmem:[%s2 + $0x18] sm:$0x11]
    %v2280 = vld [vmem:[%s2 + $0x38] sm:$0x11]
    %v2281 = vunpack.c.l.bf16 %v2279
    %v2282 = vunpack.c.h.bf16 %v2279
    %v2283 = vunpack.c.l.bf16 %v2280
    %v2284 = vunpack.c.h.bf16 %v2280
    %v2285 = vld [vmem:[%s3 + $0x18] sm:$0x11]
    %v2286 = vld [vmem:[%s3 + $0x38] sm:$0x11]
    %v2287 = vunpack.c.l.bf16 %v2285
    %v2288 = vunpack.c.h.bf16 %v2285
    %v2289 = vunpack.c.l.bf16 %v2286
    %v2290 = vunpack.c.h.bf16 %v2286
    %v2291 = vmul.f32 %v1948, 0.007598758
    %v2292 = vmul.f32 %v1949, 0.007598758
    %v2293 = vmul.f32 %v2281, 0.007598758
    %v2294 = vmul.f32 %v2282, 0.007598758
    %v2295 = vmul.f32 %v1950, 0.007598758
    %v2296 = vmul.f32 %v1951, 0.007598758
    %v2297 = vmul.f32 %v2283, 0.007598758
    %v2298 = vmul.f32 %v2284, 0.007598758
    %v2299 = vmul.f32 %v1954, 0.007598758
    %v2300 = vmul.f32 %v1955, 0.007598758
    %v2301 = vmul.f32 %v2287, 0.007598758
    %v2302 = vmul.f32 %v2288, 0.007598758
    %v2303 = vmul.f32 %v1956, 0.007598758
    %v2304 = vmul.f32 %v1957, 0.007598758
    %v2305 = vmul.f32 %v2289, 0.007598758
    %v2306 = vmul.f32 %v2290, 0.007598758
    %v2315 = vrot.slane %v2291, 1
    %v2316 = vsel %vm156, %v158, %v2315
    %v2317 = vrot.slane %v2292, 1
    %v2318 = vsel %vm156, %v161, %v2317
    %v2319 = vrot.slane %v2293, 1
    %v2320 = vsel %vm156, %v2315, %v2319
    %v2321 = vrot.slane %v2294, 1
    %v2322 = vsel %vm156, %v2317, %v2321
    %v2323 = vrot.slane %v2295, 1
    %v2324 = vsel %vm156, %v168, %v2323
    %v2325 = vrot.slane %v2296, 1
    %v2326 = vsel %vm156, %v171, %v2325
    %v2327 = vrot.slane %v2297, 1
    %v2328 = vsel %vm156, %v2323, %v2327
    %v2329 = vrot.slane %v2298, 1
    %v2330 = vsel %vm156, %v2325, %v2329
    %v2339 = vadd.f32 %v2227, %v2316
    %v2340 = vadd.f32 %v2228, %v2318
    %v2341 = vadd.f32 %v2229, %v2320
    %v2342 = vadd.f32 %v2230, %v2322
    %v2343 = vadd.f32 %v2231, %v2324
    %v2344 = vadd.f32 %v2232, %v2326
    %v2345 = vadd.f32 %v2233, %v2328
    %v2346 = vadd.f32 %v2234, %v2330
    %v2355 = vrot.slane %v2299, 1
    %v2356 = vsel %vm156, %v206, %v2355
    %v2357 = vrot.slane %v2300, 1
    %v2358 = vsel %vm156, %v209, %v2357
    %v2359 = vrot.slane %v2301, 1
    %v2360 = vsel %vm156, %v2355, %v2359
    %v2361 = vrot.slane %v2302, 1
    %v2362 = vsel %vm156, %v2357, %v2361
    %v2363 = vrot.slane %v2303, 1
    %v2364 = vsel %vm156, %v216, %v2363
    %v2365 = vrot.slane %v2304, 1
    %v2366 = vsel %vm156, %v219, %v2365
    %v2367 = vrot.slane %v2305, 1
    %v2368 = vsel %vm156, %v2363, %v2367
    %v2369 = vrot.slane %v2306, 1
    %v2370 = vsel %vm156, %v2365, %v2369
    %v2379 = vadd.f32 %v2235, %v2356
    %v2380 = vadd.f32 %v2236, %v2358
    %v2381 = vadd.f32 %v2237, %v2360
    %v2382 = vadd.f32 %v2238, %v2362
    %v2383 = vadd.f32 %v2239, %v2364
    %v2384 = vadd.f32 %v2240, %v2366
    %v2385 = vadd.f32 %v2241, %v2368
    %v2386 = vadd.f32 %v2242, %v2370
    %v2387 = vmul.f32 %v2291, %v1948
    %v2388 = vmul.f32 %v2292, %v1949
    %v2389 = vmul.f32 %v2293, %v2281
    %v2390 = vmul.f32 %v2294, %v2282
    %v2391 = vmul.f32 %v2295, %v1950
    %v2392 = vmul.f32 %v2296, %v1951
    %v2393 = vmul.f32 %v2297, %v2283
    %v2394 = vmul.f32 %v2298, %v2284
    %v2403 = vrot.slane %v2387, 1
    %v2404 = vsel %vm156, %v266, %v2403
    %v2405 = vrot.slane %v2388, 1
    %v2406 = vsel %vm156, %v269, %v2405
    %v2407 = vrot.slane %v2389, 1
    %v2408 = vsel %vm156, %v2403, %v2407
    %v2409 = vrot.slane %v2390, 1
    %v2410 = vsel %vm156, %v2405, %v2409
    %v2411 = vrot.slane %v2391, 1
    %v2412 = vsel %vm156, %v276, %v2411
    %v2413 = vrot.slane %v2392, 1
    %v2414 = vsel %vm156, %v279, %v2413
    %v2415 = vrot.slane %v2393, 1
    %v2416 = vsel %vm156, %v2411, %v2415
    %v2417 = vrot.slane %v2394, 1
    %v2418 = vsel %vm156, %v2413, %v2417
    %v2427 = vadd.f32 %v2247, %v2404
    %v2428 = vadd.f32 %v2248, %v2406
    %v2429 = vadd.f32 %v2249, %v2408
    %v2430 = vadd.f32 %v2250, %v2410
    %v2431 = vadd.f32 %v2251, %v2412
    %v2432 = vadd.f32 %v2252, %v2414
    %v2433 = vadd.f32 %v2253, %v2416
    %v2434 = vadd.f32 %v2254, %v2418
    %v2435 = vmul.f32 %v2299, %v1954
    %v2436 = vmul.f32 %v2300, %v1955
    %v2437 = vmul.f32 %v2301, %v2287
    %v2438 = vmul.f32 %v2302, %v2288
    %v2439 = vmul.f32 %v2303, %v1956
    %v2440 = vmul.f32 %v2304, %v1957
    %v2441 = vmul.f32 %v2305, %v2289
    %v2442 = vmul.f32 %v2306, %v2290
    %v2451 = vrot.slane %v2435, 1
    %v2452 = vsel %vm156, %v326, %v2451
    %v2453 = vrot.slane %v2436, 1
    %v2454 = vsel %vm156, %v329, %v2453
    %v2455 = vrot.slane %v2437, 1
    %v2456 = vsel %vm156, %v2451, %v2455
    %v2457 = vrot.slane %v2438, 1
    %v2458 = vsel %vm156, %v2453, %v2457
    %v2459 = vrot.slane %v2439, 1
    %v2460 = vsel %vm156, %v336, %v2459
    %v2461 = vrot.slane %v2440, 1
    %v2462 = vsel %vm156, %v339, %v2461
    %v2463 = vrot.slane %v2441, 1
    %v2464 = vsel %vm156, %v2459, %v2463
    %v2465 = vrot.slane %v2442, 1
    %v2466 = vsel %vm156, %v2461, %v2465
    %v2475 = vadd.f32 %v2259, %v2452
    %v2476 = vadd.f32 %v2260, %v2454
    %v2477 = vadd.f32 %v2261, %v2456
    %v2478 = vadd.f32 %v2262, %v2458
    %v2479 = vadd.f32 %v2263, %v2460
    %v2480 = vadd.f32 %v2264, %v2462
    %v2481 = vadd.f32 %v2265, %v2464
    %v2482 = vadd.f32 %v2266, %v2466
    %v2483 = vmul.f32 %v2291, %v1954
    %v2484 = vmul.f32 %v2292, %v1955
    %v2485 = vmul.f32 %v2293, %v2287
    %v2486 = vmul.f32 %v2294, %v2288
    %v2487 = vmul.f32 %v2295, %v1956
    %v2488 = vmul.f32 %v2296, %v1957
    %v2489 = vmul.f32 %v2297, %v2289
    %v2490 = vmul.f32 %v2298, %v2290
    %v2499 = vrot.slane %v2483, 1
    %v2500 = vsel %vm156, %v386, %v2499
    %v2501 = vrot.slane %v2484, 1
    %v2502 = vsel %vm156, %v389, %v2501
    %v2503 = vrot.slane %v2485, 1
    %v2504 = vsel %vm156, %v2499, %v2503
    %v2505 = vrot.slane %v2486, 1
    %v2506 = vsel %vm156, %v2501, %v2505
    %v2507 = vrot.slane %v2487, 1
    %v2508 = vsel %vm156, %v396, %v2507
    %v2509 = vrot.slane %v2488, 1
    %v2510 = vsel %vm156, %v399, %v2509
    %v2511 = vrot.slane %v2489, 1
    %v2512 = vsel %vm156, %v2507, %v2511
    %v2513 = vrot.slane %v2490, 1
    %v2514 = vsel %vm156, %v2509, %v2513
    %v2523 = vadd.f32 %v2271, %v2500
    %v2524 = vadd.f32 %v2272, %v2502
    %v2525 = vadd.f32 %v2273, %v2504
    %v2526 = vadd.f32 %v2274, %v2506
    %v2527 = vadd.f32 %v2275, %v2508
    %v2528 = vadd.f32 %v2276, %v2510
    %v2529 = vadd.f32 %v2277, %v2512
    %v2530 = vadd.f32 %v2278, %v2514
    %v2531 = vld [vmem:[%s2 + $0x8] sm:$0xee]
    %v2532 = vld [vmem:[%s2 + $0x28] sm:$0xee]
    %v2533 = vunpack.c.l.bf16 %v2531
    %v2534 = vunpack.c.h.bf16 %v2531
    %v2535 = vunpack.c.l.bf16 %v2532
    %v2536 = vunpack.c.h.bf16 %v2532
    %v2537 = vld [vmem:[%s3 + $0x8] sm:$0xee]
    %v2538 = vld [vmem:[%s3 + $0x28] sm:$0xee]
    %v2539 = vunpack.c.l.bf16 %v2537
    %v2540 = vunpack.c.h.bf16 %v2537
    %v2541 = vunpack.c.l.bf16 %v2538
    %v2542 = vunpack.c.h.bf16 %v2538
    %v2543 = vmul.f32 %v2533, 0.0010283801
    %v2544 = vmul.f32 %v2534, 0.0010283801
    %v2545 = vmul.f32 %v1948, 0.0010283801
    %v2546 = vmul.f32 %v1949, 0.0010283801
    %v2547 = vmul.f32 %v2281, 0.0010283801
    %v2548 = vmul.f32 %v2282, 0.0010283801
    %v2549 = vmul.f32 %v2535, 0.0010283801
    %v2550 = vmul.f32 %v2536, 0.0010283801
    %v2551 = vmul.f32 %v1950, 0.0010283801
    %v2552 = vmul.f32 %v1951, 0.0010283801
    %v2553 = vmul.f32 %v2283, 0.0010283801
    %v2554 = vmul.f32 %v2284, 0.0010283801
    %v2555 = vmul.f32 %v2539, 0.0010283801
    %v2556 = vmul.f32 %v2540, 0.0010283801
    %v2557 = vmul.f32 %v1954, 0.0010283801
    %v2558 = vmul.f32 %v1955, 0.0010283801
    %v2559 = vmul.f32 %v2287, 0.0010283801
    %v2560 = vmul.f32 %v2288, 0.0010283801
    %v2561 = vmul.f32 %v2541, 0.0010283801
    %v2562 = vmul.f32 %v2542, 0.0010283801
    %v2563 = vmul.f32 %v1956, 0.0010283801
    %v2564 = vmul.f32 %v1957, 0.0010283801
    %v2565 = vmul.f32 %v2289, 0.0010283801
    %v2566 = vmul.f32 %v2290, 0.0010283801
    %v2579 = vrot.slane %v2543, 2
    %v2580 = vrot.slane %v2545, 2
    %v2581 = vsel %vm469, %v2579, %v2580
    %v2582 = vrot.slane %v2544, 2
    %v2583 = vrot.slane %v2546, 2
    %v2584 = vsel %vm469, %v2582, %v2583
    %v2585 = vrot.slane %v2547, 2
    %v2586 = vsel %vm469, %v2580, %v2585
    %v2587 = vrot.slane %v2548, 2
    %v2588 = vsel %vm469, %v2583, %v2587
    %v2589 = vrot.slane %v2549, 2
    %v2590 = vrot.slane %v2551, 2
    %v2591 = vsel %vm469, %v2589, %v2590
    %v2592 = vrot.slane %v2550, 2
    %v2593 = vrot.slane %v2552, 2
    %v2594 = vsel %vm469, %v2592, %v2593
    %v2595 = vrot.slane %v2553, 2
    %v2596 = vsel %vm469, %v2590, %v2595
    %v2597 = vrot.slane %v2554, 2
    %v2598 = vsel %vm469, %v2593, %v2597
    %v2607 = vadd.f32 %v2339, %v2581
    %v2608 = vadd.f32 %v2340, %v2584
    %v2609 = vadd.f32 %v2341, %v2586
    %v2610 = vadd.f32 %v2342, %v2588
    %v2611 = vadd.f32 %v2343, %v2591
    %v2612 = vadd.f32 %v2344, %v2594
    %v2613 = vadd.f32 %v2345, %v2596
    %v2614 = vadd.f32 %v2346, %v2598
    %v2627 = vrot.slane %v2555, 2
    %v2628 = vrot.slane %v2557, 2
    %v2629 = vsel %vm469, %v2627, %v2628
    %v2630 = vrot.slane %v2556, 2
    %v2631 = vrot.slane %v2558, 2
    %v2632 = vsel %vm469, %v2630, %v2631
    %v2633 = vrot.slane %v2559, 2
    %v2634 = vsel %vm469, %v2628, %v2633
    %v2635 = vrot.slane %v2560, 2
    %v2636 = vsel %vm469, %v2631, %v2635
    %v2637 = vrot.slane %v2561, 2
    %v2638 = vrot.slane %v2563, 2
    %v2639 = vsel %vm469, %v2637, %v2638
    %v2640 = vrot.slane %v2562, 2
    %v2641 = vrot.slane %v2564, 2
    %v2642 = vsel %vm469, %v2640, %v2641
    %v2643 = vrot.slane %v2565, 2
    %v2644 = vsel %vm469, %v2638, %v2643
    %v2645 = vrot.slane %v2566, 2
    %v2646 = vsel %vm469, %v2641, %v2645
    %v2655 = vadd.f32 %v2379, %v2629
    %v2656 = vadd.f32 %v2380, %v2632
    %v2657 = vadd.f32 %v2381, %v2634
    %v2658 = vadd.f32 %v2382, %v2636
    %v2659 = vadd.f32 %v2383, %v2639
    %v2660 = vadd.f32 %v2384, %v2642
    %v2661 = vadd.f32 %v2385, %v2644
    %v2662 = vadd.f32 %v2386, %v2646
    %v2663 = vmul.f32 %v2543, %v2533
    %v2664 = vmul.f32 %v2544, %v2534
    %v2665 = vmul.f32 %v2545, %v1948
    %v2666 = vmul.f32 %v2546, %v1949
    %v2667 = vmul.f32 %v2547, %v2281
    %v2668 = vmul.f32 %v2548, %v2282
    %v2669 = vmul.f32 %v2549, %v2535
    %v2670 = vmul.f32 %v2550, %v2536
    %v2671 = vmul.f32 %v2551, %v1950
    %v2672 = vmul.f32 %v2552, %v1951
    %v2673 = vmul.f32 %v2553, %v2283
    %v2674 = vmul.f32 %v2554, %v2284
    %v2687 = vrot.slane %v2663, 2
    %v2688 = vrot.slane %v2665, 2
    %v2689 = vsel %vm469, %v2687, %v2688
    %v2690 = vrot.slane %v2664, 2
    %v2691 = vrot.slane %v2666, 2
    %v2692 = vsel %vm469, %v2690, %v2691
    %v2693 = vrot.slane %v2667, 2
    %v2694 = vsel %vm469, %v2688, %v2693
    %v2695 = vrot.slane %v2668, 2
    %v2696 = vsel %vm469, %v2691, %v2695
    %v2697 = vrot.slane %v2669, 2
    %v2698 = vrot.slane %v2671, 2
    %v2699 = vsel %vm469, %v2697, %v2698
    %v2700 = vrot.slane %v2670, 2
    %v2701 = vrot.slane %v2672, 2
    %v2702 = vsel %vm469, %v2700, %v2701
    %v2703 = vrot.slane %v2673, 2
    %v2704 = vsel %vm469, %v2698, %v2703
    %v2705 = vrot.slane %v2674, 2
    %v2706 = vsel %vm469, %v2701, %v2705
    %v2715 = vadd.f32 %v2427, %v2689
    %v2716 = vadd.f32 %v2428, %v2692
    %v2717 = vadd.f32 %v2429, %v2694
    %v2718 = vadd.f32 %v2430, %v2696
    %v2719 = vadd.f32 %v2431, %v2699
    %v2720 = vadd.f32 %v2432, %v2702
    %v2721 = vadd.f32 %v2433, %v2704
    %v2722 = vadd.f32 %v2434, %v2706
    %v2723 = vmul.f32 %v2555, %v2539
    %v2724 = vmul.f32 %v2556, %v2540
    %v2725 = vmul.f32 %v2557, %v1954
    %v2726 = vmul.f32 %v2558, %v1955
    %v2727 = vmul.f32 %v2559, %v2287
    %v2728 = vmul.f32 %v2560, %v2288
    %v2729 = vmul.f32 %v2561, %v2541
    %v2730 = vmul.f32 %v2562, %v2542
    %v2731 = vmul.f32 %v2563, %v1956
    %v2732 = vmul.f32 %v2564, %v1957
    %v2733 = vmul.f32 %v2565, %v2289
    %v2734 = vmul.f32 %v2566, %v2290
    %v2747 = vrot.slane %v2723, 2
    %v2748 = vrot.slane %v2725, 2
    %v2749 = vsel %vm469, %v2747, %v2748
    %v2750 = vrot.slane %v2724, 2
    %v2751 = vrot.slane %v2726, 2
    %v2752 = vsel %vm469, %v2750, %v2751
    %v2753 = vrot.slane %v2727, 2
    %v2754 = vsel %vm469, %v2748, %v2753
    %v2755 = vrot.slane %v2728, 2
    %v2756 = vsel %vm469, %v2751, %v2755
    %v2757 = vrot.slane %v2729, 2
    %v2758 = vrot.slane %v2731, 2
    %v2759 = vsel %vm469, %v2757, %v2758
    %v2760 = vrot.slane %v2730, 2
    %v2761 = vrot.slane %v2732, 2
    %v2762 = vsel %vm469, %v2760, %v2761
    %v2763 = vrot.slane %v2733, 2
    %v2764 = vsel %vm469, %v2758, %v2763
    %v2765 = vrot.slane %v2734, 2
    %v2766 = vsel %vm469, %v2761, %v2765
    %v2775 = vadd.f32 %v2475, %v2749
    %v2776 = vadd.f32 %v2476, %v2752
    %v2777 = vadd.f32 %v2477, %v2754
    %v2778 = vadd.f32 %v2478, %v2756
    %v2779 = vadd.f32 %v2479, %v2759
    %v2780 = vadd.f32 %v2480, %v2762
    %v2781 = vadd.f32 %v2481, %v2764
    %v2782 = vadd.f32 %v2482, %v2766
    %v2783 = vmul.f32 %v2543, %v2539
    %v2784 = vmul.f32 %v2544, %v2540
    %v2785 = vmul.f32 %v2545, %v1954
    %v2786 = vmul.f32 %v2546, %v1955
    %v2787 = vmul.f32 %v2547, %v2287
    %v2788 = vmul.f32 %v2548, %v2288
    %v2789 = vmul.f32 %v2549, %v2541
    %v2790 = vmul.f32 %v2550, %v2542
    %v2791 = vmul.f32 %v2551, %v1956
    %v2792 = vmul.f32 %v2552, %v1957
    %v2793 = vmul.f32 %v2553, %v2289
    %v2794 = vmul.f32 %v2554, %v2290
    %v2807 = vrot.slane %v2783, 2
    %v2808 = vrot.slane %v2785, 2
    %v2809 = vsel %vm469, %v2807, %v2808
    %v2810 = vrot.slane %v2784, 2
    %v2811 = vrot.slane %v2786, 2
    %v2812 = vsel %vm469, %v2810, %v2811
    %v2813 = vrot.slane %v2787, 2
    %v2814 = vsel %vm469, %v2808, %v2813
    %v2815 = vrot.slane %v2788, 2
    %v2816 = vsel %vm469, %v2811, %v2815
    %v2817 = vrot.slane %v2789, 2
    %v2818 = vrot.slane %v2791, 2
    %v2819 = vsel %vm469, %v2817, %v2818
    %v2820 = vrot.slane %v2790, 2
    %v2821 = vrot.slane %v2792, 2
    %v2822 = vsel %vm469, %v2820, %v2821
    %v2823 = vrot.slane %v2793, 2
    %v2824 = vsel %vm469, %v2818, %v2823
    %v2825 = vrot.slane %v2794, 2
    %v2826 = vsel %vm469, %v2821, %v2825
    %v2835 = vadd.f32 %v2523, %v2809
    %v2836 = vadd.f32 %v2524, %v2812
    %v2837 = vadd.f32 %v2525, %v2814
    %v2838 = vadd.f32 %v2526, %v2816
    %v2839 = vadd.f32 %v2527, %v2819
    %v2840 = vadd.f32 %v2528, %v2822
    %v2841 = vadd.f32 %v2529, %v2824
    %v2842 = vadd.f32 %v2530, %v2826
    %v2843 = vmul.f32 %v2607, 0.26601171
    %v2844 = vmul.f32 %v2608, 0.26601171
    %v2845 = vmul.f32 %v2609, 0.26601171
    %v2846 = vmul.f32 %v2610, 0.26601171
    %v2847 = vmul.f32 %v2611, 0.26601171
    %v2848 = vmul.f32 %v2612, 0.26601171
    %v2849 = vmul.f32 %v2613, 0.26601171
    %v2850 = vmul.f32 %v2614, 0.26601171
    %v2851 = vmul.f32 %v2655, 0.26601171
    %v2852 = vmul.f32 %v2656, 0.26601171
    %v2853 = vmul.f32 %v2657, 0.26601171
    %v2854 = vmul.f32 %v2658, 0.26601171
    %v2855 = vmul.f32 %v2659, 0.26601171
    %v2856 = vmul.f32 %v2660, 0.26601171
    %v2857 = vmul.f32 %v2661, 0.26601171
    %v2858 = vmul.f32 %v2662, 0.26601171
    %v2859 = vmul.f32 %v2715, 0.26601171
    %v2860 = vmul.f32 %v2716, 0.26601171
    %v2861 = vmul.f32 %v2717, 0.26601171
    %v2862 = vmul.f32 %v2718, 0.26601171
    %v2863 = vmul.f32 %v2719, 0.26601171
    %v2864 = vmul.f32 %v2720, 0.26601171
    %v2865 = vmul.f32 %v2721, 0.26601171
    %v2866 = vmul.f32 %v2722, 0.26601171
    %v2867 = vmul.f32 %v2775, 0.26601171
    %v2868 = vmul.f32 %v2776, 0.26601171
    %v2869 = vmul.f32 %v2777, 0.26601171
    %v2870 = vmul.f32 %v2778, 0.26601171
    %v2871 = vmul.f32 %v2779, 0.26601171
    %v2872 = vmul.f32 %v2780, 0.26601171
    %v2873 = vmul.f32 %v2781, 0.26601171
    %v2874 = vmul.f32 %v2782, 0.26601171
    %v2875 = vmul.f32 %v2835, 0.26601171
    %v2876 = vmul.f32 %v2836, 0.26601171
    %v2877 = vmul.f32 %v2837, 0.26601171
    %v2878 = vmul.f32 %v2838, 0.26601171
    %v2879 = vmul.f32 %v2839, 0.26601171
    %v2880 = vmul.f32 %v2840, 0.26601171
    %v2881 = vmul.f32 %v2841, 0.26601171
    %v2882 = vmul.f32 %v2842, 0.26601171
    %2891 = vrot.lane.b32.xlu0 %v2607, 118
    %v2892 = vpop.permute.xlu0 %2891
    %2893 = vrot.lane.b32.xlu0 %v2608, 118
    %v2894 = vpop.permute.xlu0 %2893
    %2895 = vrot.lane.b32.xlu0 %v2609, 118
    %v2896 = vpop.permute.xlu0 %2895
    %2897 = vrot.lane.b32.xlu0 %v2610, 118
    %v2898 = vpop.permute.xlu0 %2897
    %2899 = vrot.lane.b32.xlu0 %v2611, 118
    %v2900 = vpop.permute.xlu0 %2899
    %2901 = vrot.lane.b32.xlu0 %v2612, 118
    %v2902 = vpop.permute.xlu0 %2901
    %2903 = vrot.lane.b32.xlu0 %v2613, 118
    %v2904 = vpop.permute.xlu0 %2903
    %2905 = vrot.lane.b32.xlu0 %v2614, 118
    %v2906 = vpop.permute.xlu0 %2905
    %vm2907 = vcmask 965632
    %v2908 = vsel %vm2907, %v2892, %v2894
    %v2909 = vsel %vm2907, %v2896, %v2898
    %v2910 = vsel %vm2907, %v2900, %v2902
    %v2911 = vsel %vm2907, %v2904, %v2906
    %v2916 = vadd.f32 %v2607, %v2908
    %v2917 = vadd.f32 %v2609, %v2909
    %v2918 = vadd.f32 %v2611, %v2910
    %v2919 = vadd.f32 %v2613, %v2911
    %v2920 = vmul.f32 %v2916, 0.0010283801
    %v2921 = vmul.f32 %v2917, 0.0010283801
    %v2922 = vmul.f32 %v2918, 0.0010283801
    %v2923 = vmul.f32 %v2919, 0.0010283801
    %2928 = vrot.lane.b32.xlu0 %v2920, 5
    %v2929 = vpop.permute.xlu0 %2928
    %2930 = vrot.lane.b32.xlu0 %v2921, 5
    %v2931 = vpop.permute.xlu0 %2930
    %2932 = vrot.lane.b32.xlu0 %v2922, 5
    %v2933 = vpop.permute.xlu0 %2932
    %2934 = vrot.lane.b32.xlu0 %v2923, 5
    %v2935 = vpop.permute.xlu0 %2934
    %v2940 = vadd.f32 %v2843, %v2929
    %v2941 = vadd.f32 %v2844, %v2929
    %v2942 = vadd.f32 %v2845, %v2931
    %v2943 = vadd.f32 %v2846, %v2931
    %v2944 = vadd.f32 %v2847, %v2933
    %v2945 = vadd.f32 %v2848, %v2933
    %v2946 = vadd.f32 %v2849, %v2935
    %v2947 = vadd.f32 %v2850, %v2935
    %2956 = vrot.lane.b32.xlu0 %v2655, 118
    %v2957 = vpop.permute.xlu0 %2956
    %2958 = vrot.lane.b32.xlu0 %v2656, 118
    %v2959 = vpop.permute.xlu0 %2958
    %2960 = vrot.lane.b32.xlu0 %v2657, 118
    %v2961 = vpop.permute.xlu0 %2960
    %2962 = vrot.lane.b32.xlu0 %v2658, 118
    %v2963 = vpop.permute.xlu0 %2962
    %2964 = vrot.lane.b32.xlu0 %v2659, 118
    %v2965 = vpop.permute.xlu0 %2964
    %2966 = vrot.lane.b32.xlu0 %v2660, 118
    %v2967 = vpop.permute.xlu0 %2966
    %2968 = vrot.lane.b32.xlu0 %v2661, 118
    %v2969 = vpop.permute.xlu0 %2968
    %2970 = vrot.lane.b32.xlu0 %v2662, 118
    %v2971 = vpop.permute.xlu0 %2970
    %v2972 = vsel %vm2907, %v2957, %v2959
    %v2973 = vsel %vm2907, %v2961, %v2963
    %v2974 = vsel %vm2907, %v2965, %v2967
    %v2975 = vsel %vm2907, %v2969, %v2971
    %v2980 = vadd.f32 %v2655, %v2972
    %v2981 = vadd.f32 %v2657, %v2973
    %v2982 = vadd.f32 %v2659, %v2974
    %v2983 = vadd.f32 %v2661, %v2975
    %v2984 = vmul.f32 %v2980, 0.0010283801
    %v2985 = vmul.f32 %v2981, 0.0010283801
    %v2986 = vmul.f32 %v2982, 0.0010283801
    %v2987 = vmul.f32 %v2983, 0.0010283801
    %2992 = vrot.lane.b32.xlu0 %v2984, 5
    %v2993 = vpop.permute.xlu0 %2992
    %2994 = vrot.lane.b32.xlu0 %v2985, 5
    %v2995 = vpop.permute.xlu0 %2994
    %2996 = vrot.lane.b32.xlu0 %v2986, 5
    %v2997 = vpop.permute.xlu0 %2996
    %2998 = vrot.lane.b32.xlu0 %v2987, 5
    %v2999 = vpop.permute.xlu0 %2998
    %v3004 = vadd.f32 %v2851, %v2993
    %v3005 = vadd.f32 %v2852, %v2993
    %v3006 = vadd.f32 %v2853, %v2995
    %v3007 = vadd.f32 %v2854, %v2995
    %v3008 = vadd.f32 %v2855, %v2997
    %v3009 = vadd.f32 %v2856, %v2997
    %v3010 = vadd.f32 %v2857, %v2999
    %v3011 = vadd.f32 %v2858, %v2999
    %3020 = vrot.lane.b32.xlu0 %v2715, 118
    %v3021 = vpop.permute.xlu0 %3020
    %3022 = vrot.lane.b32.xlu0 %v2716, 118
    %v3023 = vpop.permute.xlu0 %3022
    %3024 = vrot.lane.b32.xlu0 %v2717, 118
    %v3025 = vpop.permute.xlu0 %3024
    %3026 = vrot.lane.b32.xlu0 %v2718, 118
    %v3027 = vpop.permute.xlu0 %3026
    %3028 = vrot.lane.b32.xlu0 %v2719, 118
    %v3029 = vpop.permute.xlu0 %3028
    %3030 = vrot.lane.b32.xlu0 %v2720, 118
    %v3031 = vpop.permute.xlu0 %3030
    %3032 = vrot.lane.b32.xlu0 %v2721, 118
    %v3033 = vpop.permute.xlu0 %3032
    %3034 = vrot.lane.b32.xlu0 %v2722, 118
    %v3035 = vpop.permute.xlu0 %3034
    %v3036 = vsel %vm2907, %v3021, %v3023
    %v3037 = vsel %vm2907, %v3025, %v3027
    %v3038 = vsel %vm2907, %v3029, %v3031
    %v3039 = vsel %vm2907, %v3033, %v3035
    %v3044 = vadd.f32 %v2715, %v3036
    %v3045 = vadd.f32 %v2717, %v3037
    %v3046 = vadd.f32 %v2719, %v3038
    %v3047 = vadd.f32 %v2721, %v3039
    %v3048 = vmul.f32 %v3044, 0.0010283801
    %v3049 = vmul.f32 %v3045, 0.0010283801
    %v3050 = vmul.f32 %v3046, 0.0010283801
    %v3051 = vmul.f32 %v3047, 0.0010283801
    %3056 = vrot.lane.b32.xlu0 %v3048, 5
    %v3057 = vpop.permute.xlu0 %3056
    %3058 = vrot.lane.b32.xlu0 %v3049, 5
    %v3059 = vpop.permute.xlu0 %3058
    %3060 = vrot.lane.b32.xlu0 %v3050, 5
    %v3061 = vpop.permute.xlu0 %3060
    %3062 = vrot.lane.b32.xlu0 %v3051, 5
    %v3063 = vpop.permute.xlu0 %3062
    %v3068 = vadd.f32 %v2859, %v3057
    %v3069 = vadd.f32 %v2860, %v3057
    %v3070 = vadd.f32 %v2861, %v3059
    %v3071 = vadd.f32 %v2862, %v3059
    %v3072 = vadd.f32 %v2863, %v3061
    %v3073 = vadd.f32 %v2864, %v3061
    %v3074 = vadd.f32 %v2865, %v3063
    %v3075 = vadd.f32 %v2866, %v3063
    %3084 = vrot.lane.b32.xlu0 %v2775, 118
    %v3085 = vpop.permute.xlu0 %3084
    %3086 = vrot.lane.b32.xlu0 %v2776, 118
    %v3087 = vpop.permute.xlu0 %3086
    %3088 = vrot.lane.b32.xlu0 %v2777, 118
    %v3089 = vpop.permute.xlu0 %3088
    %3090 = vrot.lane.b32.xlu0 %v2778, 118
    %v3091 = vpop.permute.xlu0 %3090
    %3092 = vrot.lane.b32.xlu0 %v2779, 118
    %v3093 = vpop.permute.xlu0 %3092
    %3094 = vrot.lane.b32.xlu0 %v2780, 118
    %v3095 = vpop.permute.xlu0 %3094
    %3096 = vrot.lane.b32.xlu0 %v2781, 118
    %v3097 = vpop.permute.xlu0 %3096
    %3098 = vrot.lane.b32.xlu0 %v2782, 118
    %v3099 = vpop.permute.xlu0 %3098
    %v3100 = vsel %vm2907, %v3085, %v3087
    %v3101 = vsel %vm2907, %v3089, %v3091
    %v3102 = vsel %vm2907, %v3093, %v3095
    %v3103 = vsel %vm2907, %v3097, %v3099
    %v3108 = vadd.f32 %v2775, %v3100
    %v3109 = vadd.f32 %v2777, %v3101
    %v3110 = vadd.f32 %v2779, %v3102
    %v3111 = vadd.f32 %v2781, %v3103
    %v3112 = vmul.f32 %v3108, 0.0010283801
    %v3113 = vmul.f32 %v3109, 0.0010283801
    %v3114 = vmul.f32 %v3110, 0.0010283801
    %v3115 = vmul.f32 %v3111, 0.0010283801
    %3120 = vrot.lane.b32.xlu0 %v3112, 5
    %v3121 = vpop.permute.xlu0 %3120
    %3122 = vrot.lane.b32.xlu0 %v3113, 5
    %v3123 = vpop.permute.xlu0 %3122
    %3124 = vrot.lane.b32.xlu0 %v3114, 5
    %v3125 = vpop.permute.xlu0 %3124
    %3126 = vrot.lane.b32.xlu0 %v3115, 5
    %v3127 = vpop.permute.xlu0 %3126
    %v3132 = vadd.f32 %v2867, %v3121
    %v3133 = vadd.f32 %v2868, %v3121
    %v3134 = vadd.f32 %v2869, %v3123
    %v3135 = vadd.f32 %v2870, %v3123
    %v3136 = vadd.f32 %v2871, %v3125
    %v3137 = vadd.f32 %v2872, %v3125
    %v3138 = vadd.f32 %v2873, %v3127
    %v3139 = vadd.f32 %v2874, %v3127
    %3148 = vrot.lane.b32.xlu0 %v2835, 118
    %v3149 = vpop.permute.xlu0 %3148
    %3150 = vrot.lane.b32.xlu0 %v2836, 118
    %v3151 = vpop.permute.xlu0 %3150
    %3152 = vrot.lane.b32.xlu0 %v2837, 118
    %v3153 = vpop.permute.xlu0 %3152
    %3154 = vrot.lane.b32.xlu0 %v2838, 118
    %v3155 = vpop.permute.xlu0 %3154
    %3156 = vrot.lane.b32.xlu0 %v2839, 118
    %v3157 = vpop.permute.xlu0 %3156
    %3158 = vrot.lane.b32.xlu0 %v2840, 118
    %v3159 = vpop.permute.xlu0 %3158
    %3160 = vrot.lane.b32.xlu0 %v2841, 118
    %v3161 = vpop.permute.xlu0 %3160
    %3162 = vrot.lane.b32.xlu0 %v2842, 118
    %v3163 = vpop.permute.xlu0 %3162
    %v3164 = vsel %vm2907, %v3149, %v3151
    %v3165 = vsel %vm2907, %v3153, %v3155
    %v3166 = vsel %vm2907, %v3157, %v3159
    %v3167 = vsel %vm2907, %v3161, %v3163
    %v3172 = vadd.f32 %v2835, %v3164
    %v3173 = vadd.f32 %v2837, %v3165
    %v3174 = vadd.f32 %v2839, %v3166
    %v3175 = vadd.f32 %v2841, %v3167
    %v3176 = vmul.f32 %v3172, 0.0010283801
    %v3177 = vmul.f32 %v3173, 0.0010283801
    %v3178 = vmul.f32 %v3174, 0.0010283801
    %v3179 = vmul.f32 %v3175, 0.0010283801
    %3184 = vrot.lane.b32.xlu0 %v3176, 5
    %v3185 = vpop.permute.xlu0 %3184
    %3186 = vrot.lane.b32.xlu0 %v3177, 5
    %v3187 = vpop.permute.xlu0 %3186
    %3188 = vrot.lane.b32.xlu0 %v3178, 5
    %v3189 = vpop.permute.xlu0 %3188
    %3190 = vrot.lane.b32.xlu0 %v3179, 5
    %v3191 = vpop.permute.xlu0 %3190
    %v3196 = vadd.f32 %v2875, %v3185
    %v3197 = vadd.f32 %v2876, %v3185
    %v3198 = vadd.f32 %v2877, %v3187
    %v3199 = vadd.f32 %v2878, %v3187
    %v3200 = vadd.f32 %v2879, %v3189
    %v3201 = vadd.f32 %v2880, %v3189
    %v3202 = vadd.f32 %v2881, %v3191
    %v3203 = vadd.f32 %v2882, %v3191
    %3204 = vrot.lane.b32.xlu0 %v2607, 120
    %v3205 = vpop.permute.xlu0 %3204
    %3206 = vrot.lane.b32.xlu0 %v2608, 120
    %v3207 = vpop.permute.xlu0 %3206
    %3208 = vrot.lane.b32.xlu0 %v2609, 120
    %v3209 = vpop.permute.xlu0 %3208
    %3210 = vrot.lane.b32.xlu0 %v2610, 120
    %v3211 = vpop.permute.xlu0 %3210
    %3212 = vrot.lane.b32.xlu0 %v2611, 120
    %v3213 = vpop.permute.xlu0 %3212
    %3214 = vrot.lane.b32.xlu0 %v2612, 120
    %v3215 = vpop.permute.xlu0 %3214
    %3216 = vrot.lane.b32.xlu0 %v2613, 120
    %v3217 = vpop.permute.xlu0 %3216
    %3218 = vrot.lane.b32.xlu0 %v2614, 120
    %v3219 = vpop.permute.xlu0 %3218
    %vm3220 = vcmask 982016
    %v3221 = vsel %vm3220, %v3205, %v3207
    %v3222 = vsel %vm3220, %v3209, %v3211
    %v3223 = vsel %vm3220, %v3213, %v3215
    %v3224 = vsel %vm3220, %v3217, %v3219
    %v3233 = vadd.f32 %v2607, %v3221
    %v3234 = vadd.f32 %v2608, %v3207
    %v3235 = vadd.f32 %v2609, %v3222
    %v3236 = vadd.f32 %v2610, %v3211
    %v3237 = vadd.f32 %v2611, %v3223
    %v3238 = vadd.f32 %v2612, %v3215
    %v3239 = vadd.f32 %v2613, %v3224
    %v3240 = vadd.f32 %v2614, %v3219
    %v3241 = vmul.f32 %v3233, 0.007598758
    %v3242 = vmul.f32 %v3234, 0.007598758
    %v3243 = vmul.f32 %v3235, 0.007598758
    %v3244 = vmul.f32 %v3236, 0.007598758
    %v3245 = vmul.f32 %v3237, 0.007598758
    %v3246 = vmul.f32 %v3238, 0.007598758
    %v3247 = vmul.f32 %v3239, 0.007598758
    %v3248 = vmul.f32 %v3240, 0.007598758
    %3257 = vrot.lane.b32.xlu0 %v3241, 4
    %v3258 = vpop.permute.xlu0 %3257
    %3259 = vrot.lane.b32.xlu0 %v3242, 4
    %v3260 = vpop.permute.xlu0 %3259
    %3261 = vrot.lane.b32.xlu0 %v3243, 4
    %v3262 = vpop.permute.xlu0 %3261
    %3263 = vrot.lane.b32.xlu0 %v3244, 4
    %v3264 = vpop.permute.xlu0 %3263
    %3265 = vrot.lane.b32.xlu0 %v3245, 4
    %v3266 = vpop.permute.xlu0 %3265
    %3267 = vrot.lane.b32.xlu0 %v3246, 4
    %v3268 = vpop.permute.xlu0 %3267
    %3269 = vrot.lane.b32.xlu0 %v3247, 4
    %v3270 = vpop.permute.xlu0 %3269
    %3271 = vrot.lane.b32.xlu0 %v3248, 4
    %v3272 = vpop.permute.xlu0 %3271
    %vm3273 = vcmask 31744
    %v3274 = vsel %vm3273, %v3258, %v3260
    %v3275 = vsel %vm3273, %v3262, %v3264
    %v3276 = vsel %vm3273, %v3266, %v3268
    %v3277 = vsel %vm3273, %v3270, %v3272
    %v3286 = vadd.f32 %v2940, %v3258
    %v3287 = vadd.f32 %v2941, %v3274
    %v3288 = vadd.f32 %v2942, %v3262
    %v3289 = vadd.f32 %v2943, %v3275
    %v3290 = vadd.f32 %v2944, %v3266
    %v3291 = vadd.f32 %v2945, %v3276
    %v3292 = vadd.f32 %v2946, %v3270
    %v3293 = vadd.f32 %v2947, %v3277
    %3294 = vrot.lane.b32.xlu0 %v2655, 120
    %v3295 = vpop.permute.xlu0 %3294
    %3296 = vrot.lane.b32.xlu0 %v2656, 120
    %v3297 = vpop.permute.xlu0 %3296
    %3298 = vrot.lane.b32.xlu0 %v2657, 120
    %v3299 = vpop.permute.xlu0 %3298
    %3300 = vrot.lane.b32.xlu0 %v2658, 120
    %v3301 = vpop.permute.xlu0 %3300
    %3302 = vrot.lane.b32.xlu0 %v2659, 120
    %v3303 = vpop.permute.xlu0 %3302
    %3304 = vrot.lane.b32.xlu0 %v2660, 120
    %v3305 = vpop.permute.xlu0 %3304
    %3306 = vrot.lane.b32.xlu0 %v2661, 120
    %v3307 = vpop.permute.xlu0 %3306
    %3308 = vrot.lane.b32.xlu0 %v2662, 120
    %v3309 = vpop.permute.xlu0 %3308
    %v3310 = vsel %vm3220, %v3295, %v3297
    %v3311 = vsel %vm3220, %v3299, %v3301
    %v3312 = vsel %vm3220, %v3303, %v3305
    %v3313 = vsel %vm3220, %v3307, %v3309
    %v3322 = vadd.f32 %v2655, %v3310
    %v3323 = vadd.f32 %v2656, %v3297
    %v3324 = vadd.f32 %v2657, %v3311
    %v3325 = vadd.f32 %v2658, %v3301
    %v3326 = vadd.f32 %v2659, %v3312
    %v3327 = vadd.f32 %v2660, %v3305
    %v3328 = vadd.f32 %v2661, %v3313
    %v3329 = vadd.f32 %v2662, %v3309
    %v3330 = vmul.f32 %v3322, 0.007598758
    %v3331 = vmul.f32 %v3323, 0.007598758
    %v3332 = vmul.f32 %v3324, 0.007598758
    %v3333 = vmul.f32 %v3325, 0.007598758
    %v3334 = vmul.f32 %v3326, 0.007598758
    %v3335 = vmul.f32 %v3327, 0.007598758
    %v3336 = vmul.f32 %v3328, 0.007598758
    %v3337 = vmul.f32 %v3329, 0.007598758
    %3346 = vrot.lane.b32.xlu0 %v3330, 4
    %v3347 = vpop.permute.xlu0 %3346
    %3348 = vrot.lane.b32.xlu0 %v3331, 4
    %v3349 = vpop.permute.xlu0 %3348
    %3350 = vrot.lane.b32.xlu0 %v3332, 4
    %v3351 = vpop.permute.xlu0 %3350
    %3352 = vrot.lane.b32.xlu0 %v3333, 4
    %v3353 = vpop.permute.xlu0 %3352
    %3354 = vrot.lane.b32.xlu0 %v3334, 4
    %v3355 = vpop.permute.xlu0 %3354
    %3356 = vrot.lane.b32.xlu0 %v3335, 4
    %v3357 = vpop.permute.xlu0 %3356
    %3358 = vrot.lane.b32.xlu0 %v3336, 4
    %v3359 = vpop.permute.xlu0 %3358
    %3360 = vrot.lane.b32.xlu0 %v3337, 4
    %v3361 = vpop.permute.xlu0 %3360
    %v3362 = vsel %vm3273, %v3347, %v3349
    %v3363 = vsel %vm3273, %v3351, %v3353
    %v3364 = vsel %vm3273, %v3355, %v3357
    %v3365 = vsel %vm3273, %v3359, %v3361
    %v3374 = vadd.f32 %v3004, %v3347
    %v3375 = vadd.f32 %v3005, %v3362
    %v3376 = vadd.f32 %v3006, %v3351
    %v3377 = vadd.f32 %v3007, %v3363
    %v3378 = vadd.f32 %v3008, %v3355
    %v3379 = vadd.f32 %v3009, %v3364
    %v3380 = vadd.f32 %v3010, %v3359
    %v3381 = vadd.f32 %v3011, %v3365
    %3382 = vrot.lane.b32.xlu0 %v2715, 120
    %v3383 = vpop.permute.xlu0 %3382
    %3384 = vrot.lane.b32.xlu0 %v2716, 120
    %v3385 = vpop.permute.xlu0 %3384
    %3386 = vrot.lane.b32.xlu0 %v2717, 120
    %v3387 = vpop.permute.xlu0 %3386
    %3388 = vrot.lane.b32.xlu0 %v2718, 120
    %v3389 = vpop.permute.xlu0 %3388
    %3390 = vrot.lane.b32.xlu0 %v2719, 120
    %v3391 = vpop.permute.xlu0 %3390
    %3392 = vrot.lane.b32.xlu0 %v2720, 120
    %v3393 = vpop.permute.xlu0 %3392
    %3394 = vrot.lane.b32.xlu0 %v2721, 120
    %v3395 = vpop.permute.xlu0 %3394
    %3396 = vrot.lane.b32.xlu0 %v2722, 120
    %v3397 = vpop.permute.xlu0 %3396
    %v3398 = vsel %vm3220, %v3383, %v3385
    %v3399 = vsel %vm3220, %v3387, %v3389
    %v3400 = vsel %vm3220, %v3391, %v3393
    %v3401 = vsel %vm3220, %v3395, %v3397
    %v3410 = vadd.f32 %v2715, %v3398
    %v3411 = vadd.f32 %v2716, %v3385
    %v3412 = vadd.f32 %v2717, %v3399
    %v3413 = vadd.f32 %v2718, %v3389
    %v3414 = vadd.f32 %v2719, %v3400
    %v3415 = vadd.f32 %v2720, %v3393
    %v3416 = vadd.f32 %v2721, %v3401
    %v3417 = vadd.f32 %v2722, %v3397
    %v3418 = vmul.f32 %v3410, 0.007598758
    %v3419 = vmul.f32 %v3411, 0.007598758
    %v3420 = vmul.f32 %v3412, 0.007598758
    %v3421 = vmul.f32 %v3413, 0.007598758
    %v3422 = vmul.f32 %v3414, 0.007598758
    %v3423 = vmul.f32 %v3415, 0.007598758
    %v3424 = vmul.f32 %v3416, 0.007598758
    %v3425 = vmul.f32 %v3417, 0.007598758
    %3434 = vrot.lane.b32.xlu0 %v3418, 4
    %v3435 = vpop.permute.xlu0 %3434
    %3436 = vrot.lane.b32.xlu0 %v3419, 4
    %v3437 = vpop.permute.xlu0 %3436
    %3438 = vrot.lane.b32.xlu0 %v3420, 4
    %v3439 = vpop.permute.xlu0 %3438
    %3440 = vrot.lane.b32.xlu0 %v3421, 4
    %v3441 = vpop.permute.xlu0 %3440
    %3442 = vrot.lane.b32.xlu0 %v3422, 4
    %v3443 = vpop.permute.xlu0 %3442
    %3444 = vrot.lane.b32.xlu0 %v3423, 4
    %v3445 = vpop.permute.xlu0 %3444
    %3446 = vrot.lane.b32.xlu0 %v3424, 4
    %v3447 = vpop.permute.xlu0 %3446
    %3448 = vrot.lane.b32.xlu0 %v3425, 4
    %v3449 = vpop.permute.xlu0 %3448
    %v3450 = vsel %vm3273, %v3435, %v3437
    %v3451 = vsel %vm3273, %v3439, %v3441
    %v3452 = vsel %vm3273, %v3443, %v3445
    %v3453 = vsel %vm3273, %v3447, %v3449
    %v3462 = vadd.f32 %v3068, %v3435
    %v3463 = vadd.f32 %v3069, %v3450
    %v3464 = vadd.f32 %v3070, %v3439
    %v3465 = vadd.f32 %v3071, %v3451
    %v3466 = vadd.f32 %v3072, %v3443
    %v3467 = vadd.f32 %v3073, %v3452
    %v3468 = vadd.f32 %v3074, %v3447
    %v3469 = vadd.f32 %v3075, %v3453
    %3470 = vrot.lane.b32.xlu0 %v2775, 120
    %v3471 = vpop.permute.xlu0 %3470
    %3472 = vrot.lane.b32.xlu0 %v2776, 120
    %v3473 = vpop.permute.xlu0 %3472
    %3474 = vrot.lane.b32.xlu0 %v2777, 120
    %v3475 = vpop.permute.xlu0 %3474
    %3476 = vrot.lane.b32.xlu0 %v2778, 120
    %v3477 = vpop.permute.xlu0 %3476
    %3478 = vrot.lane.b32.xlu0 %v2779, 120
    %v3479 = vpop.permute.xlu0 %3478
    %3480 = vrot.lane.b32.xlu0 %v2780, 120
    %v3481 = vpop.permute.xlu0 %3480
    %3482 = vrot.lane.b32.xlu0 %v2781, 120
    %v3483 = vpop.permute.xlu0 %3482
    %3484 = vrot.lane.b32.xlu0 %v2782, 120
    %v3485 = vpop.permute.xlu0 %3484
    %v3486 = vsel %vm3220, %v3471, %v3473
    %v3487 = vsel %vm3220, %v3475, %v3477
    %v3488 = vsel %vm3220, %v3479, %v3481
    %v3489 = vsel %vm3220, %v3483, %v3485
    %v3498 = vadd.f32 %v2775, %v3486
    %v3499 = vadd.f32 %v2776, %v3473
    %v3500 = vadd.f32 %v2777, %v3487
    %v3501 = vadd.f32 %v2778, %v3477
    %v3502 = vadd.f32 %v2779, %v3488
    %v3503 = vadd.f32 %v2780, %v3481
    %v3504 = vadd.f32 %v2781, %v3489
    %v3505 = vadd.f32 %v2782, %v3485
    %v3506 = vmul.f32 %v3498, 0.007598758
    %v3507 = vmul.f32 %v3499, 0.007598758
    %v3508 = vmul.f32 %v3500, 0.007598758
    %v3509 = vmul.f32 %v3501, 0.007598758
    %v3510 = vmul.f32 %v3502, 0.007598758
    %v3511 = vmul.f32 %v3503, 0.007598758
    %v3512 = vmul.f32 %v3504, 0.007598758
    %v3513 = vmul.f32 %v3505, 0.007598758
    %3522 = vrot.lane.b32.xlu0 %v3506, 4
    %v3523 = vpop.permute.xlu0 %3522
    %3524 = vrot.lane.b32.xlu0 %v3507, 4
    %v3525 = vpop.permute.xlu0 %3524
    %3526 = vrot.lane.b32.xlu0 %v3508, 4
    %v3527 = vpop.permute.xlu0 %3526
    %3528 = vrot.lane.b32.xlu0 %v3509, 4
    %v3529 = vpop.permute.xlu0 %3528
    %3530 = vrot.lane.b32.xlu0 %v3510, 4
    %v3531 = vpop.permute.xlu0 %3530
    %3532 = vrot.lane.b32.xlu0 %v3511, 4
    %v3533 = vpop.permute.xlu0 %3532
    %3534 = vrot.lane.b32.xlu0 %v3512, 4
    %v3535 = vpop.permute.xlu0 %3534
    %3536 = vrot.lane.b32.xlu0 %v3513, 4
    %v3537 = vpop.permute.xlu0 %3536
    %v3538 = vsel %vm3273, %v3523, %v3525
    %v3539 = vsel %vm3273, %v3527, %v3529
    %v3540 = vsel %vm3273, %v3531, %v3533
    %v3541 = vsel %vm3273, %v3535, %v3537
    %v3550 = vadd.f32 %v3132, %v3523
    %v3551 = vadd.f32 %v3133, %v3538
    %v3552 = vadd.f32 %v3134, %v3527
    %v3553 = vadd.f32 %v3135, %v3539
    %v3554 = vadd.f32 %v3136, %v3531
    %v3555 = vadd.f32 %v3137, %v3540
    %v3556 = vadd.f32 %v3138, %v3535
    %v3557 = vadd.f32 %v3139, %v3541
    %3558 = vrot.lane.b32.xlu0 %v2835, 120
    %v3559 = vpop.permute.xlu0 %3558
    %3560 = vrot.lane.b32.xlu0 %v2836, 120
    %v3561 = vpop.permute.xlu0 %3560
    %3562 = vrot.lane.b32.xlu0 %v2837, 120
    %v3563 = vpop.permute.xlu0 %3562
    %3564 = vrot.lane.b32.xlu0 %v2838, 120
    %v3565 = vpop.permute.xlu0 %3564
    %3566 = vrot.lane.b32.xlu0 %v2839, 120
    %v3567 = vpop.permute.xlu0 %3566
    %3568 = vrot.lane.b32.xlu0 %v2840, 120
    %v3569 = vpop.permute.xlu0 %3568
    %3570 = vrot.lane.b32.xlu0 %v2841, 120
    %v3571 = vpop.permute.xlu0 %3570
    %3572 = vrot.lane.b32.xlu0 %v2842, 120
    %v3573 = vpop.permute.xlu0 %3572
    %v3574 = vsel %vm3220, %v3559, %v3561
    %v3575 = vsel %vm3220, %v3563, %v3565
    %v3576 = vsel %vm3220, %v3567, %v3569
    %v3577 = vsel %vm3220, %v3571, %v3573
    %v3586 = vadd.f32 %v2835, %v3574
    %v3587 = vadd.f32 %v2836, %v3561
    %v3588 = vadd.f32 %v2837, %v3575
    %v3589 = vadd.f32 %v2838, %v3565
    %v3590 = vadd.f32 %v2839, %v3576
    %v3591 = vadd.f32 %v2840, %v3569
    %v3592 = vadd.f32 %v2841, %v3577
    %v3593 = vadd.f32 %v2842, %v3573
    %v3594 = vmul.f32 %v3586, 0.007598758
    %v3595 = vmul.f32 %v3587, 0.007598758
    %v3596 = vmul.f32 %v3588, 0.007598758
    %v3597 = vmul.f32 %v3589, 0.007598758
    %v3598 = vmul.f32 %v3590, 0.007598758
    %v3599 = vmul.f32 %v3591, 0.007598758
    %v3600 = vmul.f32 %v3592, 0.007598758
    %v3601 = vmul.f32 %v3593, 0.007598758
    %3610 = vrot.lane.b32.xlu0 %v3594, 4
    %v3611 = vpop.permute.xlu0 %3610
    %3612 = vrot.lane.b32.xlu0 %v3595, 4
    %v3613 = vpop.permute.xlu0 %3612
    %3614 = vrot.lane.b32.xlu0 %v3596, 4
    %v3615 = vpop.permute.xlu0 %3614
    %3616 = vrot.lane.b32.xlu0 %v3597, 4
    %v3617 = vpop.permute.xlu0 %3616
    %3618 = vrot.lane.b32.xlu0 %v3598, 4
    %v3619 = vpop.permute.xlu0 %3618
    %3620 = vrot.lane.b32.xlu0 %v3599, 4
    %v3621 = vpop.permute.xlu0 %3620
    %3622 = vrot.lane.b32.xlu0 %v3600, 4
    %v3623 = vpop.permute.xlu0 %3622
    %3624 = vrot.lane.b32.xlu0 %v3601, 4
    %v3625 = vpop.permute.xlu0 %3624
    %v3626 = vsel %vm3273, %v3611, %v3613
    %v3627 = vsel %vm3273, %v3615, %v3617
    %v3628 = vsel %vm3273, %v3619, %v3621
    %v3629 = vsel %vm3273, %v3623, %v3625
    %v3638 = vadd.f32 %v3196, %v3611
    %v3639 = vadd.f32 %v3197, %v3626
    %v3640 = vadd.f32 %v3198, %v3615
    %v3641 = vadd.f32 %v3199, %v3627
    %v3642 = vadd.f32 %v3200, %v3619
    %v3643 = vadd.f32 %v3201, %v3628
    %v3644 = vadd.f32 %v3202, %v3623
    %v3645 = vadd.f32 %v3203, %v3629
    %3646 = vrot.lane.b32.xlu0 %v2607, 122
    %v3647 = vpop.permute.xlu0 %3646
    %3648 = vrot.lane.b32.xlu0 %v2608, 122
    %v3649 = vpop.permute.xlu0 %3648
    %3650 = vrot.lane.b32.xlu0 %v2609, 122
    %v3651 = vpop.permute.xlu0 %3650
    %3652 = vrot.lane.b32.xlu0 %v2610, 122
    %v3653 = vpop.permute.xlu0 %3652
    %3654 = vrot.lane.b32.xlu0 %v2611, 122
    %v3655 = vpop.permute.xlu0 %3654
    %3656 = vrot.lane.b32.xlu0 %v2612, 122
    %v3657 = vpop.permute.xlu0 %3656
    %3658 = vrot.lane.b32.xlu0 %v2613, 122
    %v3659 = vpop.permute.xlu0 %3658
    %3660 = vrot.lane.b32.xlu0 %v2614, 122
    %v3661 = vpop.permute.xlu0 %3660
    %vm3662 = vcmask 998400
    %v3663 = vsel %vm3662, %v3647, %v3649
    %v3664 = vsel %vm3662, %v3651, %v3653
    %v3665 = vsel %vm3662, %v3655, %v3657
    %v3666 = vsel %vm3662, %v3659, %v3661
    %v3675 = vadd.f32 %v2607, %v3663
    %v3676 = vadd.f32 %v2608, %v3649
    %v3677 = vadd.f32 %v2609, %v3664
    %v3678 = vadd.f32 %v2610, %v3653
    %v3679 = vadd.f32 %v2611, %v3665
    %v3680 = vadd.f32 %v2612, %v3657
    %v3681 = vadd.f32 %v2613, %v3666
    %v3682 = vadd.f32 %v2614, %v3661
    %v3683 = vmul.f32 %v3675, 0.036000773
    %v3684 = vmul.f32 %v3676, 0.036000773
    %v3685 = vmul.f32 %v3677, 0.036000773
    %v3686 = vmul.f32 %v3678, 0.036000773
    %v3687 = vmul.f32 %v3679, 0.036000773
    %v3688 = vmul.f32 %v3680, 0.036000773
    %v3689 = vmul.f32 %v3681, 0.036000773
    %v3690 = vmul.f32 %v3682, 0.036000773
    %3699 = vrot.lane.b32.xlu0 %v3683, 3
    %v3700 = vpop.permute.xlu0 %3699
    %3701 = vrot.lane.b32.xlu0 %v3684, 3
    %v3702 = vpop.permute.xlu0 %3701
    %3703 = vrot.lane.b32.xlu0 %v3685, 3
    %v3704 = vpop.permute.xlu0 %3703
    %3705 = vrot.lane.b32.xlu0 %v3686, 3
    %v3706 = vpop.permute.xlu0 %3705
    %3707 = vrot.lane.b32.xlu0 %v3687, 3
    %v3708 = vpop.permute.xlu0 %3707
    %3709 = vrot.lane.b32.xlu0 %v3688, 3
    %v3710 = vpop.permute.xlu0 %3709
    %3711 = vrot.lane.b32.xlu0 %v3689, 3
    %v3712 = vpop.permute.xlu0 %3711
    %3713 = vrot.lane.b32.xlu0 %v3690, 3
    %v3714 = vpop.permute.xlu0 %3713
    %vm3715 = vcmask 23552
    %v3716 = vsel %vm3715, %v3700, %v3702
    %v3717 = vsel %vm3715, %v3704, %v3706
    %v3718 = vsel %vm3715, %v3708, %v3710
    %v3719 = vsel %vm3715, %v3712, %v3714
    %v3728 = vadd.f32 %v3286, %v3700
    %v3729 = vadd.f32 %v3287, %v3716
    %v3730 = vadd.f32 %v3288, %v3704
    %v3731 = vadd.f32 %v3289, %v3717
    %v3732 = vadd.f32 %v3290, %v3708
    %v3733 = vadd.f32 %v3291, %v3718
    %v3734 = vadd.f32 %v3292, %v3712
    %v3735 = vadd.f32 %v3293, %v3719
    %3736 = vrot.lane.b32.xlu0 %v2655, 122
    %v3737 = vpop.permute.xlu0 %3736
    %3738 = vrot.lane.b32.xlu0 %v2656, 122
    %v3739 = vpop.permute.xlu0 %3738
    %3740 = vrot.lane.b32.xlu0 %v2657, 122
    %v3741 = vpop.permute.xlu0 %3740
    %3742 = vrot.lane.b32.xlu0 %v2658, 122
    %v3743 = vpop.permute.xlu0 %3742
    %3744 = vrot.lane.b32.xlu0 %v2659, 122
    %v3745 = vpop.permute.xlu0 %3744
    %3746 = vrot.lane.b32.xlu0 %v2660, 122
    %v3747 = vpop.permute.xlu0 %3746
    %3748 = vrot.lane.b32.xlu0 %v2661, 122
    %v3749 = vpop.permute.xlu0 %3748
    %3750 = vrot.lane.b32.xlu0 %v2662, 122
    %v3751 = vpop.permute.xlu0 %3750
    %v3752 = vsel %vm3662, %v3737, %v3739
    %v3753 = vsel %vm3662, %v3741, %v3743
    %v3754 = vsel %vm3662, %v3745, %v3747
    %v3755 = vsel %vm3662, %v3749, %v3751
    %v3764 = vadd.f32 %v2655, %v3752
    %v3765 = vadd.f32 %v2656, %v3739
    %v3766 = vadd.f32 %v2657, %v3753
    %v3767 = vadd.f32 %v2658, %v3743
    %v3768 = vadd.f32 %v2659, %v3754
    %v3769 = vadd.f32 %v2660, %v3747
    %v3770 = vadd.f32 %v2661, %v3755
    %v3771 = vadd.f32 %v2662, %v3751
    %v3772 = vmul.f32 %v3764, 0.036000773
    %v3773 = vmul.f32 %v3765, 0.036000773
    %v3774 = vmul.f32 %v3766, 0.036000773
    %v3775 = vmul.f32 %v3767, 0.036000773
    %v3776 = vmul.f32 %v3768, 0.036000773
    %v3777 = vmul.f32 %v3769, 0.036000773
    %v3778 = vmul.f32 %v3770, 0.036000773
    %v3779 = vmul.f32 %v3771, 0.036000773
    %3788 = vrot.lane.b32.xlu0 %v3772, 3
    %v3789 = vpop.permute.xlu0 %3788
    %3790 = vrot.lane.b32.xlu0 %v3773, 3
    %v3791 = vpop.permute.xlu0 %3790
    %3792 = vrot.lane.b32.xlu0 %v3774, 3
    %v3793 = vpop.permute.xlu0 %3792
    %3794 = vrot.lane.b32.xlu0 %v3775, 3
    %v3795 = vpop.permute.xlu0 %3794
    %3796 = vrot.lane.b32.xlu0 %v3776, 3
    %v3797 = vpop.permute.xlu0 %3796
    %3798 = vrot.lane.b32.xlu0 %v3777, 3
    %v3799 = vpop.permute.xlu0 %3798
    %3800 = vrot.lane.b32.xlu0 %v3778, 3
    %v3801 = vpop.permute.xlu0 %3800
    %3802 = vrot.lane.b32.xlu0 %v3779, 3
    %v3803 = vpop.permute.xlu0 %3802
    %v3804 = vsel %vm3715, %v3789, %v3791
    %v3805 = vsel %vm3715, %v3793, %v3795
    %v3806 = vsel %vm3715, %v3797, %v3799
    %v3807 = vsel %vm3715, %v3801, %v3803
    %v3816 = vadd.f32 %v3374, %v3789
    %v3817 = vadd.f32 %v3375, %v3804
    %v3818 = vadd.f32 %v3376, %v3793
    %v3819 = vadd.f32 %v3377, %v3805
    %v3820 = vadd.f32 %v3378, %v3797
    %v3821 = vadd.f32 %v3379, %v3806
    %v3822 = vadd.f32 %v3380, %v3801
    %v3823 = vadd.f32 %v3381, %v3807
    %3824 = vrot.lane.b32.xlu0 %v2715, 122
    %v3825 = vpop.permute.xlu0 %3824
    %3826 = vrot.lane.b32.xlu0 %v2716, 122
    %v3827 = vpop.permute.xlu0 %3826
    %3828 = vrot.lane.b32.xlu0 %v2717, 122
    %v3829 = vpop.permute.xlu0 %3828
    %3830 = vrot.lane.b32.xlu0 %v2718, 122
    %v3831 = vpop.permute.xlu0 %3830
    %3832 = vrot.lane.b32.xlu0 %v2719, 122
    %v3833 = vpop.permute.xlu0 %3832
    %3834 = vrot.lane.b32.xlu0 %v2720, 122
    %v3835 = vpop.permute.xlu0 %3834
    %3836 = vrot.lane.b32.xlu0 %v2721, 122
    %v3837 = vpop.permute.xlu0 %3836
    %3838 = vrot.lane.b32.xlu0 %v2722, 122
    %v3839 = vpop.permute.xlu0 %3838
    %v3840 = vsel %vm3662, %v3825, %v3827
    %v3841 = vsel %vm3662, %v3829, %v3831
    %v3842 = vsel %vm3662, %v3833, %v3835
    %v3843 = vsel %vm3662, %v3837, %v3839
    %v3852 = vadd.f32 %v2715, %v3840
    %v3853 = vadd.f32 %v2716, %v3827
    %v3854 = vadd.f32 %v2717, %v3841
    %v3855 = vadd.f32 %v2718, %v3831
    %v3856 = vadd.f32 %v2719, %v3842
    %v3857 = vadd.f32 %v2720, %v3835
    %v3858 = vadd.f32 %v2721, %v3843
    %v3859 = vadd.f32 %v2722, %v3839
    %v3860 = vmul.f32 %v3852, 0.036000773
    %v3861 = vmul.f32 %v3853, 0.036000773
    %v3862 = vmul.f32 %v3854, 0.036000773
    %v3863 = vmul.f32 %v3855, 0.036000773
    %v3864 = vmul.f32 %v3856, 0.036000773
    %v3865 = vmul.f32 %v3857, 0.036000773
    %v3866 = vmul.f32 %v3858, 0.036000773
    %v3867 = vmul.f32 %v3859, 0.036000773
    %3876 = vrot.lane.b32.xlu0 %v3860, 3
    %v3877 = vpop.permute.xlu0 %3876
    %3878 = vrot.lane.b32.xlu0 %v3861, 3
    %v3879 = vpop.permute.xlu0 %3878
    %3880 = vrot.lane.b32.xlu0 %v3862, 3
    %v3881 = vpop.permute.xlu0 %3880
    %3882 = vrot.lane.b32.xlu0 %v3863, 3
    %v3883 = vpop.permute.xlu0 %3882
    %3884 = vrot.lane.b32.xlu0 %v3864, 3
    %v3885 = vpop.permute.xlu0 %3884
    %3886 = vrot.lane.b32.xlu0 %v3865, 3
    %v3887 = vpop.permute.xlu0 %3886
    %3888 = vrot.lane.b32.xlu0 %v3866, 3
    %v3889 = vpop.permute.xlu0 %3888
    %3890 = vrot.lane.b32.xlu0 %v3867, 3
    %v3891 = vpop.permute.xlu0 %3890
    %v3892 = vsel %vm3715, %v3877, %v3879
    %v3893 = vsel %vm3715, %v3881, %v3883
    %v3894 = vsel %vm3715, %v3885, %v3887
    %v3895 = vsel %vm3715, %v3889, %v3891
    %v3904 = vadd.f32 %v3462, %v3877
    %v3905 = vadd.f32 %v3463, %v3892
    %v3906 = vadd.f32 %v3464, %v3881
    %v3907 = vadd.f32 %v3465, %v3893
    %v3908 = vadd.f32 %v3466, %v3885
    %v3909 = vadd.f32 %v3467, %v3894
    %v3910 = vadd.f32 %v3468, %v3889
    %v3911 = vadd.f32 %v3469, %v3895
    %3912 = vrot.lane.b32.xlu0 %v2775, 122
    %v3913 = vpop.permute.xlu0 %3912
    %3914 = vrot.lane.b32.xlu0 %v2776, 122
    %v3915 = vpop.permute.xlu0 %3914
    %3916 = vrot.lane.b32.xlu0 %v2777, 122
    %v3917 = vpop.permute.xlu0 %3916
    %3918 = vrot.lane.b32.xlu0 %v2778, 122
    %v3919 = vpop.permute.xlu0 %3918
    %3920 = vrot.lane.b32.xlu0 %v2779, 122
    %v3921 = vpop.permute.xlu0 %3920
    %3922 = vrot.lane.b32.xlu0 %v2780, 122
    %v3923 = vpop.permute.xlu0 %3922
    %3924 = vrot.lane.b32.xlu0 %v2781, 122
    %v3925 = vpop.permute.xlu0 %3924
    %3926 = vrot.lane.b32.xlu0 %v2782, 122
    %v3927 = vpop.permute.xlu0 %3926
    %v3928 = vsel %vm3662, %v3913, %v3915
    %v3929 = vsel %vm3662, %v3917, %v3919
    %v3930 = vsel %vm3662, %v3921, %v3923
    %v3931 = vsel %vm3662, %v3925, %v3927
    %v3940 = vadd.f32 %v2775, %v3928
    %v3941 = vadd.f32 %v2776, %v3915
    %v3942 = vadd.f32 %v2777, %v3929
    %v3943 = vadd.f32 %v2778, %v3919
    %v3944 = vadd.f32 %v2779, %v3930
    %v3945 = vadd.f32 %v2780, %v3923
    %v3946 = vadd.f32 %v2781, %v3931
    %v3947 = vadd.f32 %v2782, %v3927
    %v3948 = vmul.f32 %v3940, 0.036000773
    %v3949 = vmul.f32 %v3941, 0.036000773
    %v3950 = vmul.f32 %v3942, 0.036000773
    %v3951 = vmul.f32 %v3943, 0.036000773
    %v3952 = vmul.f32 %v3944, 0.036000773
    %v3953 = vmul.f32 %v3945, 0.036000773
    %v3954 = vmul.f32 %v3946, 0.036000773
    %v3955 = vmul.f32 %v3947, 0.036000773
    %3964 = vrot.lane.b32.xlu0 %v3948, 3
    %v3965 = vpop.permute.xlu0 %3964
    %3966 = vrot.lane.b32.xlu0 %v3949, 3
    %v3967 = vpop.permute.xlu0 %3966
    %3968 = vrot.lane.b32.xlu0 %v3950, 3
    %v3969 = vpop.permute.xlu0 %3968
    %3970 = vrot.lane.b32.xlu0 %v3951, 3
    %v3971 = vpop.permute.xlu0 %3970
    %3972 = vrot.lane.b32.xlu0 %v3952, 3
    %v3973 = vpop.permute.xlu0 %3972
    %3974 = vrot.lane.b32.xlu0 %v3953, 3
    %v3975 = vpop.permute.xlu0 %3974
    %3976 = vrot.lane.b32.xlu0 %v3954, 3
    %v3977 = vpop.permute.xlu0 %3976
    %3978 = vrot.lane.b32.xlu0 %v3955, 3
    %v3979 = vpop.permute.xlu0 %3978
    %v3980 = vsel %vm3715, %v3965, %v3967
    %v3981 = vsel %vm3715, %v3969, %v3971
    %v3982 = vsel %vm3715, %v3973, %v3975
    %v3983 = vsel %vm3715, %v3977, %v3979
    %v3992 = vadd.f32 %v3550, %v3965
    %v3993 = vadd.f32 %v3551, %v3980
    %v3994 = vadd.f32 %v3552, %v3969
    %v3995 = vadd.f32 %v3553, %v3981
    %v3996 = vadd.f32 %v3554, %v3973
    %v3997 = vadd.f32 %v3555, %v3982
    %v3998 = vadd.f32 %v3556, %v3977
    %v3999 = vadd.f32 %v3557, %v3983
    %4000 = vrot.lane.b32.xlu0 %v2835, 122
    %v4001 = vpop.permute.xlu0 %4000
    %4002 = vrot.lane.b32.xlu0 %v2836, 122
    %v4003 = vpop.permute.xlu0 %4002
    %4004 = vrot.lane.b32.xlu0 %v2837, 122
    %v4005 = vpop.permute.xlu0 %4004
    %4006 = vrot.lane.b32.xlu0 %v2838, 122
    %v4007 = vpop.permute.xlu0 %4006
    %4008 = vrot.lane.b32.xlu0 %v2839, 122
    %v4009 = vpop.permute.xlu0 %4008
    %4010 = vrot.lane.b32.xlu0 %v2840, 122
    %v4011 = vpop.permute.xlu0 %4010
    %4012 = vrot.lane.b32.xlu0 %v2841, 122
    %v4013 = vpop.permute.xlu0 %4012
    %4014 = vrot.lane.b32.xlu0 %v2842, 122
    %v4015 = vpop.permute.xlu0 %4014
    %v4016 = vsel %vm3662, %v4001, %v4003
    %v4017 = vsel %vm3662, %v4005, %v4007
    %v4018 = vsel %vm3662, %v4009, %v4011
    %v4019 = vsel %vm3662, %v4013, %v4015
    %v4028 = vadd.f32 %v2835, %v4016
    %v4029 = vadd.f32 %v2836, %v4003
    %v4030 = vadd.f32 %v2837, %v4017
    %v4031 = vadd.f32 %v2838, %v4007
    %v4032 = vadd.f32 %v2839, %v4018
    %v4033 = vadd.f32 %v2840, %v4011
    %v4034 = vadd.f32 %v2841, %v4019
    %v4035 = vadd.f32 %v2842, %v4015
    %v4036 = vmul.f32 %v4028, 0.036000773
    %v4037 = vmul.f32 %v4029, 0.036000773
    %v4038 = vmul.f32 %v4030, 0.036000773
    %v4039 = vmul.f32 %v4031, 0.036000773
    %v4040 = vmul.f32 %v4032, 0.036000773
    %v4041 = vmul.f32 %v4033, 0.036000773
    %v4042 = vmul.f32 %v4034, 0.036000773
    %v4043 = vmul.f32 %v4035, 0.036000773
    %4052 = vrot.lane.b32.xlu0 %v4036, 3
    %v4053 = vpop.permute.xlu0 %4052
    %4054 = vrot.lane.b32.xlu0 %v4037, 3
    %v4055 = vpop.permute.xlu0 %4054
    %4056 = vrot.lane.b32.xlu0 %v4038, 3
    %v4057 = vpop.permute.xlu0 %4056
    %4058 = vrot.lane.b32.xlu0 %v4039, 3
    %v4059 = vpop.permute.xlu0 %4058
    %4060 = vrot.lane.b32.xlu0 %v4040, 3
    %v4061 = vpop.permute.xlu0 %4060
    %4062 = vrot.lane.b32.xlu0 %v4041, 3
    %v4063 = vpop.permute.xlu0 %4062
    %4064 = vrot.lane.b32.xlu0 %v4042, 3
    %v4065 = vpop.permute.xlu0 %4064
    %4066 = vrot.lane.b32.xlu0 %v4043, 3
    %v4067 = vpop.permute.xlu0 %4066
    %v4068 = vsel %vm3715, %v4053, %v4055
    %v4069 = vsel %vm3715, %v4057, %v4059
    %v4070 = vsel %vm3715, %v4061, %v4063
    %v4071 = vsel %vm3715, %v4065, %v4067
    %v4080 = vadd.f32 %v3638, %v4053
    %v4081 = vadd.f32 %v3639, %v4068
    %v4082 = vadd.f32 %v3640, %v4057
    %v4083 = vadd.f32 %v3641, %v4069
    %v4084 = vadd.f32 %v3642, %v4061
    %v4085 = vadd.f32 %v3643, %v4070
    %v4086 = vadd.f32 %v3644, %v4065
    %v4087 = vadd.f32 %v3645, %v4071
    %4088 = vrot.lane.b32.xlu0 %v2607, 124
    %v4089 = vpop.permute.xlu0 %4088
    %4090 = vrot.lane.b32.xlu0 %v2608, 124
    %v4091 = vpop.permute.xlu0 %4090
    %4092 = vrot.lane.b32.xlu0 %v2609, 124
    %v4093 = vpop.permute.xlu0 %4092
    %4094 = vrot.lane.b32.xlu0 %v2610, 124
    %v4095 = vpop.permute.xlu0 %4094
    %4096 = vrot.lane.b32.xlu0 %v2611, 124
    %v4097 = vpop.permute.xlu0 %4096
    %4098 = vrot.lane.b32.xlu0 %v2612, 124
    %v4099 = vpop.permute.xlu0 %4098
    %4100 = vrot.lane.b32.xlu0 %v2613, 124
    %v4101 = vpop.permute.xlu0 %4100
    %4102 = vrot.lane.b32.xlu0 %v2614, 124
    %v4103 = vpop.permute.xlu0 %4102
    %vm4104 = vcmask 1014784
    %v4105 = vsel %vm4104, %v4089, %v4091
    %v4106 = vsel %vm4104, %v4093, %v4095
    %v4107 = vsel %vm4104, %v4097, %v4099
    %v4108 = vsel %vm4104, %v4101, %v4103
    %v4117 = vadd.f32 %v2607, %v4105
    %v4118 = vadd.f32 %v2608, %v4091
    %v4119 = vadd.f32 %v2609, %v4106
    %v4120 = vadd.f32 %v2610, %v4095
    %v4121 = vadd.f32 %v2611, %v4107
    %v4122 = vadd.f32 %v2612, %v4099
    %v4123 = vadd.f32 %v2613, %v4108
    %v4124 = vadd.f32 %v2614, %v4103
    %v4125 = vmul.f32 %v4117, 0.10936069
    %v4126 = vmul.f32 %v4118, 0.10936069
    %v4127 = vmul.f32 %v4119, 0.10936069
    %v4128 = vmul.f32 %v4120, 0.10936069
    %v4129 = vmul.f32 %v4121, 0.10936069
    %v4130 = vmul.f32 %v4122, 0.10936069
    %v4131 = vmul.f32 %v4123, 0.10936069
    %v4132 = vmul.f32 %v4124, 0.10936069
    %4141 = vrot.lane.b32.xlu0 %v4125, 2
    %v4142 = vpop.permute.xlu0 %4141
    %4143 = vrot.lane.b32.xlu0 %v4126, 2
    %v4144 = vpop.permute.xlu0 %4143
    %4145 = vrot.lane.b32.xlu0 %v4127, 2
    %v4146 = vpop.permute.xlu0 %4145
    %4147 = vrot.lane.b32.xlu0 %v4128, 2
    %v4148 = vpop.permute.xlu0 %4147
    %4149 = vrot.lane.b32.xlu0 %v4129, 2
    %v4150 = vpop.permute.xlu0 %4149
    %4151 = vrot.lane.b32.xlu0 %v4130, 2
    %v4152 = vpop.permute.xlu0 %4151
    %4153 = vrot.lane.b32.xlu0 %v4131, 2
    %v4154 = vpop.permute.xlu0 %4153
    %4155 = vrot.lane.b32.xlu0 %v4132, 2
    %v4156 = vpop.permute.xlu0 %4155
    %vm4157 = vcmask 15360
    %v4158 = vsel %vm4157, %v4142, %v4144
    %v4159 = vsel %vm4157, %v4146, %v4148
    %v4160 = vsel %vm4157, %v4150, %v4152
    %v4161 = vsel %vm4157, %v4154, %v4156
    %v4170 = vadd.f32 %v3728, %v4142
    %v4171 = vadd.f32 %v3729, %v4158
    %v4172 = vadd.f32 %v3730, %v4146
    %v4173 = vadd.f32 %v3731, %v4159
    %v4174 = vadd.f32 %v3732, %v4150
    %v4175 = vadd.f32 %v3733, %v4160
    %v4176 = vadd.f32 %v3734, %v4154
    %v4177 = vadd.f32 %v3735, %v4161
    %4178 = vrot.lane.b32.xlu0 %v2655, 124
    %v4179 = vpop.permute.xlu0 %4178
    %4180 = vrot.lane.b32.xlu0 %v2656, 124
    %v4181 = vpop.permute.xlu0 %4180
    %4182 = vrot.lane.b32.xlu0 %v2657, 124
    %v4183 = vpop.permute.xlu0 %4182
    %4184 = vrot.lane.b32.xlu0 %v2658, 124
    %v4185 = vpop.permute.xlu0 %4184
    %4186 = vrot.lane.b32.xlu0 %v2659, 124
    %v4187 = vpop.permute.xlu0 %4186
    %4188 = vrot.lane.b32.xlu0 %v2660, 124
    %v4189 = vpop.permute.xlu0 %4188
    %4190 = vrot.lane.b32.xlu0 %v2661, 124
    %v4191 = vpop.permute.xlu0 %4190
    %4192 = vrot.lane.b32.xlu0 %v2662, 124
    %v4193 = vpop.permute.xlu0 %4192
    %v4194 = vsel %vm4104, %v4179, %v4181
    %v4195 = vsel %vm4104, %v4183, %v4185
    %v4196 = vsel %vm4104, %v4187, %v4189
    %v4197 = vsel %vm4104, %v4191, %v4193
    %v4206 = vadd.f32 %v2655, %v4194
    %v4207 = vadd.f32 %v2656, %v4181
    %v4208 = vadd.f32 %v2657, %v4195
    %v4209 = vadd.f32 %v2658, %v4185
    %v4210 = vadd.f32 %v2659, %v4196
    %v4211 = vadd.f32 %v2660, %v4189
    %v4212 = vadd.f32 %v2661, %v4197
    %v4213 = vadd.f32 %v2662, %v4193
    %v4214 = vmul.f32 %v4206, 0.10936069
    %v4215 = vmul.f32 %v4207, 0.10936069
    %v4216 = vmul.f32 %v4208, 0.10936069
    %v4217 = vmul.f32 %v4209, 0.10936069
    %v4218 = vmul.f32 %v4210, 0.10936069
    %v4219 = vmul.f32 %v4211, 0.10936069
    %v4220 = vmul.f32 %v4212, 0.10936069
    %v4221 = vmul.f32 %v4213, 0.10936069
    %4230 = vrot.lane.b32.xlu0 %v4214, 2
    %v4231 = vpop.permute.xlu0 %4230
    %4232 = vrot.lane.b32.xlu0 %v4215, 2
    %v4233 = vpop.permute.xlu0 %4232
    %4234 = vrot.lane.b32.xlu0 %v4216, 2
    %v4235 = vpop.permute.xlu0 %4234
    %4236 = vrot.lane.b32.xlu0 %v4217, 2
    %v4237 = vpop.permute.xlu0 %4236
    %4238 = vrot.lane.b32.xlu0 %v4218, 2
    %v4239 = vpop.permute.xlu0 %4238
    %4240 = vrot.lane.b32.xlu0 %v4219, 2
    %v4241 = vpop.permute.xlu0 %4240
    %4242 = vrot.lane.b32.xlu0 %v4220, 2
    %v4243 = vpop.permute.xlu0 %4242
    %4244 = vrot.lane.b32.xlu0 %v4221, 2
    %v4245 = vpop.permute.xlu0 %4244
    %v4246 = vsel %vm4157, %v4231, %v4233
    %v4247 = vsel %vm4157, %v4235, %v4237
    %v4248 = vsel %vm4157, %v4239, %v4241
    %v4249 = vsel %vm4157, %v4243, %v4245
    %v4258 = vadd.f32 %v3816, %v4231
    %v4259 = vadd.f32 %v3817, %v4246
    %v4260 = vadd.f32 %v3818, %v4235
    %v4261 = vadd.f32 %v3819, %v4247
    %v4262 = vadd.f32 %v3820, %v4239
    %v4263 = vadd.f32 %v3821, %v4248
    %v4264 = vadd.f32 %v3822, %v4243
    %v4265 = vadd.f32 %v3823, %v4249
    %4266 = vrot.lane.b32.xlu0 %v2715, 124
    %v4267 = vpop.permute.xlu0 %4266
    %4268 = vrot.lane.b32.xlu0 %v2716, 124
    %v4269 = vpop.permute.xlu0 %4268
    %4270 = vrot.lane.b32.xlu0 %v2717, 124
    %v4271 = vpop.permute.xlu0 %4270
    %4272 = vrot.lane.b32.xlu0 %v2718, 124
    %v4273 = vpop.permute.xlu0 %4272
    %4274 = vrot.lane.b32.xlu0 %v2719, 124
    %v4275 = vpop.permute.xlu0 %4274
    %4276 = vrot.lane.b32.xlu0 %v2720, 124
    %v4277 = vpop.permute.xlu0 %4276
    %4278 = vrot.lane.b32.xlu0 %v2721, 124
    %v4279 = vpop.permute.xlu0 %4278
    %4280 = vrot.lane.b32.xlu0 %v2722, 124
    %v4281 = vpop.permute.xlu0 %4280
    %v4282 = vsel %vm4104, %v4267, %v4269
    %v4283 = vsel %vm4104, %v4271, %v4273
    %v4284 = vsel %vm4104, %v4275, %v4277
    %v4285 = vsel %vm4104, %v4279, %v4281
    %v4294 = vadd.f32 %v2715, %v4282
    %v4295 = vadd.f32 %v2716, %v4269
    %v4296 = vadd.f32 %v2717, %v4283
    %v4297 = vadd.f32 %v2718, %v4273
    %v4298 = vadd.f32 %v2719, %v4284
    %v4299 = vadd.f32 %v2720, %v4277
    %v4300 = vadd.f32 %v2721, %v4285
    %v4301 = vadd.f32 %v2722, %v4281
    %v4302 = vmul.f32 %v4294, 0.10936069
    %v4303 = vmul.f32 %v4295, 0.10936069
    %v4304 = vmul.f32 %v4296, 0.10936069
    %v4305 = vmul.f32 %v4297, 0.10936069
    %v4306 = vmul.f32 %v4298, 0.10936069
    %v4307 = vmul.f32 %v4299, 0.10936069
    %v4308 = vmul.f32 %v4300, 0.10936069
    %v4309 = vmul.f32 %v4301, 0.10936069
    %4318 = vrot.lane.b32.xlu0 %v4302, 2
    %v4319 = vpop.permute.xlu0 %4318
    %4320 = vrot.lane.b32.xlu0 %v4303, 2
    %v4321 = vpop.permute.xlu0 %4320
    %4322 = vrot.lane.b32.xlu0 %v4304, 2
    %v4323 = vpop.permute.xlu0 %4322
    %4324 = vrot.lane.b32.xlu0 %v4305, 2
    %v4325 = vpop.permute.xlu0 %4324
    %4326 = vrot.lane.b32.xlu0 %v4306, 2
    %v4327 = vpop.permute.xlu0 %4326
    %4328 = vrot.lane.b32.xlu0 %v4307, 2
    %v4329 = vpop.permute.xlu0 %4328
    %4330 = vrot.lane.b32.xlu0 %v4308, 2
    %v4331 = vpop.permute.xlu0 %4330
    %4332 = vrot.lane.b32.xlu0 %v4309, 2
    %v4333 = vpop.permute.xlu0 %4332
    %v4334 = vsel %vm4157, %v4319, %v4321
    %v4335 = vsel %vm4157, %v4323, %v4325
    %v4336 = vsel %vm4157, %v4327, %v4329
    %v4337 = vsel %vm4157, %v4331, %v4333
    %v4346 = vadd.f32 %v3904, %v4319
    %v4347 = vadd.f32 %v3905, %v4334
    %v4348 = vadd.f32 %v3906, %v4323
    %v4349 = vadd.f32 %v3907, %v4335
    %v4350 = vadd.f32 %v3908, %v4327
    %v4351 = vadd.f32 %v3909, %v4336
    %v4352 = vadd.f32 %v3910, %v4331
    %v4353 = vadd.f32 %v3911, %v4337
    %4354 = vrot.lane.b32.xlu0 %v2775, 124
    %v4355 = vpop.permute.xlu0 %4354
    %4356 = vrot.lane.b32.xlu0 %v2776, 124
    %v4357 = vpop.permute.xlu0 %4356
    %4358 = vrot.lane.b32.xlu0 %v2777, 124
    %v4359 = vpop.permute.xlu0 %4358
    %4360 = vrot.lane.b32.xlu0 %v2778, 124
    %v4361 = vpop.permute.xlu0 %4360
    %4362 = vrot.lane.b32.xlu0 %v2779, 124
    %v4363 = vpop.permute.xlu0 %4362
    %4364 = vrot.lane.b32.xlu0 %v2780, 124
    %v4365 = vpop.permute.xlu0 %4364
    %4366 = vrot.lane.b32.xlu0 %v2781, 124
    %v4367 = vpop.permute.xlu0 %4366
    %4368 = vrot.lane.b32.xlu0 %v2782, 124
    %v4369 = vpop.permute.xlu0 %4368
    %v4370 = vsel %vm4104, %v4355, %v4357
    %v4371 = vsel %vm4104, %v4359, %v4361
    %v4372 = vsel %vm4104, %v4363, %v4365
    %v4373 = vsel %vm4104, %v4367, %v4369
    %v4382 = vadd.f32 %v2775, %v4370
    %v4383 = vadd.f32 %v2776, %v4357
    %v4384 = vadd.f32 %v2777, %v4371
    %v4385 = vadd.f32 %v2778, %v4361
    %v4386 = vadd.f32 %v2779, %v4372
    %v4387 = vadd.f32 %v2780, %v4365
    %v4388 = vadd.f32 %v2781, %v4373
    %v4389 = vadd.f32 %v2782, %v4369
    %v4390 = vmul.f32 %v4382, 0.10936069
    %v4391 = vmul.f32 %v4383, 0.10936069
    %v4392 = vmul.f32 %v4384, 0.10936069
    %v4393 = vmul.f32 %v4385, 0.10936069
    %v4394 = vmul.f32 %v4386, 0.10936069
    %v4395 = vmul.f32 %v4387, 0.10936069
    %v4396 = vmul.f32 %v4388, 0.10936069
    %v4397 = vmul.f32 %v4389, 0.10936069
    %4406 = vrot.lane.b32.xlu0 %v4390, 2
    %v4407 = vpop.permute.xlu0 %4406
    %4408 = vrot.lane.b32.xlu0 %v4391, 2
    %v4409 = vpop.permute.xlu0 %4408
    %4410 = vrot.lane.b32.xlu0 %v4392, 2
    %v4411 = vpop.permute.xlu0 %4410
    %4412 = vrot.lane.b32.xlu0 %v4393, 2
    %v4413 = vpop.permute.xlu0 %4412
    %4414 = vrot.lane.b32.xlu0 %v4394, 2
    %v4415 = vpop.permute.xlu0 %4414
    %4416 = vrot.lane.b32.xlu0 %v4395, 2
    %v4417 = vpop.permute.xlu0 %4416
    %4418 = vrot.lane.b32.xlu0 %v4396, 2
    %v4419 = vpop.permute.xlu0 %4418
    %4420 = vrot.lane.b32.xlu0 %v4397, 2
    %v4421 = vpop.permute.xlu0 %4420
    %v4422 = vsel %vm4157, %v4407, %v4409
    %v4423 = vsel %vm4157, %v4411, %v4413
    %v4424 = vsel %vm4157, %v4415, %v4417
    %v4425 = vsel %vm4157, %v4419, %v4421
    %v4434 = vadd.f32 %v3992, %v4407
    %v4435 = vadd.f32 %v3993, %v4422
    %v4436 = vadd.f32 %v3994, %v4411
    %v4437 = vadd.f32 %v3995, %v4423
    %v4438 = vadd.f32 %v3996, %v4415
    %v4439 = vadd.f32 %v3997, %v4424
    %v4440 = vadd.f32 %v3998, %v4419
    %v4441 = vadd.f32 %v3999, %v4425
    %4442 = vrot.lane.b32.xlu0 %v2835, 124
    %v4443 = vpop.permute.xlu0 %4442
    %4444 = vrot.lane.b32.xlu0 %v2836, 124
    %v4445 = vpop.permute.xlu0 %4444
    %4446 = vrot.lane.b32.xlu0 %v2837, 124
    %v4447 = vpop.permute.xlu0 %4446
    %4448 = vrot.lane.b32.xlu0 %v2838, 124
    %v4449 = vpop.permute.xlu0 %4448
    %4450 = vrot.lane.b32.xlu0 %v2839, 124
    %v4451 = vpop.permute.xlu0 %4450
    %4452 = vrot.lane.b32.xlu0 %v2840, 124
    %v4453 = vpop.permute.xlu0 %4452
    %4454 = vrot.lane.b32.xlu0 %v2841, 124
    %v4455 = vpop.permute.xlu0 %4454
    %4456 = vrot.lane.b32.xlu0 %v2842, 124
    %v4457 = vpop.permute.xlu0 %4456
    %v4458 = vsel %vm4104, %v4443, %v4445
    %v4459 = vsel %vm4104, %v4447, %v4449
    %v4460 = vsel %vm4104, %v4451, %v4453
    %v4461 = vsel %vm4104, %v4455, %v4457
    %v4470 = vadd.f32 %v2835, %v4458
    %v4471 = vadd.f32 %v2836, %v4445
    %v4472 = vadd.f32 %v2837, %v4459
    %v4473 = vadd.f32 %v2838, %v4449
    %v4474 = vadd.f32 %v2839, %v4460
    %v4475 = vadd.f32 %v2840, %v4453
    %v4476 = vadd.f32 %v2841, %v4461
    %v4477 = vadd.f32 %v2842, %v4457
    %v4478 = vmul.f32 %v4470, 0.10936069
    %v4479 = vmul.f32 %v4471, 0.10936069
    %v4480 = vmul.f32 %v4472, 0.10936069
    %v4481 = vmul.f32 %v4473, 0.10936069
    %v4482 = vmul.f32 %v4474, 0.10936069
    %v4483 = vmul.f32 %v4475, 0.10936069
    %v4484 = vmul.f32 %v4476, 0.10936069
    %v4485 = vmul.f32 %v4477, 0.10936069
    %4494 = vrot.lane.b32.xlu0 %v4478, 2
    %v4495 = vpop.permute.xlu0 %4494
    %4496 = vrot.lane.b32.xlu0 %v4479, 2
    %v4497 = vpop.permute.xlu0 %4496
    %4498 = vrot.lane.b32.xlu0 %v4480, 2
    %v4499 = vpop.permute.xlu0 %4498
    %4500 = vrot.lane.b32.xlu0 %v4481, 2
    %v4501 = vpop.permute.xlu0 %4500
    %4502 = vrot.lane.b32.xlu0 %v4482, 2
    %v4503 = vpop.permute.xlu0 %4502
    %4504 = vrot.lane.b32.xlu0 %v4483, 2
    %v4505 = vpop.permute.xlu0 %4504
    %4506 = vrot.lane.b32.xlu0 %v4484, 2
    %v4507 = vpop.permute.xlu0 %4506
    %4508 = vrot.lane.b32.xlu0 %v4485, 2
    %v4509 = vpop.permute.xlu0 %4508
    %v4510 = vsel %vm4157, %v4495, %v4497
    %v4511 = vsel %vm4157, %v4499, %v4501
    %v4512 = vsel %vm4157, %v4503, %v4505
    %v4513 = vsel %vm4157, %v4507, %v4509
    %v4522 = vadd.f32 %v4080, %v4495
    %v4523 = vadd.f32 %v4081, %v4510
    %v4524 = vadd.f32 %v4082, %v4499
    %v4525 = vadd.f32 %v4083, %v4511
    %v4526 = vadd.f32 %v4084, %v4503
    %v4527 = vadd.f32 %v4085, %v4512
    %v4528 = vadd.f32 %v4086, %v4507
    %v4529 = vadd.f32 %v4087, %v4513
    %4530 = vrot.lane.b32.xlu0 %v2607, 126
    %v4531 = vpop.permute.xlu0 %4530
    %4532 = vrot.lane.b32.xlu0 %v2608, 126
    %v4533 = vpop.permute.xlu0 %4532
    %4534 = vrot.lane.b32.xlu0 %v2609, 126
    %v4535 = vpop.permute.xlu0 %4534
    %4536 = vrot.lane.b32.xlu0 %v2610, 126
    %v4537 = vpop.permute.xlu0 %4536
    %4538 = vrot.lane.b32.xlu0 %v2611, 126
    %v4539 = vpop.permute.xlu0 %4538
    %4540 = vrot.lane.b32.xlu0 %v2612, 126
    %v4541 = vpop.permute.xlu0 %4540
    %4542 = vrot.lane.b32.xlu0 %v2613, 126
    %v4543 = vpop.permute.xlu0 %4542
    %4544 = vrot.lane.b32.xlu0 %v2614, 126
    %v4545 = vpop.permute.xlu0 %4544
    %vm4546 = vcmask 1031168
    %v4547 = vsel %vm4546, %v4531, %v4533
    %v4548 = vsel %vm4546, %v4535, %v4537
    %v4549 = vsel %vm4546, %v4539, %v4541
    %v4550 = vsel %vm4546, %v4543, %v4545
    %v4559 = vadd.f32 %v2607, %v4547
    %v4560 = vadd.f32 %v2608, %v4533
    %v4561 = vadd.f32 %v2609, %v4548
    %v4562 = vadd.f32 %v2610, %v4537
    %v4563 = vadd.f32 %v2611, %v4549
    %v4564 = vadd.f32 %v2612, %v4541
    %v4565 = vadd.f32 %v2613, %v4550
    %v4566 = vadd.f32 %v2614, %v4545
    %v4567 = vmul.f32 %v4559, 0.21300554
    %v4568 = vmul.f32 %v4560, 0.21300554
    %v4569 = vmul.f32 %v4561, 0.21300554
    %v4570 = vmul.f32 %v4562, 0.21300554
    %v4571 = vmul.f32 %v4563, 0.21300554
    %v4572 = vmul.f32 %v4564, 0.21300554
    %v4573 = vmul.f32 %v4565, 0.21300554
    %v4574 = vmul.f32 %v4566, 0.21300554
    %4583 = vrot.lane.b32.xlu0 %v4567, 1
    %v4584 = vpop.permute.xlu0 %4583
    %4585 = vrot.lane.b32.xlu0 %v4568, 1
    %v4586 = vpop.permute.xlu0 %4585
    %4587 = vrot.lane.b32.xlu0 %v4569, 1
    %v4588 = vpop.permute.xlu0 %4587
    %4589 = vrot.lane.b32.xlu0 %v4570, 1
    %v4590 = vpop.permute.xlu0 %4589
    %4591 = vrot.lane.b32.xlu0 %v4571, 1
    %v4592 = vpop.permute.xlu0 %4591
    %4593 = vrot.lane.b32.xlu0 %v4572, 1
    %v4594 = vpop.permute.xlu0 %4593
    %4595 = vrot.lane.b32.xlu0 %v4573, 1
    %v4596 = vpop.permute.xlu0 %4595
    %4597 = vrot.lane.b32.xlu0 %v4574, 1
    %v4598 = vpop.permute.xlu0 %4597
    %vm4599 = vcmask 7168
    %v4600 = vsel %vm4599, %v4584, %v4586
    %v4601 = vsel %vm4599, %v4588, %v4590
    %v4602 = vsel %vm4599, %v4592, %v4594
    %v4603 = vsel %vm4599, %v4596, %v4598
    %v4612 = vadd.f32 %v4170, %v4584
    %v4613 = vadd.f32 %v4171, %v4600
    %v4614 = vadd.f32 %v4172, %v4588
    %v4615 = vadd.f32 %v4173, %v4601
    %v4616 = vadd.f32 %v4174, %v4592
    %v4617 = vadd.f32 %v4175, %v4602
    %v4618 = vadd.f32 %v4176, %v4596
    %v4619 = vadd.f32 %v4177, %v4603
    %4620 = vrot.lane.b32.xlu0 %v2655, 126
    %v4621 = vpop.permute.xlu0 %4620
    %4622 = vrot.lane.b32.xlu0 %v2656, 126
    %v4623 = vpop.permute.xlu0 %4622
    %4624 = vrot.lane.b32.xlu0 %v2657, 126
    %v4625 = vpop.permute.xlu0 %4624
    %4626 = vrot.lane.b32.xlu0 %v2658, 126
    %v4627 = vpop.permute.xlu0 %4626
    %4628 = vrot.lane.b32.xlu0 %v2659, 126
    %v4629 = vpop.permute.xlu0 %4628
    %4630 = vrot.lane.b32.xlu0 %v2660, 126
    %v4631 = vpop.permute.xlu0 %4630
    %4632 = vrot.lane.b32.xlu0 %v2661, 126
    %v4633 = vpop.permute.xlu0 %4632
    %4634 = vrot.lane.b32.xlu0 %v2662, 126
    %v4635 = vpop.permute.xlu0 %4634
    %v4636 = vsel %vm4546, %v4621, %v4623
    %v4637 = vsel %vm4546, %v4625, %v4627
    %v4638 = vsel %vm4546, %v4629, %v4631
    %v4639 = vsel %vm4546, %v4633, %v4635
    %v4648 = vadd.f32 %v2655, %v4636
    %v4649 = vadd.f32 %v2656, %v4623
    %v4650 = vadd.f32 %v2657, %v4637
    %v4651 = vadd.f32 %v2658, %v4627
    %v4652 = vadd.f32 %v2659, %v4638
    %v4653 = vadd.f32 %v2660, %v4631
    %v4654 = vadd.f32 %v2661, %v4639
    %v4655 = vadd.f32 %v2662, %v4635
    %v4656 = vmul.f32 %v4648, 0.21300554
    %v4657 = vmul.f32 %v4649, 0.21300554
    %v4658 = vmul.f32 %v4650, 0.21300554
    %v4659 = vmul.f32 %v4651, 0.21300554
    %v4660 = vmul.f32 %v4652, 0.21300554
    %v4661 = vmul.f32 %v4653, 0.21300554
    %v4662 = vmul.f32 %v4654, 0.21300554
    %v4663 = vmul.f32 %v4655, 0.21300554
    %4672 = vrot.lane.b32.xlu0 %v4656, 1
    %v4673 = vpop.permute.xlu0 %4672
    %4674 = vrot.lane.b32.xlu0 %v4657, 1
    %v4675 = vpop.permute.xlu0 %4674
    %4676 = vrot.lane.b32.xlu0 %v4658, 1
    %v4677 = vpop.permute.xlu0 %4676
    %4678 = vrot.lane.b32.xlu0 %v4659, 1
    %v4679 = vpop.permute.xlu0 %4678
    %4680 = vrot.lane.b32.xlu0 %v4660, 1
    %v4681 = vpop.permute.xlu0 %4680
    %4682 = vrot.lane.b32.xlu0 %v4661, 1
    %v4683 = vpop.permute.xlu0 %4682
    %4684 = vrot.lane.b32.xlu0 %v4662, 1
    %v4685 = vpop.permute.xlu0 %4684
    %4686 = vrot.lane.b32.xlu0 %v4663, 1
    %v4687 = vpop.permute.xlu0 %4686
    %v4688 = vsel %vm4599, %v4673, %v4675
    %v4689 = vsel %vm4599, %v4677, %v4679
    %v4690 = vsel %vm4599, %v4681, %v4683
    %v4691 = vsel %vm4599, %v4685, %v4687
    %v4700 = vadd.f32 %v4258, %v4673
    %v4701 = vadd.f32 %v4259, %v4688
    %v4702 = vadd.f32 %v4260, %v4677
    %v4703 = vadd.f32 %v4261, %v4689
    %v4704 = vadd.f32 %v4262, %v4681
    %v4705 = vadd.f32 %v4263, %v4690
    %v4706 = vadd.f32 %v4264, %v4685
    %v4707 = vadd.f32 %v4265, %v4691
    %4708 = vrot.lane.b32.xlu0 %v2715, 126
    %v4709 = vpop.permute.xlu0 %4708
    %4710 = vrot.lane.b32.xlu0 %v2716, 126
    %v4711 = vpop.permute.xlu0 %4710
    %4712 = vrot.lane.b32.xlu0 %v2717, 126
    %v4713 = vpop.permute.xlu0 %4712
    %4714 = vrot.lane.b32.xlu0 %v2718, 126
    %v4715 = vpop.permute.xlu0 %4714
    %4716 = vrot.lane.b32.xlu0 %v2719, 126
    %v4717 = vpop.permute.xlu0 %4716
    %4718 = vrot.lane.b32.xlu0 %v2720, 126
    %v4719 = vpop.permute.xlu0 %4718
    %4720 = vrot.lane.b32.xlu0 %v2721, 126
    %v4721 = vpop.permute.xlu0 %4720
    %4722 = vrot.lane.b32.xlu0 %v2722, 126
    %v4723 = vpop.permute.xlu0 %4722
    %v4724 = vsel %vm4546, %v4709, %v4711
    %v4725 = vsel %vm4546, %v4713, %v4715
    %v4726 = vsel %vm4546, %v4717, %v4719
    %v4727 = vsel %vm4546, %v4721, %v4723
    %v4736 = vadd.f32 %v2715, %v4724
    %v4737 = vadd.f32 %v2716, %v4711
    %v4738 = vadd.f32 %v2717, %v4725
    %v4739 = vadd.f32 %v2718, %v4715
    %v4740 = vadd.f32 %v2719, %v4726
    %v4741 = vadd.f32 %v2720, %v4719
    %v4742 = vadd.f32 %v2721, %v4727
    %v4743 = vadd.f32 %v2722, %v4723
    %v4744 = vmul.f32 %v4736, 0.21300554
    %v4745 = vmul.f32 %v4737, 0.21300554
    %v4746 = vmul.f32 %v4738, 0.21300554
    %v4747 = vmul.f32 %v4739, 0.21300554
    %v4748 = vmul.f32 %v4740, 0.21300554
    %v4749 = vmul.f32 %v4741, 0.21300554
    %v4750 = vmul.f32 %v4742, 0.21300554
    %v4751 = vmul.f32 %v4743, 0.21300554
    %4760 = vrot.lane.b32.xlu0 %v4744, 1
    %v4761 = vpop.permute.xlu0 %4760
    %4762 = vrot.lane.b32.xlu0 %v4745, 1
    %v4763 = vpop.permute.xlu0 %4762
    %4764 = vrot.lane.b32.xlu0 %v4746, 1
    %v4765 = vpop.permute.xlu0 %4764
    %4766 = vrot.lane.b32.xlu0 %v4747, 1
    %v4767 = vpop.permute.xlu0 %4766
    %4768 = vrot.lane.b32.xlu0 %v4748, 1
    %v4769 = vpop.permute.xlu0 %4768
    %4770 = vrot.lane.b32.xlu0 %v4749, 1
    %v4771 = vpop.permute.xlu0 %4770
    %4772 = vrot.lane.b32.xlu0 %v4750, 1
    %v4773 = vpop.permute.xlu0 %4772
    %4774 = vrot.lane.b32.xlu0 %v4751, 1
    %v4775 = vpop.permute.xlu0 %4774
    %v4776 = vsel %vm4599, %v4761, %v4763
    %v4777 = vsel %vm4599, %v4765, %v4767
    %v4778 = vsel %vm4599, %v4769, %v4771
    %v4779 = vsel %vm4599, %v4773, %v4775
    %v4788 = vadd.f32 %v4346, %v4761
    %v4789 = vadd.f32 %v4347, %v4776
    %v4790 = vadd.f32 %v4348, %v4765
    %v4791 = vadd.f32 %v4349, %v4777
    %v4792 = vadd.f32 %v4350, %v4769
    %v4793 = vadd.f32 %v4351, %v4778
    %v4794 = vadd.f32 %v4352, %v4773
    %v4795 = vadd.f32 %v4353, %v4779
    %4796 = vrot.lane.b32.xlu0 %v2775, 126
    %v4797 = vpop.permute.xlu0 %4796
    %4798 = vrot.lane.b32.xlu0 %v2776, 126
    %v4799 = vpop.permute.xlu0 %4798
    %4800 = vrot.lane.b32.xlu0 %v2777, 126
    %v4801 = vpop.permute.xlu0 %4800
    %4802 = vrot.lane.b32.xlu0 %v2778, 126
    %v4803 = vpop.permute.xlu0 %4802
    %4804 = vrot.lane.b32.xlu0 %v2779, 126
    %v4805 = vpop.permute.xlu0 %4804
    %4806 = vrot.lane.b32.xlu0 %v2780, 126
    %v4807 = vpop.permute.xlu0 %4806
    %4808 = vrot.lane.b32.xlu0 %v2781, 126
    %v4809 = vpop.permute.xlu0 %4808
    %4810 = vrot.lane.b32.xlu0 %v2782, 126
    %v4811 = vpop.permute.xlu0 %4810
    %v4812 = vsel %vm4546, %v4797, %v4799
    %v4813 = vsel %vm4546, %v4801, %v4803
    %v4814 = vsel %vm4546, %v4805, %v4807
    %v4815 = vsel %vm4546, %v4809, %v4811
    %v4824 = vadd.f32 %v2775, %v4812
    %v4825 = vadd.f32 %v2776, %v4799
    %v4826 = vadd.f32 %v2777, %v4813
    %v4827 = vadd.f32 %v2778, %v4803
    %v4828 = vadd.f32 %v2779, %v4814
    %v4829 = vadd.f32 %v2780, %v4807
    %v4830 = vadd.f32 %v2781, %v4815
    %v4831 = vadd.f32 %v2782, %v4811
    %v4832 = vmul.f32 %v4824, 0.21300554
    %v4833 = vmul.f32 %v4825, 0.21300554
    %v4834 = vmul.f32 %v4826, 0.21300554
    %v4835 = vmul.f32 %v4827, 0.21300554
    %v4836 = vmul.f32 %v4828, 0.21300554
    %v4837 = vmul.f32 %v4829, 0.21300554
    %v4838 = vmul.f32 %v4830, 0.21300554
    %v4839 = vmul.f32 %v4831, 0.21300554
    %4848 = vrot.lane.b32.xlu0 %v4832, 1
    %v4849 = vpop.permute.xlu0 %4848
    %4850 = vrot.lane.b32.xlu0 %v4833, 1
    %v4851 = vpop.permute.xlu0 %4850
    %4852 = vrot.lane.b32.xlu0 %v4834, 1
    %v4853 = vpop.permute.xlu0 %4852
    %4854 = vrot.lane.b32.xlu0 %v4835, 1
    %v4855 = vpop.permute.xlu0 %4854
    %4856 = vrot.lane.b32.xlu0 %v4836, 1
    %v4857 = vpop.permute.xlu0 %4856
    %4858 = vrot.lane.b32.xlu0 %v4837, 1
    %v4859 = vpop.permute.xlu0 %4858
    %4860 = vrot.lane.b32.xlu0 %v4838, 1
    %v4861 = vpop.permute.xlu0 %4860
    %4862 = vrot.lane.b32.xlu0 %v4839, 1
    %v4863 = vpop.permute.xlu0 %4862
    %v4864 = vsel %vm4599, %v4849, %v4851
    %v4865 = vsel %vm4599, %v4853, %v4855
    %v4866 = vsel %vm4599, %v4857, %v4859
    %v4867 = vsel %vm4599, %v4861, %v4863
    %v4876 = vadd.f32 %v4434, %v4849
    %v4877 = vadd.f32 %v4435, %v4864
    %v4878 = vadd.f32 %v4436, %v4853
    %v4879 = vadd.f32 %v4437, %v4865
    %v4880 = vadd.f32 %v4438, %v4857
    %v4881 = vadd.f32 %v4439, %v4866
    %v4882 = vadd.f32 %v4440, %v4861
    %v4883 = vadd.f32 %v4441, %v4867
    %4884 = vrot.lane.b32.xlu0 %v2835, 126
    %v4885 = vpop.permute.xlu0 %4884
    %4886 = vrot.lane.b32.xlu0 %v2836, 126
    %v4887 = vpop.permute.xlu0 %4886
    %4888 = vrot.lane.b32.xlu0 %v2837, 126
    %v4889 = vpop.permute.xlu0 %4888
    %4890 = vrot.lane.b32.xlu0 %v2838, 126
    %v4891 = vpop.permute.xlu0 %4890
    %4892 = vrot.lane.b32.xlu0 %v2839, 126
    %v4893 = vpop.permute.xlu0 %4892
    %4894 = vrot.lane.b32.xlu0 %v2840, 126
    %v4895 = vpop.permute.xlu0 %4894
    %4896 = vrot.lane.b32.xlu0 %v2841, 126
    %v4897 = vpop.permute.xlu0 %4896
    %4898 = vrot.lane.b32.xlu0 %v2842, 126
    %v4899 = vpop.permute.xlu0 %4898
    %v4900 = vsel %vm4546, %v4885, %v4887
    %v4901 = vsel %vm4546, %v4889, %v4891
    %v4902 = vsel %vm4546, %v4893, %v4895
    %v4903 = vsel %vm4546, %v4897, %v4899
    %v4912 = vadd.f32 %v2835, %v4900
    %v4913 = vadd.f32 %v2836, %v4887
    %v4914 = vadd.f32 %v2837, %v4901
    %v4915 = vadd.f32 %v2838, %v4891
    %v4916 = vadd.f32 %v2839, %v4902
    %v4917 = vadd.f32 %v2840, %v4895
    %v4918 = vadd.f32 %v2841, %v4903
    %v4919 = vadd.f32 %v2842, %v4899
    %v4920 = vmul.f32 %v4912, 0.21300554
    %v4921 = vmul.f32 %v4913, 0.21300554
    %v4922 = vmul.f32 %v4914, 0.21300554
    %v4923 = vmul.f32 %v4915, 0.21300554
    %v4924 = vmul.f32 %v4916, 0.21300554
    %v4925 = vmul.f32 %v4917, 0.21300554
    %v4926 = vmul.f32 %v4918, 0.21300554
    %v4927 = vmul.f32 %v4919, 0.21300554
    %4936 = vrot.lane.b32.xlu0 %v4920, 1
    %v4937 = vpop.permute.xlu0 %4936
    %4938 = vrot.lane.b32.xlu0 %v4921, 1
    %v4939 = vpop.permute.xlu0 %4938
    %4940 = vrot.lane.b32.xlu0 %v4922, 1
    %v4941 = vpop.permute.xlu0 %4940
    %4942 = vrot.lane.b32.xlu0 %v4923, 1
    %v4943 = vpop.permute.xlu0 %4942
    %4944 = vrot.lane.b32.xlu0 %v4924, 1
    %v4945 = vpop.permute.xlu0 %4944
    %4946 = vrot.lane.b32.xlu0 %v4925, 1
    %v4947 = vpop.permute.xlu0 %4946
    %4948 = vrot.lane.b32.xlu0 %v4926, 1
    %v4949 = vpop.permute.xlu0 %4948
    %4950 = vrot.lane.b32.xlu0 %v4927, 1
    %v4951 = vpop.permute.xlu0 %4950
    %v4952 = vsel %vm4599, %v4937, %v4939
    %v4953 = vsel %vm4599, %v4941, %v4943
    %v4954 = vsel %vm4599, %v4945, %v4947
    %v4955 = vsel %vm4599, %v4949, %v4951
    %v4964 = vadd.f32 %v4522, %v4937
    %v4965 = vadd.f32 %v4523, %v4952
    %v4966 = vadd.f32 %v4524, %v4941
    %v4967 = vadd.f32 %v4525, %v4953
    %v4968 = vadd.f32 %v4526, %v4945
    %v4969 = vadd.f32 %v4527, %v4954
    %v4970 = vadd.f32 %v4528, %v4949
    %v4971 = vadd.f32 %v4529, %v4955
    %v4972 = vmul.f32 %v4612, %v4612
    %v4973 = vmul.f32 %v4613, %v4613
    %v4974 = vmul.f32 %v4614, %v4614
    %v4975 = vmul.f32 %v4615, %v4615
    %v4976 = vmul.f32 %v4616, %v4616
    %v4977 = vmul.f32 %v4617, %v4617
    %v4978 = vmul.f32 %v4618, %v4618
    %v4979 = vmul.f32 %v4619, %v4619
    %v4980 = vsub.f32 %v4788, %v4972
    %v4981 = vsub.f32 %v4789, %v4973
    %v4982 = vsub.f32 %v4790, %v4974
    %v4983 = vsub.f32 %v4791, %v4975
    %v4984 = vsub.f32 %v4792, %v4976
    %v4985 = vsub.f32 %v4793, %v4977
    %v4986 = vsub.f32 %v4794, %v4978
    %v4987 = vsub.f32 %v4795, %v4979
    %v4988 = vmul.f32 %v4980, 1.0083333
    %v4989 = vmul.f32 %v4981, 1.0083333
    %v4990 = vmul.f32 %v4982, 1.0083333
    %v4991 = vmul.f32 %v4983, 1.0083333
    %v4992 = vmul.f32 %v4984, 1.0083333
    %v4993 = vmul.f32 %v4985, 1.0083333
    %v4994 = vmul.f32 %v4986, 1.0083333
    %v4995 = vmul.f32 %v4987, 1.0083333
    %v4996 = vmul.f32 %v4700, %v4700
    %v4997 = vmul.f32 %v4701, %v4701
    %v4998 = vmul.f32 %v4702, %v4702
    %v4999 = vmul.f32 %v4703, %v4703
    %v5000 = vmul.f32 %v4704, %v4704
    %v5001 = vmul.f32 %v4705, %v4705
    %v5002 = vmul.f32 %v4706, %v4706
    %v5003 = vmul.f32 %v4707, %v4707
    %v5004 = vsub.f32 %v4876, %v4996
    %v5005 = vsub.f32 %v4877, %v4997
    %v5006 = vsub.f32 %v4878, %v4998
    %v5007 = vsub.f32 %v4879, %v4999
    %v5008 = vsub.f32 %v4880, %v5000
    %v5009 = vsub.f32 %v4881, %v5001
    %v5010 = vsub.f32 %v4882, %v5002
    %v5011 = vsub.f32 %v4883, %v5003
    %v5012 = vmul.f32 %v5004, 1.0083333
    %v5013 = vmul.f32 %v5005, 1.0083333
    %v5014 = vmul.f32 %v5006, 1.0083333
    %v5015 = vmul.f32 %v5007, 1.0083333
    %v5016 = vmul.f32 %v5008, 1.0083333
    %v5017 = vmul.f32 %v5009, 1.0083333
    %v5018 = vmul.f32 %v5010, 1.0083333
    %v5019 = vmul.f32 %v5011, 1.0083333
    %v5020 = vmul.f32 %v4612, %v4700
    %v5021 = vmul.f32 %v4613, %v4701
    %v5022 = vmul.f32 %v4614, %v4702
    %v5023 = vmul.f32 %v4615, %v4703
    %v5024 = vmul.f32 %v4616, %v4704
    %v5025 = vmul.f32 %v4617, %v4705
    %v5026 = vmul.f32 %v4618, %v4706
    %v5027 = vmul.f32 %v4619, %v4707
    %v5028 = vsub.f32 %v4964, %v5020
    %v5029 = vsub.f32 %v4965, %v5021
    %v5030 = vsub.f32 %v4966, %v5022
    %v5031 = vsub.f32 %v4967, %v5023
    %v5032 = vsub.f32 %v4968, %v5024
    %v5033 = vsub.f32 %v4969, %v5025
    %v5034 = vsub.f32 %v4970, %v5026
    %v5035 = vsub.f32 %v4971, %v5027
    %v5036 = vmul.f32 %v5028, 1.0083333
    %v5037 = vmul.f32 %v5029, 1.0083333
    %v5038 = vmul.f32 %v5030, 1.0083333
    %v5039 = vmul.f32 %v5031, 1.0083333
    %v5040 = vmul.f32 %v5032, 1.0083333
    %v5041 = vmul.f32 %v5033, 1.0083333
    %v5042 = vmul.f32 %v5034, 1.0083333
    %v5043 = vmul.f32 %v5035, 1.0083333
    %v5044 = vmul.f32 %v4612, 2.0
    %v5045 = vmul.f32 %v4613, 2.0
    %v5046 = vmul.f32 %v4614, 2.0
    %v5047 = vmul.f32 %v4615, 2.0
    %v5048 = vmul.f32 %v4616, 2.0
    %v5049 = vmul.f32 %v4617, 2.0
    %v5050 = vmul.f32 %v4618, 2.0
    %v5051 = vmul.f32 %v4619, 2.0
    %v5052 = vmul.f32 %v5044, %v4700
    %v5053 = vmul.f32 %v5045, %v4701
    %v5054 = vmul.f32 %v5046, %v4702
    %v5055 = vmul.f32 %v5047, %v4703
    %v5056 = vmul.f32 %v5048, %v4704
    %v5057 = vmul.f32 %v5049, %v4705
    %v5058 = vmul.f32 %v5050, %v4706
    %v5059 = vmul.f32 %v5051, %v4707
    %v5060 = vstv %s42
    %v5061 = vadd.f32 %v5052, %v5060
    %v5062 = vadd.f32 %v5053, %v5060
    %v5063 = vadd.f32 %v5054, %v5060
    %v5064 = vadd.f32 %v5055, %v5060
    %v5065 = vadd.f32 %v5056, %v5060
    %v5066 = vadd.f32 %v5057, %v5060
    %v5067 = vadd.f32 %v5058, %v5060
    %v5068 = vadd.f32 %v5059, %v5060
    %v5069 = vmul.f32 %v5036, 2.0
    %v5070 = vmul.f32 %v5037, 2.0
    %v5071 = vmul.f32 %v5038, 2.0
    %v5072 = vmul.f32 %v5039, 2.0
    %v5073 = vmul.f32 %v5040, 2.0
    %v5074 = vmul.f32 %v5041, 2.0
    %v5075 = vmul.f32 %v5042, 2.0
    %v5076 = vmul.f32 %v5043, 2.0
    %v5077 = vstv %s43
    %v5078 = vadd.f32 %v5069, %v5077
    %v5079 = vadd.f32 %v5070, %v5077
    %v5080 = vadd.f32 %v5071, %v5077
    %v5081 = vadd.f32 %v5072, %v5077
    %v5082 = vadd.f32 %v5073, %v5077
    %v5083 = vadd.f32 %v5074, %v5077
    %v5084 = vadd.f32 %v5075, %v5077
    %v5085 = vadd.f32 %v5076, %v5077
    %v5086 = vadd.f32 %v4972, %v4996
    %v5087 = vadd.f32 %v4973, %v4997
    %v5088 = vadd.f32 %v4974, %v4998
    %v5089 = vadd.f32 %v4975, %v4999
    %v5090 = vadd.f32 %v4976, %v5000
    %v5091 = vadd.f32 %v4977, %v5001
    %v5092 = vadd.f32 %v4978, %v5002
    %v5093 = vadd.f32 %v4979, %v5003
    %v5094 = vadd.f32 %v5086, %v5060
    %v5095 = vadd.f32 %v5087, %v5060
    %v5096 = vadd.f32 %v5088, %v5060
    %v5097 = vadd.f32 %v5089, %v5060
    %v5098 = vadd.f32 %v5090, %v5060
    %v5099 = vadd.f32 %v5091, %v5060
    %v5100 = vadd.f32 %v5092, %v5060
    %v5101 = vadd.f32 %v5093, %v5060
    %v5102 = vadd.f32 %v4988, %v5012
    %v5103 = vadd.f32 %v4989, %v5013
    %v5104 = vadd.f32 %v4990, %v5014
    %v5105 = vadd.f32 %v4991, %v5015
    %v5106 = vadd.f32 %v4992, %v5016
    %v5107 = vadd.f32 %v4993, %v5017
    %v5108 = vadd.f32 %v4994, %v5018
    %v5109 = vadd.f32 %v4995, %v5019
    %v5110 = vadd.f32 %v5102, %v5077
    %v5111 = vadd.f32 %v5103, %v5077
    %v5112 = vadd.f32 %v5104, %v5077
    %v5113 = vadd.f32 %v5105, %v5077
    %v5114 = vadd.f32 %v5106, %v5077
    %v5115 = vadd.f32 %v5107, %v5077
    %v5116 = vadd.f32 %v5108, %v5077
    %v5117 = vadd.f32 %v5109, %v5077
    %v5118 = vmul.f32 %v5061, %v5078
    %v5119 = vmul.f32 %v5062, %v5079
    %v5120 = vmul.f32 %v5063, %v5080
    %v5121 = vmul.f32 %v5064, %v5081
    %v5122 = vmul.f32 %v5065, %v5082
    %v5123 = vmul.f32 %v5066, %v5083
    %v5124 = vmul.f32 %v5067, %v5084
    %v5125 = vmul.f32 %v5068, %v5085
    %v5126 = vmul.f32 %v5094, %v5110
    %v5127 = vmul.f32 %v5095, %v5111
    %v5128 = vmul.f32 %v5096, %v5112
    %v5129 = vmul.f32 %v5097, %v5113
    %v5130 = vmul.f32 %v5098, %v5114
    %v5131 = vmul.f32 %v5099, %v5115
    %v5132 = vmul.f32 %v5100, %v5116
    %v5133 = vmul.f32 %v5101, %v5117
    %v5134 = vrcp.pop %v5126
    %v5135 = vmul.f32 %v5118, %v5134
    %v5136 = vrcp.pop %v5127
    %v5137 = vmul.f32 %v5119, %v5136
    %v5138 = vrcp.pop %v5128
    %v5139 = vmul.f32 %v5120, %v5138
    %v5140 = vrcp.pop %v5129
    %v5141 = vmul.f32 %v5121, %v5140
    %v5142 = vrcp.pop %v5130
    %v5143 = vmul.f32 %v5122, %v5142
    %v5144 = vrcp.pop %v5131
    %v5145 = vmul.f32 %v5123, %v5144
    %v5146 = vrcp.pop %v5132
    %v5147 = vmul.f32 %v5124, %v5146
    %v5148 = vrcp.pop %v5133
    %v5149 = vmul.f32 %v5125, %v5148
    %v5150 = vlaneseq
    %v5151 = vand.u32 %v5150, 127
    %vm5152 = vcmp.lt.s32.totalorder %v5151, 16
    %5161 = vrot.lane.b32.xlu0 %v5135, 123
    %v5162 = vpop.permute.xlu0 %5161
    %5163 = vrot.lane.b32.xlu0 %v5137, 123
    %v5164 = vpop.permute.xlu0 %5163
    %5165 = vrot.lane.b32.xlu0 %v5139, 123
    %v5166 = vpop.permute.xlu0 %5165
    %5167 = vrot.lane.b32.xlu0 %v5141, 123
    %v5168 = vpop.permute.xlu0 %5167
    %5169 = vrot.lane.b32.xlu0 %v5143, 123
    %v5170 = vpop.permute.xlu0 %5169
    %5171 = vrot.lane.b32.xlu0 %v5145, 123
    %v5172 = vpop.permute.xlu0 %5171
    %5173 = vrot.lane.b32.xlu0 %v5147, 123
    %v5174 = vpop.permute.xlu0 %5173
    %5175 = vrot.lane.b32.xlu0 %v5149, 123
    %v5176 = vpop.permute.xlu0 %5175
    %vm5177 = vcmask 1006592
    %v5178 = vsel %vm5177, %v5162, %v5164
    %v5179 = vsel %vm5177, %v5166, %v5168
    %v5180 = vsel %vm5177, %v5170, %v5172
    %v5181 = vsel %vm5177, %v5174, %v5176
    %v5186 = vsel %vm5152, %v5178, 0.0
    %v5187 = vsel %vm5152, %v5179, 0.0
    %v5188 = vsel %vm5152, %v5180, 0.0
    %v5189 = vsel %vm5152, %v5181, 0.0
    %5190 = vadd.xlane.f32.xlu0 %v5186
    %v5191 = vpop.xlane.xlu0 %5190
    %5192 = vadd.xlane.f32.xlu0 %v5187
    %v5193 = vpop.xlane.xlu0 %5192
    %5194 = vadd.xlane.f32.xlu0 %v5188
    %v5195 = vpop.xlane.xlu0 %5194
    %5196 = vadd.xlane.f32.xlu0 %v5189
    %v5197 = vpop.xlane.xlu0 %5196
    %v5198 = vadd.f32 %v5191, 0.0
    %v5199 = vadd.f32 %v5193, 0.0
    %v5200 = vadd.f32 %v5195, 0.0
    %v5201 = vadd.f32 %v5197, 0.0
    %s5202 = smul.u32 0, 2
    %s5203 = sld [smem:[#allocation2 + %s5202]]
    %s5204 = sadd.s32 %s5202, 1
    %s5205 = sld [smem:[#allocation2 + %s5204]]
    %v5206 = vstv %s5203
    %v5207 = vstv %s5205
    %v5208 = vlaneseq
    %vm5209 = vcmp.ge.s32.totalorder %v5208, 0
    %vm5210 = vcmp.lt.s32.totalorder %v5208, 1
    %vm5211 = vmand %vm5209, %vm5210
    %v5212 = vsel %vm5211, %v5206, %v5207
    %v5213 = vlaneseq
    %v5214 = vshrl.u32 %v5213, 7
    %v5215 = vsub.s32 0, %v5214
    %v5216 = vrot.slane %v5212, %v5215
    %5218 = vbcast.lane.b32.xlu0 %v5216, 256
    %v5219 = vpop.permute.xlu0 %5218
    %vm5220 = vcmp.lt.s32.totalorder %v5151, %v5219
    %v5225 = vlaneseq
    %v5226 = vshrl.u32 %v5225, 7
    %v5227 = vsub.s32 %v5151, %v5226
    %v5228 = vrot.slane %v5198, %v5227
    %v5229 = vadd.s32 %v5151, 4294967288
    %v5230 = vlaneseq
    %v5231 = vshrl.u32 %v5230, 7
    %v5232 = vsub.s32 %v5229, %v5231
    %v5233 = vrot.slane %v5199, %v5232
    %vm5234 = vcmask 130112
    %v5235 = vsel %vm5234, %v5233, %v5228
    %v5236 = vlaneseq
    %v5237 = vshrl.u32 %v5236, 7
    %v5238 = vsub.s32 %v5151, %v5237
    %v5239 = vrot.slane %v5200, %v5238
    %v5240 = vlaneseq
    %v5241 = vshrl.u32 %v5240, 7
    %v5242 = vsub.s32 %v5229, %v5241
    %v5243 = vrot.slane %v5201, %v5242
    %v5244 = vsel %vm5234, %v5243, %v5239
    %vm5245 = vcmask 1041409
    %v5246 = vsel %vm5245, %v5244, %v5235
    %v5248 = vsel %vm5220, %v5246, 0.0
    %vm5249 = vcmask 123904
    %v5250 = vsel %vm5249, %v5248, 0.0
    %5251 = vadd.xlane.f32.xlu0 %v5250
    %v5252 = vpop.xlane.xlu0 %5251
    %v5253 = vrot.slane %v5252, 4
    %v5254 = vadd.f32 %v5252, %v5253
    %v5255 = vrot.slane %v5254, 2
    %v5256 = vadd.f32 %v5254, %v5255
    %v5257 = vrot.slane %v5256, 1
    %v5258 = vadd.f32 %v5256, %v5257
    %s5259 = vtos %v5258
    %v5260 = vstv %s5259
    %5261 = vst [vmem:[%s4] sm:$0x1] %v5260
    // Predicated region
    $region26: #{ssim_forward.1} parent=1 // pred_check
      _
    $region27: #{ssim_forward.1} parent=1 // pred_check_branch
      %5263 = sbr.rel (0) target = $region29
    $region28: #{ssim_forward.1} parent=1 // pred_region
      _
    $region29: #{ssim_forward.1} parent=1 // pred_fallthru
      _
    // Predicated region
    $region30: #{ssim_forward.1} parent=1 // pred_check
      _
    $region31: #{ssim_forward.1} parent=1 // pred_check_branch
      %5265 = sbr.rel (0) target = $region33
    $region32: #{ssim_forward.1} parent=1 // pred_region
      _
    $region33: #{ssim_forward.1} parent=1 // pred_fallthru
      _
    %5266 = vsyncpa [#allocation3], 1
    %5267 = vsyncpa [#allocation5], 1

</llo_original>
